<compile_context>
chip_gen: v6e
topology: v6e:2x2x1
jax: 0.10.0
libtpu: 0.0.40
codegen_flags: <defaults>
</compile_context>

<pallas_src>
import functools

import jax
import jax.numpy as jnp
from jax import lax
from jax.experimental import pallas as pl
from jax.experimental.pallas import tpu as pltpu

LRELU_SLOPE = 0.1
_MIB = 1024 * 1024


def get_padding(kernel_size, dilation=1):
    return (kernel_size * dilation - dilation) // 2


def _round_up(x, m):
    return ((x + m - 1) // m) * m


def _cdiv(a, b):
    return -(-a // b)


def _tpu_vmem_bytes():
    try:
        fn = getattr(pltpu, "get_tpu_info", None)
        if fn is None:
            return 64 * _MIB
        return int(getattr(fn(), "vmem_capacity_bytes", 64 * _MIB))
    except Exception:
        return 64 * _MIB


# Generation-aware scoped-VMEM limit (v7x has only 64 MiB physical per TC).
_VMEM_PHYS = _tpu_vmem_bytes()
_VMEM_LIMIT = max(32 * _MIB, min(_VMEM_PHYS - 8 * _MIB, 96 * _MIB))
_VMEM_BUDGET = int(0.6 * _VMEM_LIMIT)        # headroom for compiler scratch


# ----------------------------------------------------------------------------
# Pallas kernel: fused 1-D conv (tap-accumulated matmuls) + bias + leaky_relu
# ----------------------------------------------------------------------------
def _fused_conv_kernel(x_ref, w_ref, b_ref, o_ref, *, J, TL, n_m, apply_lrelu):
    """One (cout_tile, period-column, L-tile) grid step.

    x_ref: (L_slab, S*Cp_in) bf16   phase-packed input slab for this (b, p)
    w_ref: (J, S*Cp_in, TN)  bf16   per-offset stacked weights
    b_ref: (8, TN)           f32    bias (row 0 used)
    o_ref: (TL, TN)          bf16   output tile
    Output rows l of this tile:  sum_j x_ref[base + l + j] @ w_ref[j]  + bias.
    """
    if n_m > 1:
        base = pl.multiple_of(pl.program_id(2) * TL, 8)
    else:
        base = 0
    acc = None
    for j in range(J):                      # J = ceil(K / stride), small, static
        xs = x_ref[pl.ds(base + j, TL), :]
        part = jnp.dot(xs, w_ref[j], preferred_element_type=jnp.float32)
        acc = part if acc is None else acc + part
    y = acc + b_ref[0:1, :]
    if apply_lrelu:
        y = jnp.where(y >= 0.0, y, LRELU_SLOPE * y)
    o_ref[...] = y.astype(o_ref.dtype)


def _plan_tiles(L_out, Kr, J, Np, budget):
    """Pick (TN, TL, n_m, L_slab) so the per-step VMEM estimate fits budget."""
    def est(TN, TL, L_slab):
        x_b = 2 * L_slab * Kr * 2           # input slab (bf16, 2 buffers)
        w_b = 2 * J * Kr * TN * 2           # weights
        o_b = 2 * TL * TN * 2               # output tile
        acc_b = 2 * TL * TN * 4             # f32 accumulation temporaries
        b_b = 2 * 8 * TN * 4
        return x_b + w_b + o_b + acc_b + b_b

    tn_opts = [Np] + [t for t in (512, 256, 128) if t < Np and Np % t == 0]
    tl_full = _round_up(L_out, 8)
    for TN in tn_opts:
        L_slab = _round_up(tl_full + J - 1, 8)
        if est(TN, tl_full, L_slab) <= budget:
            return TN, tl_full, 1, L_slab
        for TL in (4096, 2048, 1024, 512, 256, 128, 64, 32, 16, 8):
            if TL >= tl_full:
                continue
            n_m = _cdiv(L_out, TL)
            L_slab = _round_up(n_m * TL + J - 1, 8)
            if est(TN, TL, L_slab) <= budget:
                return TN, TL, n_m, L_slab
    # Nothing fits (extreme audio length / tiny forced budget): smallest config;
    # the compiler VMEM limit is still the real bound.
    # TODO(synk): halo-tiled input-L blocks would bound the slab for extreme T.
    TN = tn_opts[-1]
    TL = min(tl_full, 256)
    n_m = _cdiv(L_out, TL)
    L_slab = _round_up(n_m * TL + J - 1, 8)
    return TN, TL, n_m, L_slab


def conv_layer_fused(h, lp, apply_lrelu=True, vmem_budget=None):
    """h: (B*P, L, Cp_in) bf16, channels-last, lane-padded.
    Returns (B*P, L_out, Np) bf16 with lane padding carried to the next layer."""
    BP, L, Cp = h.shape
    K, S, pad, J = lp["K"], lp["stride"], lp["pad"], lp["J"]
    Kr, Np = lp["Kr"], lp["Np"]
    assert Cp == lp["cin_pad"] and Kr == S * Cp
    L_out = (L + 2 * pad - K) // S + 1
    assert L_out >= 1
    budget = _VMEM_BUDGET if vmem_budget is None else vmem_budget
    TN, TL, n_m, L_slab = _plan_tiles(L_out, Kr, J, Np, budget)
    L_out_p = n_m * TL

    # Zero-pad along L (conv padding + slab rounding), then phase-pack: rows
    # (l, s) of the padded signal become row l, lanes [s*Cp, (s+1)*Cp) -- a
    # free row-major reshape, so the K-tap im2col never round-trips HBM.
    total = L_slab * S
    pad_right = total - L - pad
    assert pad_right >= 0
    hp = jnp.pad(h, ((0, 0), (pad, pad_right), (0, 0)))
    x2 = hp.reshape(BP, L_slab, Kr)

    kernel = functools.partial(_fused_conv_kernel, J=J, TL=TL, n_m=n_m,
                               apply_lrelu=apply_lrelu)
    out = pl.pallas_call(
        kernel,
        out_shape=jax.ShapeDtypeStruct((BP, L_out_p, Np), jnp.bfloat16),
        grid_spec=pltpu.PrefetchScalarGridSpec(
            num_scalar_prefetch=0,
            # Grid order (cout_tile, b*p, l_tile): weights (up to ~10 MB for a
            # 1024x1024 layer) are DMA'd once per Cout tile; the small per-(b,p)
            # input slab cycles underneath.
            grid=(Np // TN, BP, n_m),
            in_specs=[
                pl.BlockSpec((None, L_slab, Kr), lambda n, b, m: (b, 0, 0)),
                pl.BlockSpec((J, Kr, TN), lambda n, b, m: (0, 0, n)),
                pl.BlockSpec((8, TN), lambda n, b, m: (0, n)),
            ],
            out_specs=pl.BlockSpec((None, TL, TN), lambda n, b, m: (b, m, n)),
        ),
        compiler_params=pltpu.CompilerParams(
            # All axes independent; B*P >= 2 keeps both v7x TensorCores busy
            # even when the Cout / L tile axes collapse to 1.
            dimension_semantics=("parallel", "parallel", "parallel"),
            vmem_limit_bytes=_VMEM_LIMIT,
        ),
    )(x2, lp["w"], lp["b"])
    if L_out_p != L_out:
        out = out[:, :L_out, :]
    return out


def conv_post_apply(h, w, bias, stride, pad):
    # Cout == 1: a 128-padded MXU matmul would waste 128x the output columns,
    # so this tiny layer is a single bf16 einsum with f32 accumulation.
    BP, L, Cp = h.shape
    Cout, Cin, K = w.shape
    hp = jnp.pad(h, ((0, 0), (pad, pad), (0, 0)))
    L_out = (L + 2 * pad - K) // stride + 1
    taps = jnp.stack(
        [hp[:, k:k + (L_out - 1) * stride + 1:stride, :] for k in range(K)],
        axis=2)                                            # (BP, L_out, K, Cp)
    wk = jnp.zeros((K, Cp), jnp.bfloat16).at[:, :Cin].set(
        jnp.transpose(w[0], (1, 0)).astype(jnp.bfloat16))
    y = jnp.einsum("blkc,kc->bl", taps, wk,
                   preferred_element_type=jnp.float32) + bias[0]
    return y                                               # (BP, L_out) f32


# ----------------------------------------------------------------------------
# MPD forward
# ----------------------------------------------------------------------------
def mpd_forward(x, params, period, vmem_budget=None):
    # x: (B, 1, T) -- same as the torch module input.
    B, C, T = x.shape
    # pad_to_period: pads `period - t % period` exactly like the module
    # (reflect mode requires pad < T, same constraint as torch F.pad).
    pad_amt = period - T % period
    x = jnp.pad(x, ((0, 0), (0, 0), (0, pad_amt)), mode="reflect")
    L = x.shape[-1] // period
    x4 = x.reshape(B, C, L, period)                        # b c (l p) -> b c l p
    # per-period-column, channels-last layout: (B*P, L, C)
    h = jnp.transpose(x4, (0, 3, 2, 1)).reshape(B * period, L, C)
    cin0 = params["convs"][0]["cin_pad"]
    h = jnp.pad(h.astype(jnp.bfloat16), ((0, 0), (0, 0), (0, cin0 - C)))

    fmap = []
    for lp in params["convs"]:
        h = conv_layer_fused(h, lp, apply_lrelu=True, vmem_budget=vmem_budget)
        # fmap is reported NCHW (B, C, L, P) to match the torch module; this is
        # output formatting, not part of the conv hot path.
        fm = h[..., :lp["cout"]].reshape(B, period, h.shape[1], lp["cout"])
        fmap.append(jnp.transpose(fm, (0, 3, 2, 1)))

    pp = params["conv_post"]
    y = conv_post_apply(h, pp["w"], pp["b"], pp["stride"], pp["pad"])  # (B*P, Lp)
    Lp = y.shape[1]
    out_nchw = jnp.transpose(y.reshape(B, period, Lp), (0, 2, 1))[:, None, :, :]
    fmap.append(out_nchw)                                  # (B, 1, Lp, P) f32
    logits = out_nchw.reshape(B, -1)                       # torch.flatten(x, 1, -1)
    return logits, fmap


# ----------------------------------------------------------------------------
# Parameters: raw (torch layout) + one-time kernel-side preparation
# ----------------------------------------------------------------------------
def init_params(key, d_mult, kernel_size=5, stride=3):
    chs = [1, int(32 * d_mult), int(128 * d_mult), int(512 * d_mult),
           int(1024 * d_mult), int(1024 * d_mult)]
    pad = get_padding(5, 1)
    strides = [stride, stride, stride, stride, 1]
    pads = [pad, pad, pad, pad, 2]
    convs = []
    for i in range(5):
        key, kw, kb = jax.random.split(key, 3)
        cin, cout = chs[i], chs[i + 1]
        w = jax.random.normal(kw, (cout, cin, kernel_size), jnp.float32)
        w = w / jnp.sqrt(float(cin * kernel_size))
        b = jax.random.normal(kb, (cout,), jnp.float32) * 0.01
        convs.append((w, b, strides[i], pads[i]))
    key, kw, kb = jax.random.split(key, 3)
    wpost = jax.random.normal(kw, (1, chs[5], 3), jnp.float32)
    wpost = wpost / jnp.sqrt(float(chs[5] * 3))
    bpost = jax.random.normal(kb, (1,), jnp.float32) * 0.01
    return {"convs": convs, "conv_post": (wpost, bpost, 1, 1)}


def prepare_params(raw):
    """One-time static transform to the fused-kernel layout:
    W_all[j, s*Cp_in + cin, cout] = w[cout, cin, j*stride + s]  (zeros for
    missing taps / lane padding), bias -> (8, Np) f32.  Channels are carried
    lane-padded (Np) between layers (no per-layer slice / re-pad)."""
    convs = []
    cin_pad = 8                                  # first conv: Cin=1 -> pad to 8
    for (w, bias, stride, pad) in raw["convs"]:
        cout, cin, K = w.shape
        assert cin <= cin_pad
        J = _cdiv(K, stride)
        Kr = stride * cin_pad
        Np = _round_up(cout, 128)
        wt = jnp.transpose(w, (2, 1, 0))         # (K, Cin, Cout)
        w_all = jnp.zeros((J, Kr, Np), jnp.float32)
        for k in range(K):
            j, s = divmod(k, stride)
            w_all = w_all.at[j, s * cin_pad:s * cin_pad + cin, :cout].set(wt[k])
        b_pad = jnp.zeros((8, Np), jnp.float32).at[:, :cout].set(
            jnp.broadcast_to(bias.astype(jnp.float32), (8, cout)))
        convs.append(dict(w=w_all.astype(jnp.bfloat16), b=b_pad, K=K,
                          stride=stride, pad=pad, J=J, Kr=Kr, Np=Np,
                          cin_pad=cin_pad, cout=cout))
        cin_pad = Np                             # carry lane-padded channels
    wp, bp, sp, pp = raw["conv_post"]
    return {"convs": convs, "conv_post": dict(w=wp, b=bp, stride=sp, pad=pp)}


# ----------------------------------------------------------------------------
# Pure-JAX reference (lax.conv, mirrors the bf16 I/O quantization of the kernel)
# ----------------------------------------------------------------------------
def ref_forward(x, raw, period):
    B, C, T = x.shape
    pad_amt = period - T % period
    x = jnp.pad(x, ((0, 0), (0, 0), (0, pad_amt)), mode="reflect")
    L = x.shape[-1] // period
    h = x.reshape(B, C, L, period).astype(jnp.bfloat16)

    def conv(hq, w, bias, stride, pad):
        wf = w.astype(jnp.bfloat16).astype(jnp.float32)
        y = lax.conv_general_dilated(
            hq.astype(jnp.float32), wf[:, :, :, None],
            window_strides=(stride, 1), padding=((pad, pad), (0, 0)),
            dimension_numbers=("NCHW", "OIHW", "NCHW"),
            precision=lax.Precision.HIGHEST)
        return y + bias[None, :, None, None]

    fmap = []
    for (w, bias, s, p) in raw["convs"]:
        y = conv(h, w, bias, s, p)
        y = jnp.where(y >= 0, y, LRELU_SLOPE * y)
        h = y.astype(jnp.bfloat16)
        fmap.append(h)
    w, bias, s, p = raw["conv_post"]
    y = conv(h, w, bias, s, p)
    fmap.append(y)
    return y.reshape(B, -1), fmap


if __name__ == "__main__":
    key = jax.random.PRNGKey(0)
    k_param, k_x = jax.random.split(key)

    d_mult = 0.25          # channels: 8, 32, 128, 256, 256, 1 (small but faithful)
    period = 5
    B, T = 2, 503          # small (B, 1, T) audio, T % period != 0

    raw = init_params(k_param, d_mult)
    prep = prepare_params(raw)
    x = jax.random.normal(k_x, (B, 1, T), jnp.float32)

    forward = jax.jit(functools.partial(mpd_forward, params=prep, period=period))
    logits, fmap = forward(x)
    logits = jax.block_until_ready(logits)

    ref_logits, ref_fmap = ref_forward(x, raw, period)

    def check(lg, fm):
        assert lg.shape == ref_logits.shape
        assert len(fm) == len(ref_fmap) == 6
        for a, b in zip(fm, ref_fmap):
            assert a.shape == b.shape, (a.shape, b.shape)
            assert jnp.allclose(a.astype(jnp.float32), b.astype(jnp.float32),
                                rtol=2e-2, atol=2e-2)
        assert jnp.allclose(lg.astype(jnp.float32),
                            ref_logits.astype(jnp.float32), rtol=2e-2, atol=2e-2)

    check(logits, fmap)

    # Also exercise the Cout-tiled / L-tiled kernel paths with a tiny forced
    # planning budget (what long-audio / big-channel configs would pick).
    forward_tiled = jax.jit(functools.partial(
        mpd_forward, params=prep, period=period, vmem_budget=60_000))
    logits2, fmap2 = forward_tiled(x)
    logits2 = jax.block_until_ready(logits2)
    check(logits2, fmap2)

    print("KERNEL_OK")
</pallas_src>

<mosaic_0001>
module attributes {stable_mosaic.version = 11 : i64} {
  func.func @_fused_conv_kernel(%arg0: i32, %arg1: i32, %arg2: i32, %arg3: memref<1x48x24xbf16, #tpu.memory_space<vmem>>, %arg4: memref<2x24x128xbf16, #tpu.memory_space<vmem>>, %arg5: memref<8x128xf32, #tpu.memory_space<vmem>>, %arg6: memref<1x40x128xbf16, #tpu.memory_space<vmem>>) attributes {dimension_semantics = [#tpu.dimension_semantics<parallel>, #tpu.dimension_semantics<parallel>, #tpu.dimension_semantics<parallel>], iteration_bounds = array<i64: 1, 10, 1>, scalar_prefetch = 0 : i64, scratch_operands = 0 : i64, tpu.core_type = #tpu.core_type<tc>, window_params = [{transform_indices = @transform_0, window_bounds = array<i64: 1, 48, 24>}, {transform_indices = @transform_1, window_bounds = array<i64: 2, 24, 128>}, {transform_indices = @transform_2, window_bounds = array<i64: 8, 128>}, {transform_indices = @transform_3, window_bounds = array<i64: 1, 40, 128>}]} {
    %c0 = arith.constant 0 : index
    %c0_0 = arith.constant 0 : index
    %c0_1 = arith.constant 0 : index
    %0 = vector.load %arg3[%c0, %c0_0, %c0_1] : memref<1x48x24xbf16, #tpu.memory_space<vmem>>, vector<1x40x24xbf16>
    %1 = vector.shape_cast %0 : vector<1x40x24xbf16> to vector<40x24xbf16>
    %c0_2 = arith.constant 0 : index
    %c0_3 = arith.constant 0 : index
    %c0_4 = arith.constant 0 : index
    %2 = vector.load %arg4[%c0_2, %c0_3, %c0_4] : memref<2x24x128xbf16, #tpu.memory_space<vmem>>, vector<1x24x128xbf16>
    %3 = vector.shape_cast %2 : vector<1x24x128xbf16> to vector<24x128xbf16>
    %cst = arith.constant dense<0.000000e+00> : vector<40x128xf32>
    %4 = tpu.matmul %1, %3, %cst {dimension_numbers = #tpu.dot_dimension_numbers<[1], [0], [0], [1], [0, 0, 1, 1], [], []>} : vector<40x24xbf16>, vector<24x128xbf16>, vector<40x128xf32> -> vector<40x128xf32>
    %c0_5 = arith.constant 0 : index
    %c1 = arith.constant 1 : index
    %c0_6 = arith.constant 0 : index
    %5 = vector.load %arg3[%c0_5, %c1, %c0_6] : memref<1x48x24xbf16, #tpu.memory_space<vmem>>, vector<1x40x24xbf16>
    %6 = vector.shape_cast %5 : vector<1x40x24xbf16> to vector<40x24xbf16>
    %c1_7 = arith.constant 1 : index
    %c0_8 = arith.constant 0 : index
    %c0_9 = arith.constant 0 : index
    %7 = vector.load %arg4[%c1_7, %c0_8, %c0_9] : memref<2x24x128xbf16, #tpu.memory_space<vmem>>, vector<1x24x128xbf16>
    %8 = vector.shape_cast %7 : vector<1x24x128xbf16> to vector<24x128xbf16>
    %cst_10 = arith.constant dense<0.000000e+00> : vector<40x128xf32>
    %9 = tpu.matmul %6, %8, %cst_10 {dimension_numbers = #tpu.dot_dimension_numbers<[1], [0], [0], [1], [0, 0, 1, 1], [], []>} : vector<40x24xbf16>, vector<24x128xbf16>, vector<40x128xf32> -> vector<40x128xf32>
    %10 = arith.addf %4, %9 : vector<40x128xf32>
    %c0_11 = arith.constant 0 : index
    %c0_12 = arith.constant 0 : index
    %11 = vector.load %arg5[%c0_11, %c0_12] : memref<8x128xf32, #tpu.memory_space<vmem>>, vector<1x128xf32>
    %12 = vector.broadcast %11 : vector<1x128xf32> to vector<40x128xf32>
    %13 = arith.addf %10, %12 : vector<40x128xf32>
    %cst_13 = arith.constant 0.000000e+00 : f32
    %14 = vector.broadcast %cst_13 : f32 to vector<40x128xf32>
    %15 = arith.cmpf oge, %13, %14 : vector<40x128xf32>
    %cst_14 = arith.constant 1.000000e-01 : f32
    %16 = vector.broadcast %cst_14 : f32 to vector<40x128xf32>
    %17 = arith.mulf %16, %13 : vector<40x128xf32>
    %18 = arith.select %15, %13, %17 : vector<40x128xi1>, vector<40x128xf32>
    %19 = arith.truncf %18 : vector<40x128xf32> to vector<40x128xbf16>
    %c0_15 = arith.constant 0 : index
    %c0_16 = arith.constant 0 : index
    %c0_17 = arith.constant 0 : index
    %20 = vector.load %arg6[%c0_15, %c0_16, %c0_17] : memref<1x40x128xbf16, #tpu.memory_space<vmem>>, vector<1x40x128xbf16>
    %21 = vector.shape_cast %20 : vector<1x40x128xbf16> to vector<40x128xbf16>
    %22 = vector.shape_cast %19 : vector<40x128xbf16> to vector<1x40x128xbf16>
    tpu.vector_store %arg6[%c0_15, %c0_16, %c0_17], %22 {strides = array<i32>} : memref<1x40x128xbf16, #tpu.memory_space<vmem>>, vector<1x40x128xbf16>,
    return
  }
  func.func @transform_0(%arg0: i32, %arg1: i32, %arg2: i32) -> (i32, i32, i32) {
    %c0_i32 = arith.constant 0 : i32
    %c0_i32_0 = arith.constant 0 : i32
    %c0_i32_1 = arith.constant 0 : i32
    return %arg1, %c0_i32, %c0_i32_0 : i32, i32, i32
  }
  func.func @transform_1(%arg0: i32, %arg1: i32, %arg2: i32) -> (i32, i32, i32) {
    %c0_i32 = arith.constant 0 : i32
    %c0_i32_0 = arith.constant 0 : i32
    %c0_i32_1 = arith.constant 0 : i32
    return %c0_i32, %c0_i32_0, %arg0 : i32, i32, i32
  }
  func.func @transform_2(%arg0: i32, %arg1: i32, %arg2: i32) -> (i32, i32) {
    %c0_i32 = arith.constant 0 : i32
    %c0_i32_0 = arith.constant 0 : i32
    return %c0_i32, %arg0 : i32, i32
  }
  func.func @transform_3(%arg0: i32, %arg1: i32, %arg2: i32) -> (i32, i32, i32) {
    %c0_i32 = arith.constant 0 : i32
    return %arg1, %arg2, %arg0 : i32, i32, i32
  }
}

module attributes {stable_mosaic.version = 11 : i64} {
  func.func @_fused_conv_kernel(%arg0: i32, %arg1: i32, %arg2: i32, %arg3: memref<1x24x384xbf16, #tpu.memory_space<vmem>>, %arg4: memref<2x384x128xbf16, #tpu.memory_space<vmem>>, %arg5: memref<8x128xf32, #tpu.memory_space<vmem>>, %arg6: memref<1x16x128xbf16, #tpu.memory_space<vmem>>) attributes {dimension_semantics = [#tpu.dimension_semantics<parallel>, #tpu.dimension_semantics<parallel>, #tpu.dimension_semantics<parallel>], iteration_bounds = array<i64: 1, 10, 1>, scalar_prefetch = 0 : i64, scratch_operands = 0 : i64, tpu.core_type = #tpu.core_type<tc>, window_params = [{transform_indices = @transform_0, window_bounds = array<i64: 1, 24, 384>}, {transform_indices = @transform_1, window_bounds = array<i64: 2, 384, 128>}, {transform_indices = @transform_2, window_bounds = array<i64: 8, 128>}, {transform_indices = @transform_3, window_bounds = array<i64: 1, 16, 128>}]} {
    %c0 = arith.constant 0 : index
    %c0_0 = arith.constant 0 : index
    %c0_1 = arith.constant 0 : index
    %0 = vector.load %arg3[%c0, %c0_0, %c0_1] : memref<1x24x384xbf16, #tpu.memory_space<vmem>>, vector<1x16x384xbf16>
    %1 = vector.shape_cast %0 : vector<1x16x384xbf16> to vector<16x384xbf16>
    %c0_2 = arith.constant 0 : index
    %c0_3 = arith.constant 0 : index
    %c0_4 = arith.constant 0 : index
    %2 = vector.load %arg4[%c0_2, %c0_3, %c0_4] : memref<2x384x128xbf16, #tpu.memory_space<vmem>>, vector<1x384x128xbf16>
    %3 = vector.shape_cast %2 : vector<1x384x128xbf16> to vector<384x128xbf16>
    %cst = arith.constant dense<0.000000e+00> : vector<16x128xf32>
    %4 = tpu.matmul %1, %3, %cst {dimension_numbers = #tpu.dot_dimension_numbers<[1], [0], [0], [1], [0, 0, 1, 1], [], []>} : vector<16x384xbf16>, vector<384x128xbf16>, vector<16x128xf32> -> vector<16x128xf32>
    %c0_5 = arith.constant 0 : index
    %c1 = arith.constant 1 : index
    %c0_6 = arith.constant 0 : index
    %5 = vector.load %arg3[%c0_5, %c1, %c0_6] : memref<1x24x384xbf16, #tpu.memory_space<vmem>>, vector<1x16x384xbf16>
    %6 = vector.shape_cast %5 : vector<1x16x384xbf16> to vector<16x384xbf16>
    %c1_7 = arith.constant 1 : index
    %c0_8 = arith.constant 0 : index
    %c0_9 = arith.constant 0 : index
    %7 = vector.load %arg4[%c1_7, %c0_8, %c0_9] : memref<2x384x128xbf16, #tpu.memory_space<vmem>>, vector<1x384x128xbf16>
    %8 = vector.shape_cast %7 : vector<1x384x128xbf16> to vector<384x128xbf16>
    %cst_10 = arith.constant dense<0.000000e+00> : vector<16x128xf32>
    %9 = tpu.matmul %6, %8, %cst_10 {dimension_numbers = #tpu.dot_dimension_numbers<[1], [0], [0], [1], [0, 0, 1, 1], [], []>} : vector<16x384xbf16>, vector<384x128xbf16>, vector<16x128xf32> -> vector<16x128xf32>
    %10 = arith.addf %4, %9 : vector<16x128xf32>
    %c0_11 = arith.constant 0 : index
    %c0_12 = arith.constant 0 : index
    %11 = vector.load %arg5[%c0_11, %c0_12] : memref<8x128xf32, #tpu.memory_space<vmem>>, vector<1x128xf32>
    %12 = vector.broadcast %11 : vector<1x128xf32> to vector<16x128xf32>
    %13 = arith.addf %10, %12 : vector<16x128xf32>
    %cst_13 = arith.constant 0.000000e+00 : f32
    %14 = vector.broadcast %cst_13 : f32 to vector<16x128xf32>
    %15 = arith.cmpf oge, %13, %14 : vector<16x128xf32>
    %cst_14 = arith.constant 1.000000e-01 : f32
    %16 = vector.broadcast %cst_14 : f32 to vector<16x128xf32>
    %17 = arith.mulf %16, %13 : vector<16x128xf32>
    %18 = arith.select %15, %13, %17 : vector<16x128xi1>, vector<16x128xf32>
    %19 = arith.truncf %18 : vector<16x128xf32> to vector<16x128xbf16>
    %c0_15 = arith.constant 0 : index
    %c0_16 = arith.constant 0 : index
    %c0_17 = arith.constant 0 : index
    %20 = vector.load %arg6[%c0_15, %c0_16, %c0_17] : memref<1x16x128xbf16, #tpu.memory_space<vmem>>, vector<1x16x128xbf16>
    %21 = vector.shape_cast %20 : vector<1x16x128xbf16> to vector<16x128xbf16>
    %22 = vector.shape_cast %19 : vector<16x128xbf16> to vector<1x16x128xbf16>
    tpu.vector_store %arg6[%c0_15, %c0_16, %c0_17], %22 {strides = array<i32>} : memref<1x16x128xbf16, #tpu.memory_space<vmem>>, vector<1x16x128xbf16>,
    return
  }
  func.func @transform_0(%arg0: i32, %arg1: i32, %arg2: i32) -> (i32, i32, i32) {
    %c0_i32 = arith.constant 0 : i32
    %c0_i32_0 = arith.constant 0 : i32
    %c0_i32_1 = arith.constant 0 : i32
    return %arg1, %c0_i32, %c0_i32_0 : i32, i32, i32
  }
  func.func @transform_1(%arg0: i32, %arg1: i32, %arg2: i32) -> (i32, i32, i32) {
    %c0_i32 = arith.constant 0 : i32
    %c0_i32_0 = arith.constant 0 : i32
    %c0_i32_1 = arith.constant 0 : i32
    return %c0_i32, %c0_i32_0, %arg0 : i32, i32, i32
  }
  func.func @transform_2(%arg0: i32, %arg1: i32, %arg2: i32) -> (i32, i32) {
    %c0_i32 = arith.constant 0 : i32
    %c0_i32_0 = arith.constant 0 : i32
    return %c0_i32, %arg0 : i32, i32
  }
  func.func @transform_3(%arg0: i32, %arg1: i32, %arg2: i32) -> (i32, i32, i32) {
    %c0_i32 = arith.constant 0 : i32
    return %arg1, %arg2, %arg0 : i32, i32, i32
  }
}

module attributes {stable_mosaic.version = 11 : i64} {
  func.func @_fused_conv_kernel(%arg0: i32, %arg1: i32, %arg2: i32, %arg3: memref<1x16x384xbf16, #tpu.memory_space<vmem>>, %arg4: memref<2x384x128xbf16, #tpu.memory_space<vmem>>, %arg5: memref<8x128xf32, #tpu.memory_space<vmem>>, %arg6: memref<1x8x128xbf16, #tpu.memory_space<vmem>>) attributes {dimension_semantics = [#tpu.dimension_semantics<parallel>, #tpu.dimension_semantics<parallel>, #tpu.dimension_semantics<parallel>], iteration_bounds = array<i64: 1, 10, 1>, scalar_prefetch = 0 : i64, scratch_operands = 0 : i64, tpu.core_type = #tpu.core_type<tc>, window_params = [{transform_indices = @transform_0, window_bounds = array<i64: 1, 16, 384>}, {transform_indices = @transform_1, window_bounds = array<i64: 2, 384, 128>}, {transform_indices = @transform_2, window_bounds = array<i64: 8, 128>}, {transform_indices = @transform_3, window_bounds = array<i64: 1, 8, 128>}]} {
    %c0 = arith.constant 0 : index
    %c0_0 = arith.constant 0 : index
    %c0_1 = arith.constant 0 : index
    %0 = vector.load %arg3[%c0, %c0_0, %c0_1] : memref<1x16x384xbf16, #tpu.memory_space<vmem>>, vector<1x8x384xbf16>
    %1 = vector.shape_cast %0 : vector<1x8x384xbf16> to vector<8x384xbf16>
    %c0_2 = arith.constant 0 : index
    %c0_3 = arith.constant 0 : index
    %c0_4 = arith.constant 0 : index
    %2 = vector.load %arg4[%c0_2, %c0_3, %c0_4] : memref<2x384x128xbf16, #tpu.memory_space<vmem>>, vector<1x384x128xbf16>
    %3 = vector.shape_cast %2 : vector<1x384x128xbf16> to vector<384x128xbf16>
    %cst = arith.constant dense<0.000000e+00> : vector<8x128xf32>
    %4 = tpu.matmul %1, %3, %cst {dimension_numbers = #tpu.dot_dimension_numbers<[1], [0], [0], [1], [0, 0, 1, 1], [], []>} : vector<8x384xbf16>, vector<384x128xbf16>, vector<8x128xf32> -> vector<8x128xf32>
    %c0_5 = arith.constant 0 : index
    %c1 = arith.constant 1 : index
    %c0_6 = arith.constant 0 : index
    %5 = vector.load %arg3[%c0_5, %c1, %c0_6] : memref<1x16x384xbf16, #tpu.memory_space<vmem>>, vector<1x8x384xbf16>
    %6 = vector.shape_cast %5 : vector<1x8x384xbf16> to vector<8x384xbf16>
    %c1_7 = arith.constant 1 : index
    %c0_8 = arith.constant 0 : index
    %c0_9 = arith.constant 0 : index
    %7 = vector.load %arg4[%c1_7, %c0_8, %c0_9] : memref<2x384x128xbf16, #tpu.memory_space<vmem>>, vector<1x384x128xbf16>
    %8 = vector.shape_cast %7 : vector<1x384x128xbf16> to vector<384x128xbf16>
    %cst_10 = arith.constant dense<0.000000e+00> : vector<8x128xf32>
    %9 = tpu.matmul %6, %8, %cst_10 {dimension_numbers = #tpu.dot_dimension_numbers<[1], [0], [0], [1], [0, 0, 1, 1], [], []>} : vector<8x384xbf16>, vector<384x128xbf16>, vector<8x128xf32> -> vector<8x128xf32>
    %10 = arith.addf %4, %9 : vector<8x128xf32>
    %c0_11 = arith.constant 0 : index
    %c0_12 = arith.constant 0 : index
    %11 = vector.load %arg5[%c0_11, %c0_12] : memref<8x128xf32, #tpu.memory_space<vmem>>, vector<1x128xf32>
    %12 = vector.broadcast %11 : vector<1x128xf32> to vector<8x128xf32>
    %13 = arith.addf %10, %12 : vector<8x128xf32>
    %cst_13 = arith.constant 0.000000e+00 : f32
    %14 = vector.broadcast %cst_13 : f32 to vector<8x128xf32>
    %15 = arith.cmpf oge, %13, %14 : vector<8x128xf32>
    %cst_14 = arith.constant 1.000000e-01 : f32
    %16 = vector.broadcast %cst_14 : f32 to vector<8x128xf32>
    %17 = arith.mulf %16, %13 : vector<8x128xf32>
    %18 = arith.select %15, %13, %17 : vector<8x128xi1>, vector<8x128xf32>
    %19 = arith.truncf %18 : vector<8x128xf32> to vector<8x128xbf16>
    %c0_15 = arith.constant 0 : index
    %c0_16 = arith.constant 0 : index
    %c0_17 = arith.constant 0 : index
    %20 = vector.load %arg6[%c0_15, %c0_16, %c0_17] : memref<1x8x128xbf16, #tpu.memory_space<vmem>>, vector<1x8x128xbf16>
    %21 = vector.shape_cast %20 : vector<1x8x128xbf16> to vector<8x128xbf16>
    %22 = vector.shape_cast %19 : vector<8x128xbf16> to vector<1x8x128xbf16>
    tpu.vector_store %arg6[%c0_15, %c0_16, %c0_17], %22 {strides = array<i32>} : memref<1x8x128xbf16, #tpu.memory_space<vmem>>, vector<1x8x128xbf16>,
    return
  }
  func.func @transform_0(%arg0: i32, %arg1: i32, %arg2: i32) -> (i32, i32, i32) {
    %c0_i32 = arith.constant 0 : i32
    %c0_i32_0 = arith.constant 0 : i32
    %c0_i32_1 = arith.constant 0 : i32
    return %arg1, %c0_i32, %c0_i32_0 : i32, i32, i32
  }
  func.func @transform_1(%arg0: i32, %arg1: i32, %arg2: i32) -> (i32, i32, i32) {
    %c0_i32 = arith.constant 0 : i32
    %c0_i32_0 = arith.constant 0 : i32
    %c0_i32_1 = arith.constant 0 : i32
    return %c0_i32, %c0_i32_0, %arg0 : i32, i32, i32
  }
  func.func @transform_2(%arg0: i32, %arg1: i32, %arg2: i32) -> (i32, i32) {
    %c0_i32 = arith.constant 0 : i32
    %c0_i32_0 = arith.constant 0 : i32
    return %c0_i32, %arg0 : i32, i32
  }
  func.func @transform_3(%arg0: i32, %arg1: i32, %arg2: i32) -> (i32, i32, i32) {
    %c0_i32 = arith.constant 0 : i32
    return %arg1, %arg2, %arg0 : i32, i32, i32
  }
}

module attributes {stable_mosaic.version = 11 : i64} {
  func.func @_fused_conv_kernel(%arg0: i32, %arg1: i32, %arg2: i32, %arg3: memref<1x16x384xbf16, #tpu.memory_space<vmem>>, %arg4: memref<2x384x256xbf16, #tpu.memory_space<vmem>>, %arg5: memref<8x256xf32, #tpu.memory_space<vmem>>, %arg6: memref<1x8x256xbf16, #tpu.memory_space<vmem>>) attributes {dimension_semantics = [#tpu.dimension_semantics<parallel>, #tpu.dimension_semantics<parallel>, #tpu.dimension_semantics<parallel>], iteration_bounds = array<i64: 1, 10, 1>, scalar_prefetch = 0 : i64, scratch_operands = 0 : i64, tpu.core_type = #tpu.core_type<tc>, window_params = [{transform_indices = @transform_0, window_bounds = array<i64: 1, 16, 384>}, {transform_indices = @transform_1, window_bounds = array<i64: 2, 384, 256>}, {transform_indices = @transform_2, window_bounds = array<i64: 8, 256>}, {transform_indices = @transform_3, window_bounds = array<i64: 1, 8, 256>}]} {
    %c0 = arith.constant 0 : index
    %c0_0 = arith.constant 0 : index
    %c0_1 = arith.constant 0 : index
    %0 = vector.load %arg3[%c0, %c0_0, %c0_1] : memref<1x16x384xbf16, #tpu.memory_space<vmem>>, vector<1x8x384xbf16>
    %1 = vector.shape_cast %0 : vector<1x8x384xbf16> to vector<8x384xbf16>
    %c0_2 = arith.constant 0 : index
    %c0_3 = arith.constant 0 : index
    %c0_4 = arith.constant 0 : index
    %2 = vector.load %arg4[%c0_2, %c0_3, %c0_4] : memref<2x384x256xbf16, #tpu.memory_space<vmem>>, vector<1x384x256xbf16>
    %3 = vector.shape_cast %2 : vector<1x384x256xbf16> to vector<384x256xbf16>
    %cst = arith.constant dense<0.000000e+00> : vector<8x256xf32>
    %4 = tpu.matmul %1, %3, %cst {dimension_numbers = #tpu.dot_dimension_numbers<[1], [0], [0], [1], [0, 0, 1, 1], [], []>} : vector<8x384xbf16>, vector<384x256xbf16>, vector<8x256xf32> -> vector<8x256xf32>
    %c0_5 = arith.constant 0 : index
    %c1 = arith.constant 1 : index
    %c0_6 = arith.constant 0 : index
    %5 = vector.load %arg3[%c0_5, %c1, %c0_6] : memref<1x16x384xbf16, #tpu.memory_space<vmem>>, vector<1x8x384xbf16>
    %6 = vector.shape_cast %5 : vector<1x8x384xbf16> to vector<8x384xbf16>
    %c1_7 = arith.constant 1 : index
    %c0_8 = arith.constant 0 : index
    %c0_9 = arith.constant 0 : index
    %7 = vector.load %arg4[%c1_7, %c0_8, %c0_9] : memref<2x384x256xbf16, #tpu.memory_space<vmem>>, vector<1x384x256xbf16>
    %8 = vector.shape_cast %7 : vector<1x384x256xbf16> to vector<384x256xbf16>
    %cst_10 = arith.constant dense<0.000000e+00> : vector<8x256xf32>
    %9 = tpu.matmul %6, %8, %cst_10 {dimension_numbers = #tpu.dot_dimension_numbers<[1], [0], [0], [1], [0, 0, 1, 1], [], []>} : vector<8x384xbf16>, vector<384x256xbf16>, vector<8x256xf32> -> vector<8x256xf32>
    %10 = arith.addf %4, %9 : vector<8x256xf32>
    %c0_11 = arith.constant 0 : index
    %c0_12 = arith.constant 0 : index
    %11 = vector.load %arg5[%c0_11, %c0_12] : memref<8x256xf32, #tpu.memory_space<vmem>>, vector<1x256xf32>
    %12 = vector.broadcast %11 : vector<1x256xf32> to vector<8x256xf32>
    %13 = arith.addf %10, %12 : vector<8x256xf32>
    %cst_13 = arith.constant 0.000000e+00 : f32
    %14 = vector.broadcast %cst_13 : f32 to vector<8x256xf32>
    %15 = arith.cmpf oge, %13, %14 : vector<8x256xf32>
    %cst_14 = arith.constant 1.000000e-01 : f32
    %16 = vector.broadcast %cst_14 : f32 to vector<8x256xf32>
    %17 = arith.mulf %16, %13 : vector<8x256xf32>
    %18 = arith.select %15, %13, %17 : vector<8x256xi1>, vector<8x256xf32>
    %19 = arith.truncf %18 : vector<8x256xf32> to vector<8x256xbf16>
    %c0_15 = arith.constant 0 : index
    %c0_16 = arith.constant 0 : index
    %c0_17 = arith.constant 0 : index
    %20 = vector.load %arg6[%c0_15, %c0_16, %c0_17] : memref<1x8x256xbf16, #tpu.memory_space<vmem>>, vector<1x8x256xbf16>
    %21 = vector.shape_cast %20 : vector<1x8x256xbf16> to vector<8x256xbf16>
    %22 = vector.shape_cast %19 : vector<8x256xbf16> to vector<1x8x256xbf16>
    tpu.vector_store %arg6[%c0_15, %c0_16, %c0_17], %22 {strides = array<i32>} : memref<1x8x256xbf16, #tpu.memory_space<vmem>>, vector<1x8x256xbf16>,
    return
  }
  func.func @transform_0(%arg0: i32, %arg1: i32, %arg2: i32) -> (i32, i32, i32) {
    %c0_i32 = arith.constant 0 : i32
    %c0_i32_0 = arith.constant 0 : i32
    %c0_i32_1 = arith.constant 0 : i32
    return %arg1, %c0_i32, %c0_i32_0 : i32, i32, i32
  }
  func.func @transform_1(%arg0: i32, %arg1: i32, %arg2: i32) -> (i32, i32, i32) {
    %c0_i32 = arith.constant 0 : i32
    %c0_i32_0 = arith.constant 0 : i32
    %c0_i32_1 = arith.constant 0 : i32
    return %c0_i32, %c0_i32_0, %arg0 : i32, i32, i32
  }
  func.func @transform_2(%arg0: i32, %arg1: i32, %arg2: i32) -> (i32, i32) {
    %c0_i32 = arith.constant 0 : i32
    %c0_i32_0 = arith.constant 0 : i32
    return %c0_i32, %arg0 : i32, i32
  }
  func.func @transform_3(%arg0: i32, %arg1: i32, %arg2: i32) -> (i32, i32, i32) {
    %c0_i32 = arith.constant 0 : i32
    return %arg1, %arg2, %arg0 : i32, i32, i32
  }
}

module attributes {stable_mosaic.version = 11 : i64} {
  func.func @_fused_conv_kernel(%arg0: i32, %arg1: i32, %arg2: i32, %arg3: memref<1x16x256xbf16, #tpu.memory_space<vmem>>, %arg4: memref<5x256x256xbf16, #tpu.memory_space<vmem>>, %arg5: memref<8x256xf32, #tpu.memory_space<vmem>>, %arg6: memref<1x8x256xbf16, #tpu.memory_space<vmem>>) attributes {dimension_semantics = [#tpu.dimension_semantics<parallel>, #tpu.dimension_semantics<parallel>, #tpu.dimension_semantics<parallel>], iteration_bounds = array<i64: 1, 10, 1>, scalar_prefetch = 0 : i64, scratch_operands = 0 : i64, tpu.core_type = #tpu.core_type<tc>, window_params = [{transform_indices = @transform_0, window_bounds = array<i64: 1, 16, 256>}, {transform_indices = @transform_1, window_bounds = array<i64: 5, 256, 256>}, {transform_indices = @transform_2, window_bounds = array<i64: 8, 256>}, {transform_indices = @transform_3, window_bounds = array<i64: 1, 8, 256>}]} {
    %c0 = arith.constant 0 : index
    %c0_0 = arith.constant 0 : index
    %c0_1 = arith.constant 0 : index
    %0 = vector.load %arg3[%c0, %c0_0, %c0_1] : memref<1x16x256xbf16, #tpu.memory_space<vmem>>, vector<1x8x256xbf16>
    %1 = vector.shape_cast %0 : vector<1x8x256xbf16> to vector<8x256xbf16>
    %c0_2 = arith.constant 0 : index
    %c0_3 = arith.constant 0 : index
    %c0_4 = arith.constant 0 : index
    %2 = vector.load %arg4[%c0_2, %c0_3, %c0_4] : memref<5x256x256xbf16, #tpu.memory_space<vmem>>, vector<1x256x256xbf16>
    %3 = vector.shape_cast %2 : vector<1x256x256xbf16> to vector<256x256xbf16>
    %cst = arith.constant dense<0.000000e+00> : vector<8x256xf32>
    %4 = tpu.matmul %1, %3, %cst {dimension_numbers = #tpu.dot_dimension_numbers<[1], [0], [0], [1], [0, 0, 1, 1], [], []>} : vector<8x256xbf16>, vector<256x256xbf16>, vector<8x256xf32> -> vector<8x256xf32>
    %c0_5 = arith.constant 0 : index
    %c1 = arith.constant 1 : index
    %c0_6 = arith.constant 0 : index
    %5 = vector.load %arg3[%c0_5, %c1, %c0_6] : memref<1x16x256xbf16, #tpu.memory_space<vmem>>, vector<1x8x256xbf16>
    %6 = vector.shape_cast %5 : vector<1x8x256xbf16> to vector<8x256xbf16>
    %c1_7 = arith.constant 1 : index
    %c0_8 = arith.constant 0 : index
    %c0_9 = arith.constant 0 : index
    %7 = vector.load %arg4[%c1_7, %c0_8, %c0_9] : memref<5x256x256xbf16, #tpu.memory_space<vmem>>, vector<1x256x256xbf16>
    %8 = vector.shape_cast %7 : vector<1x256x256xbf16> to vector<256x256xbf16>
    %cst_10 = arith.constant dense<0.000000e+00> : vector<8x256xf32>
    %9 = tpu.matmul %6, %8, %cst_10 {dimension_numbers = #tpu.dot_dimension_numbers<[1], [0], [0], [1], [0, 0, 1, 1], [], []>} : vector<8x256xbf16>, vector<256x256xbf16>, vector<8x256xf32> -> vector<8x256xf32>
    %10 = arith.addf %4, %9 : vector<8x256xf32>
    %c0_11 = arith.constant 0 : index
    %c2 = arith.constant 2 : index
    %c0_12 = arith.constant 0 : index
    %11 = vector.load %arg3[%c0_11, %c2, %c0_12] : memref<1x16x256xbf16, #tpu.memory_space<vmem>>, vector<1x8x256xbf16>
    %12 = vector.shape_cast %11 : vector<1x8x256xbf16> to vector<8x256xbf16>
    %c2_13 = arith.constant 2 : index
    %c0_14 = arith.constant 0 : index
    %c0_15 = arith.constant 0 : index
    %13 = vector.load %arg4[%c2_13, %c0_14, %c0_15] : memref<5x256x256xbf16, #tpu.memory_space<vmem>>, vector<1x256x256xbf16>
    %14 = vector.shape_cast %13 : vector<1x256x256xbf16> to vector<256x256xbf16>
    %cst_16 = arith.constant dense<0.000000e+00> : vector<8x256xf32>
    %15 = tpu.matmul %12, %14, %cst_16 {dimension_numbers = #tpu.dot_dimension_numbers<[1], [0], [0], [1], [0, 0, 1, 1], [], []>} : vector<8x256xbf16>, vector<256x256xbf16>, vector<8x256xf32> -> vector<8x256xf32>
    %16 = arith.addf %10, %15 : vector<8x256xf32>
    %c0_17 = arith.constant 0 : index
    %c3 = arith.constant 3 : index
    %c0_18 = arith.constant 0 : index
    %17 = vector.load %arg3[%c0_17, %c3, %c0_18] : memref<1x16x256xbf16, #tpu.memory_space<vmem>>, vector<1x8x256xbf16>
    %18 = vector.shape_cast %17 : vector<1x8x256xbf16> to vector<8x256xbf16>
    %c3_19 = arith.constant 3 : index
    %c0_20 = arith.constant 0 : index
    %c0_21 = arith.constant 0 : index
    %19 = vector.load %arg4[%c3_19, %c0_20, %c0_21] : memref<5x256x256xbf16, #tpu.memory_space<vmem>>, vector<1x256x256xbf16>
    %20 = vector.shape_cast %19 : vector<1x256x256xbf16> to vector<256x256xbf16>
    %cst_22 = arith.constant dense<0.000000e+00> : vector<8x256xf32>
    %21 = tpu.matmul %18, %20, %cst_22 {dimension_numbers = #tpu.dot_dimension_numbers<[1], [0], [0], [1], [0, 0, 1, 1], [], []>} : vector<8x256xbf16>, vector<256x256xbf16>, vector<8x256xf32> -> vector<8x256xf32>
    %22 = arith.addf %16, %21 : vector<8x256xf32>
    %c0_23 = arith.constant 0 : index
    %c4 = arith.constant 4 : index
    %c0_24 = arith.constant 0 : index
    %23 = vector.load %arg3[%c0_23, %c4, %c0_24] : memref<1x16x256xbf16, #tpu.memory_space<vmem>>, vector<1x8x256xbf16>
    %24 = vector.shape_cast %23 : vector<1x8x256xbf16> to vector<8x256xbf16>
    %c4_25 = arith.constant 4 : index
    %c0_26 = arith.constant 0 : index
    %c0_27 = arith.constant 0 : index
    %25 = vector.load %arg4[%c4_25, %c0_26, %c0_27] : memref<5x256x256xbf16, #tpu.memory_space<vmem>>, vector<1x256x256xbf16>
    %26 = vector.shape_cast %25 : vector<1x256x256xbf16> to vector<256x256xbf16>
    %cst_28 = arith.constant dense<0.000000e+00> : vector<8x256xf32>
    %27 = tpu.matmul %24, %26, %cst_28 {dimension_numbers = #tpu.dot_dimension_numbers<[1], [0], [0], [1], [0, 0, 1, 1], [], []>} : vector<8x256xbf16>, vector<256x256xbf16>, vector<8x256xf32> -> vector<8x256xf32>
    %28 = arith.addf %22, %27 : vector<8x256xf32>
    %c0_29 = arith.constant 0 : index
    %c0_30 = arith.constant 0 : index
    %29 = vector.load %arg5[%c0_29, %c0_30] : memref<8x256xf32, #tpu.memory_space<vmem>>, vector<1x256xf32>
    %30 = vector.broadcast %29 : vector<1x256xf32> to vector<8x256xf32>
    %31 = arith.addf %28, %30 : vector<8x256xf32>
    %cst_31 = arith.constant 0.000000e+00 : f32
    %32 = vector.broadcast %cst_31 : f32 to vector<8x256xf32>
    %33 = arith.cmpf oge, %31, %32 : vector<8x256xf32>
    %cst_32 = arith.constant 1.000000e-01 : f32
    %34 = vector.broadcast %cst_32 : f32 to vector<8x256xf32>
    %35 = arith.mulf %34, %31 : vector<8x256xf32>
    %36 = arith.select %33, %31, %35 : vector<8x256xi1>, vector<8x256xf32>
    %37 = arith.truncf %36 : vector<8x256xf32> to vector<8x256xbf16>
    %c0_33 = arith.constant 0 : index
    %c0_34 = arith.constant 0 : index
    %c0_35 = arith.constant 0 : index
    %38 = vector.load %arg6[%c0_33, %c0_34, %c0_35] : memref<1x8x256xbf16, #tpu.memory_space<vmem>>, vector<1x8x256xbf16>
    %39 = vector.shape_cast %38 : vector<1x8x256xbf16> to vector<8x256xbf16>
    %40 = vector.shape_cast %37 : vector<8x256xbf16> to vector<1x8x256xbf16>
    tpu.vector_store %arg6[%c0_33, %c0_34, %c0_35], %40 {strides = array<i32>} : memref<1x8x256xbf16, #tpu.memory_space<vmem>>, vector<1x8x256xbf16>,
    return
  }
  func.func @transform_0(%arg0: i32, %arg1: i32, %arg2: i32) -> (i32, i32, i32) {
    %c0_i32 = arith.constant 0 : i32
    %c0_i32_0 = arith.constant 0 : i32
    %c0_i32_1 = arith.constant 0 : i32
    return %arg1, %c0_i32, %c0_i32_0 : i32, i32, i32
  }
  func.func @transform_1(%arg0: i32, %arg1: i32, %arg2: i32) -> (i32, i32, i32) {
    %c0_i32 = arith.constant 0 : i32
    %c0_i32_0 = arith.constant 0 : i32
    %c0_i32_1 = arith.constant 0 : i32
    return %c0_i32, %c0_i32_0, %arg0 : i32, i32, i32
  }
  func.func @transform_2(%arg0: i32, %arg1: i32, %arg2: i32) -> (i32, i32) {
    %c0_i32 = arith.constant 0 : i32
    %c0_i32_0 = arith.constant 0 : i32
    return %c0_i32, %arg0 : i32, i32
  }
  func.func @transform_3(%arg0: i32, %arg1: i32, %arg2: i32) -> (i32, i32, i32) {
    %c0_i32 = arith.constant 0 : i32
    return %arg1, %arg2, %arg0 : i32, i32, i32
  }
}

</mosaic_0001>

<llo_original>
// kernel: mpd_forward.5
$region0: #{mpd_forward.5}
  #allocation0 [shape = 'u32[]', space=smem, size = 0x4, offset = 0x4, fixed_abs, tag = 'smem constant byte address 0x4 - core index']
  #allocation1 [shape = 'u32[144,128]{1,0:T(1,128)}', space=vmem, size = 0x12000, scoped, tag = 'internal scratch']
  %s0 = inlined_call_operand.vmem [shape: bf16[10,48,24], index: 0, kind: input, shape index: {}]
  %s1 = inlined_call_operand.vmem [shape: bf16[2,24,128], index: 1, kind: input, shape index: {}]
  %s2 = inlined_call_operand.vmem [shape: f32[8,128], index: 2, kind: input, shape index: {}]
  %s3 = inlined_call_operand.vmem [shape: bf16[10,40,128], index: 3, kind: output, shape index: {}]
  %s4 = sld [smem:[#allocation0]]
  $region45: #{mpd_forward.5} parent=0
    _
  %s6 = ssub.s32 1, %s4
  %s7 = scalar_select 0, %s6, %s4
  loop: start=0, step=1, limit=12
  $region2: #{mpd_forward.5} parent=0 // loop_pre_header
    _
  $region3: #{mpd_forward.5} parent=0 // loop_header
    %s9 = sphi 0, %s13
    %p10 = scmp.ge.s32.totalorder %s9, 12
    %s16 = sphi 0, %s35
    %s17 = sphi 0, %s31
    %s18 = sphi 0, %s27
    %s19 = sphi 0, %s16
    %s20 = sphi 0, %s17
    %s21 = sphi 0, %s18
    %s22 = sphi 0, %s19
    %s23 = sphi 0, %s20
    %s24 = sphi 0, %s21
    %s38 = sphi 0, %s40
    %s41 = sphi 0, %s38
    %s42 = sphi 0, %s41
    %s58 = sphi 0, %s42
    %s64 = sphi 0, %s66
    %s67 = sphi 0, %s64
    %s68 = sphi 0, %s67
    %s84 = sphi 0, %s68
    %s90 = sphi 0, %s92
    %s93 = sphi 0, %s90
    %s94 = sphi 0, %s93
    %s110 = sphi 0, %s94
    %s120 = sphi 0, %s122
    %s123 = sphi 0, %s120
    %s124 = sphi 0, %s123
    %s140 = sphi 0, %s124
  $region4: #{mpd_forward.5} parent=0 // loop_header_branch
    %12 = sbr.rel (%p10) target = $region8
  $region5: #{mpd_forward.5} parent=0 // loop_body
    %s14 = ssub.s32 %s9, 1
    %s15 = ssub.s32 %s9, 2
    %s25 = sadd.s32 1, %s18
    %p26 = scmp.ge.s32.totalorder %s25, 1
    %s27 = scalar_select %p26, 0, %s25
    %s28 = sadd.s32 1, %s17
    %s29 = scalar_select %p26, %s28, %s17
    %p30 = scmp.ge.s32.totalorder %s29, 10
    %s31 = scalar_select %p30, 0, %s29
    %s32 = sadd.s32 1, %s16
    %s33 = scalar_select %p30, %s32, %s16
    %p34 = scmp.ge.s32.totalorder %s33, 1
    %s35 = scalar_select %p34, 0, %s33
    %s36 = ssub.s32 %s17, %s31
    %p37 = scmp.eq.s32.totalorder %s36, 0
    %s39 = sadd.s32 %s38, 1
    %s40 = scalar_select %p37, %s38, %s39
    %p43 = pneg %p37
    %p44 = scmp.eq.s32.totalorder %s9, 9
    %p45 = por %p43, %p44
    %p46 = scmp.ne.s32.totalorder %s38, %s41
    %p47 = scmp.eq.s32.totalorder %s9, 0
    %p48 = por %p46, %p47
    %p49 = scmp.ne.s32.totalorder %s38, %s41
    %p50 = scmp.eq.s32.totalorder %s14, 9
    %p51 = por %p49, %p50
    %p52 = scmp.ne.s32.totalorder %s41, %s42
    %p53 = scmp.eq.s32.totalorder %s14, 0
    %p54 = por %p52, %p53
    %p55 = scmp.ne.s32.totalorder %s41, %s42
    %p56 = scmp.eq.s32.totalorder %s15, 9
    %p57 = por %p55, %p56
    %p59 = scmp.ne.s32.totalorder %s42, %s58
    %p60 = scmp.eq.s32.totalorder %s15, 0
    %p61 = por %p59, %p60
    %s62 = ssub.s32 %s16, %s35
    %p63 = scmp.eq.s32.totalorder %s62, 0
    %s65 = sadd.s32 %s64, 1
    %s66 = scalar_select %p63, %s64, %s65
    %p69 = pneg %p63
    %p70 = scmp.eq.s32.totalorder %s9, 9
    %p71 = por %p69, %p70
    %p72 = scmp.ne.s32.totalorder %s64, %s67
    %p73 = scmp.eq.s32.totalorder %s9, 0
    %p74 = por %p72, %p73
    %p75 = scmp.ne.s32.totalorder %s64, %s67
    %p76 = scmp.eq.s32.totalorder %s14, 9
    %p77 = por %p75, %p76
    %p78 = scmp.ne.s32.totalorder %s67, %s68
    %p79 = scmp.eq.s32.totalorder %s14, 0
    %p80 = por %p78, %p79
    %p81 = scmp.ne.s32.totalorder %s67, %s68
    %p82 = scmp.eq.s32.totalorder %s15, 9
    %p83 = por %p81, %p82
    %p85 = scmp.ne.s32.totalorder %s68, %s84
    %p86 = scmp.eq.s32.totalorder %s15, 0
    %p87 = por %p85, %p86
    %s88 = ssub.s32 %s16, %s35
    %p89 = scmp.eq.s32.totalorder %s88, 0
    %s91 = sadd.s32 %s90, 1
    %s92 = scalar_select %p89, %s90, %s91
    %p95 = pneg %p89
    %p96 = scmp.eq.s32.totalorder %s9, 9
    %p97 = por %p95, %p96
    %p98 = scmp.ne.s32.totalorder %s90, %s93
    %p99 = scmp.eq.s32.totalorder %s9, 0
    %p100 = por %p98, %p99
    %p101 = scmp.ne.s32.totalorder %s90, %s93
    %p102 = scmp.eq.s32.totalorder %s14, 9
    %p103 = por %p101, %p102
    %p104 = scmp.ne.s32.totalorder %s93, %s94
    %p105 = scmp.eq.s32.totalorder %s14, 0
    %p106 = por %p104, %p105
    %p107 = scmp.ne.s32.totalorder %s93, %s94
    %p108 = scmp.eq.s32.totalorder %s15, 9
    %p109 = por %p107, %p108
    %p111 = scmp.ne.s32.totalorder %s94, %s110
    %p112 = scmp.eq.s32.totalorder %s15, 0
    %p113 = por %p111, %p112
    %s114 = ssub.s32 %s17, %s31
    %s115 = ssub.s32 %s18, %s27
    %s116 = sor.u32 %s114, %s115
    %s117 = ssub.s32 %s16, %s35
    %s118 = sor.u32 %s116, %s117
    %p119 = scmp.eq.s32.totalorder %s118, 0
    %s121 = sadd.s32 %s120, 1
    %s122 = scalar_select %p119, %s120, %s121
    %p125 = pneg %p119
    %p126 = scmp.eq.s32.totalorder %s9, 9
    %p127 = por %p125, %p126
    %p128 = scmp.ne.s32.totalorder %s120, %s123
    %p129 = scmp.eq.s32.totalorder %s9, 0
    %p130 = por %p128, %p129
    %p131 = scmp.ne.s32.totalorder %s120, %s123
    %p132 = scmp.eq.s32.totalorder %s14, 9
    %p133 = por %p131, %p132
    %p134 = scmp.ne.s32.totalorder %s123, %s124
    %p135 = scmp.eq.s32.totalorder %s14, 0
    %p136 = por %p134, %p135
    %p137 = scmp.ne.s32.totalorder %s123, %s124
    %p138 = scmp.eq.s32.totalorder %s15, 9
    %p139 = por %p137, %p138
    %p141 = scmp.ne.s32.totalorder %s124, %s140
    %p142 = scmp.eq.s32.totalorder %s15, 0
    %p143 = por %p141, %p142
    %p144 = scmp.le.s32.totalorder 1, %s9
    %p145 = scmp.lt.s32.totalorder %s9, 11
    %p146 = pnand %p144, %p145
    %p147 = pneg %p146
    // Predicated region
    $region9: #{mpd_forward.5} parent=5 // pred_check
      _
    $region10: #{mpd_forward.5} parent=5 // pred_check_branch
      %149 = sbr.rel (%p146) target = $region12
    $region11: #{mpd_forward.5} parent=5 // pred_region
      %s150 = ssub.s32 %s9, 1
      // Predicated region
      $region13: #{mpd_forward.5} parent=11 // pred_check
        %p151 = pneg %p80
      $region14: #{mpd_forward.5} parent=11 // pred_check_branch
        %153 = sbr.rel (%p151) target = $region16
      $region15: #{mpd_forward.5} parent=11 // pred_region
        %p154 = scmp.lt.s32.totalorder %s19, 0
        %s155 = scalar_select %p154, %s19, 0
        %s156 = smul.addr %s155, 4
        %s157 = scalar_lea.vmem %s1, %s156
      $region16: #{mpd_forward.5} parent=11 // pred_fallthru
        _
      // Predicated region
      $region17: #{mpd_forward.5} parent=11 // pred_check
        %p158 = pneg %p106
      $region18: #{mpd_forward.5} parent=11 // pred_check_branch
        %160 = sbr.rel (%p158) target = $region20
      $region19: #{mpd_forward.5} parent=11 // pred_region
        %p161 = scmp.lt.s32.totalorder %s19, 0
        %s162 = scalar_select %p161, %s19, 0
        %s163 = smul.addr %s162, 8
        %s164 = scalar_lea.vmem %s2, %s163
      $region20: #{mpd_forward.5} parent=11 // pred_fallthru
        _
    $region12: #{mpd_forward.5} parent=5 // pred_fallthru
      _
    %p165 = scmp.lt.s32.totalorder %s9, 10
    // Predicated region
    $region21: #{mpd_forward.5} parent=5 // pred_check
      %p166 = pneg %p165
    $region22: #{mpd_forward.5} parent=5 // pred_check_branch
      %168 = sbr.rel (%p166) target = $region24
    $region23: #{mpd_forward.5} parent=5 // pred_region
      // Predicated region
      $region25: #{mpd_forward.5} parent=23 // pred_check
        %p169 = pneg %p48
      $region26: #{mpd_forward.5} parent=23 // pred_check_branch
        %171 = sbr.rel (%p169) target = $region28
      $region27: #{mpd_forward.5} parent=23 // pred_region
        %p172 = scmp.lt.s32.totalorder %s17, 9
        %s173 = scalar_select %p172, %s17, 9
        %s174 = smul.addr %s173, 6
        %s175 = smul.addr %s174, 4
        %s176 = scalar_lea.vmem %s0, %s175
      $region28: #{mpd_forward.5} parent=23 // pred_fallthru
        _
    $region24: #{mpd_forward.5} parent=5 // pred_fallthru
      _
    %p177 = scmp.le.s32.totalorder 1, %s9
    %p178 = scmp.lt.s32.totalorder %s9, 11
    %p179 = pnand %p177, %p178
    %p180 = pneg %p179
    // Predicated region
    $region29: #{mpd_forward.5} parent=5 // pred_check
      _
    $region30: #{mpd_forward.5} parent=5 // pred_check_branch
      %182 = sbr.rel (%p179) target = $region32
    $region31: #{mpd_forward.5} parent=5 // pred_region
      %s183 = ssub.s32 %s9, 1
      %p184 = scmp.lt.s32.totalorder %s20, 9
      %s185 = scalar_select %p184, %s20, 9
      %s186 = smul.addr %s185, 6
      %s187 = smul.addr %s186, 4
      %s188 = scalar_lea.vmem %s0, %s187
      %p189 = pneg %p54
      %p190 = pneg %p51
      %p191 = scmp.lt.s32.totalorder %s19, 0
      %s192 = scalar_select %p191, %s19, 0
      %s193 = smul.addr %s192, 4
      %s194 = scalar_lea.vmem %s1, %s193
      %p195 = pneg %p80
      %p196 = pneg %p77
      %p197 = scmp.lt.s32.totalorder %s19, 0
      %s198 = scalar_select %p197, %s19, 0
      %s199 = smul.addr %s198, 8
      %s200 = scalar_lea.vmem %s2, %s199
      %p201 = pneg %p106
      %p202 = pneg %p103
      %p203 = pneg %p136
      %p204 = pneg %p133
      %s205 = smul.u32 5, %s21
      %p206 = scmp.lt.s32.totalorder %s20, 9
      %s207 = scalar_select %p206, %s20, 9
      %p208 = scmp.lt.s32.totalorder %s205, 4
      %s209 = scalar_select %p208, %s205, 4
      %p210 = scmp.lt.s32.totalorder %s19, 0
      %s211 = scalar_select %p210, %s19, 0
      %s212 = sadd.s32 %s211, %s209
      %s213 = smul.addr %s207, 5
      %s214 = sadd.s32 %s212, %s213
      %s215 = smul.addr %s214, 4
      %s216 = scalar_lea.vmem %s3, %s215
      %p217 = scmp.lt.s32.totalorder %s20, 9
      %s218 = scalar_select %p217, %s20, 9
      %s219 = smul.addr %s218, 6
      %s220 = smul.addr %s219, 4
      %s221 = scalar_lea.vmem %s0, %s220
      %p222 = scmp.lt.s32.totalorder %s19, 0
      %s223 = scalar_select %p222, %s19, 0
      %s224 = smul.addr %s223, 4
      %s225 = scalar_lea.vmem %s1, %s224
      %p226 = scmp.lt.s32.totalorder %s19, 0
      %s227 = scalar_select %p226, %s19, 0
      %s228 = smul.addr %s227, 8
      %s229 = scalar_lea.vmem %s2, %s228
      %s230 = smul.u32 5, %s21
      %p231 = scmp.lt.s32.totalorder %s20, 9
      %s232 = scalar_select %p231, %s20, 9
      %p233 = scmp.lt.s32.totalorder %s230, 4
      %s234 = scalar_select %p233, %s230, 4
      %p235 = scmp.lt.s32.totalorder %s19, 0
      %s236 = scalar_select %p235, %s19, 0
      %s237 = sadd.s32 %s236, %s234
      %s238 = smul.addr %s232, 5
      %s239 = sadd.s32 %s237, %s238
      %s240 = smul.addr %s239, 4
      %s241 = scalar_lea.vmem %s3, %s240
      %s242 = smul.u32 5, %s21
      %v244 = vld [vmem:[%s221] sm:$0xf]
      %v245 = vld [vmem:[%s221 + $0x4] sm:$0xf]
      %v246 = vld [vmem:[%s221 + $0x8] sm:$0xf]
      %v247 = vld [vmem:[%s221 + $0xc] sm:$0xf]
      %v248 = vld [vmem:[%s221 + $0x10] sm:$0xf]
      %v249 = vld [vmem:[%s225] sm:$0xf]
      %v250 = vld [vmem:[%s225 + $0x4] sm:$0xf]
      %v251 = vld [vmem:[%s225 + $0x8] sm:$0xf]
      %v252 = vld [vmem:[%s221 + $0x14] sm:$0x1]
      %s253 = scalar_lea.vmem %s225, 12
      %v254 = vld [vmem:[%s253] sm:$0xf]
      %v255 = vld [vmem:[%s253 + $0x4] sm:$0xf]
      %v256 = vld [vmem:[%s253 + $0x8] sm:$0xf]
      %v263 = vunpack.c.l.b16 %v244
      %v264 = vunpack.c.l.b16 %v245
      %v265 = vunpack.c.l.b16 %v246
      %v266 = vunpack.c.l.b16 %v247
      %v267 = vunpack.c.l.b16 %v248
      %v268 = vunpack.c.l.b16 %v252
      %v269 = vpack.c.b16 %v264, %v263
      %v270 = vpack.c.b16 %v266, %v265
      %v271 = vpack.c.b16 %v268, %v267
      %vm272 = vsmask.f32 7424
      %v274 = vshrl.u32 %v269, 16
      %v276 = vshll.u32 %v269, 16
      %v278 = vrot.slane %v276, 1
      %v279 = vor.u32 %v274, %v278
      %v281 = vshll.u32 %v270, 16
      %v283 = vrot.slane %v281, 1
      %v284 = vsel %vm272, %v279, %v283
      %v285 = vshrl.u32 %v270, 16
      %v287 = vor.u32 %v285, %v283
      %v289 = vshll.u32 %v271, 16
      %v291 = vrot.slane %v289, 1
      %v292 = vsel %vm272, %v287, %v291
      %v293 = vshrl.u32 %v271, 16
      %v295 = vor.u32 %v293, %v291
      %v299 = vunpack.c.l.b16 %v254
      %v300 = vunpack.c.l.b16 %v255
      %v301 = vunpack.c.l.b16 %v256
      %v302 = vpack.c.b16 %v300, %v299
      %v303 = vpack.c.b16 %v301, %v301
      %vm305 = vcmask 195584
      %v307 = vsel %vm305, %v284, 0
      %v310 = vsel %vm305, %v292, 0
      %v313 = vsel %vm305, %v295, 0
      %vm315 = vcmask 1043456
      %v317 = vsel %vm315, %v303, 0
      %319 = vmatprep.subr.bf16.mxu0 0
      %320 = vmatpush1.bf16.msra.mxu0 0
      %321 = vmatprep.subr.bf16.mxu0 0
      %322 = vmatpush1.bf16.msra.mxu0 0
      %323 = vmatprep.subr.bf16.mxu0 0
      %324 = vmatpush1.bf16.msra.mxu0 0
      %325 = vmatprep.subr.bf16.mxu0 0
      %326 = vmatpush1.bf16.msra.mxu0 0
      %327 = vmatprep.subr.bf16.mxu0 0
      %328 = vmatpush1.bf16.msra.mxu0 0
      %329 = vmatprep.subr.bf16.mxu0 0
      %330 = vmatpush1.bf16.msra.mxu0 0
      %331 = vmatprep.subr.bf16.mxu0 0
      %332 = vmatpush1.bf16.msra.mxu0 %v317
      %333 = vmatprep.subr.bf16.mxu0 0
      %334 = vmatpush1.bf16.msra.mxu0 %v302
      %335 = vmatprep.subr.bf16.mxu0 0
      %336 = vmatpush2.bf16.msra.mxu0 0
      %337 = vmatprep.subr.bf16.mxu0 0
      %338 = vmatpush2.bf16.msra.mxu0 0
      %339 = vmatprep.subr.bf16.mxu0 0
      %340 = vmatpush2.bf16.msra.mxu0 0
      %341 = vmatprep.subr.bf16.mxu0 0
      %342 = vmatpush2.bf16.msra.mxu0 0
      %343 = vmatprep.subr.bf16.mxu0 0
      %344 = vmatpush2.bf16.msra.mxu0 0
      %345 = vmatprep.subr.bf16.mxu0 0
      %346 = vmatpush2.bf16.msra.mxu0 0
      %347 = vmatprep.subr.bf16.mxu0 0
      %348 = vmatpush2.bf16.msra.mxu0 0
      %349 = vmatprep.subr.bf16.mxu0 0
      %350 = vmatpush2.bf16.msra.mxu0 0
      %351 = vmatprep.mubr.bf16.mxu0 0
      %352 = vmatmul.mubr.bf16.gmra.mxu0 %v307
      %v353 = vpop.f32.mrf.mxu0
      %v354 = vadd.f32 0.0, %v353
      %v355 = vpop.f32.mrf.mxu0
      %v356 = vpop.f32.mrf.mxu0
      %v357 = vadd.f32 0.0, %v356
      %v358 = vpop.f32.mrf.mxu0
      %359 = vmatprep.mubr.bf16.mxu0 0
      %360 = vmatmul.mubr.bf16.gmra.mxu0 %v310
      %v361 = vpop.f32.mrf.mxu0
      %v362 = vadd.f32 0.0, %v361
      %v363 = vpop.f32.mrf.mxu0
      %v364 = vpop.f32.mrf.mxu0
      %v365 = vadd.f32 0.0, %v364
      %v366 = vpop.f32.mrf.mxu0
      %367 = vmatprep.mubr.bf16.mxu0 0
      %368 = vmatmul.mubr.bf16.gmra.mxu0 %v313
      %v369 = vpop.f32.mrf.mxu0
      %v370 = vadd.f32 0.0, %v369
      %v371 = vpop.f32.mrf.mxu0
      %v372 = vpop.f32.mrf.mxu0
      %v373 = vpop.f32.mrf.mxu0
      %374 = vdwg.mxu0
      %v375 = vpack.c.b16 %v267, %v267
      %v379 = vunpack.c.l.b16 %v249
      %v380 = vunpack.c.l.b16 %v250
      %v381 = vunpack.c.l.b16 %v251
      %v382 = vpack.c.b16 %v380, %v379
      %v383 = vpack.c.b16 %v381, %v381
      %v385 = vsel %vm305, %v269, 0
      %v387 = vsel %vm305, %v270, 0
      %v390 = vsel %vm305, %v375, 0
      %v393 = vsel %vm315, %v383, 0
      %395 = vmatprep.subr.bf16.mxu0 0
      %396 = vmatpush1.bf16.msra.mxu0 0
      %397 = vmatprep.subr.bf16.mxu0 0
      %398 = vmatpush1.bf16.msra.mxu0 0
      %399 = vmatprep.subr.bf16.mxu0 0
      %400 = vmatpush1.bf16.msra.mxu0 0
      %401 = vmatprep.subr.bf16.mxu0 0
      %402 = vmatpush1.bf16.msra.mxu0 0
      %403 = vmatprep.subr.bf16.mxu0 0
      %404 = vmatpush1.bf16.msra.mxu0 0
      %405 = vmatprep.subr.bf16.mxu0 0
      %406 = vmatpush1.bf16.msra.mxu0 0
      %407 = vmatprep.subr.bf16.mxu0 0
      %408 = vmatpush1.bf16.msra.mxu0 %v393
      %409 = vmatprep.subr.bf16.mxu0 0
      %410 = vmatpush1.bf16.msra.mxu0 %v382
      %411 = vmatprep.subr.bf16.mxu0 0
      %412 = vmatpush2.bf16.msra.mxu0 0
      %413 = vmatprep.subr.bf16.mxu0 0
      %414 = vmatpush2.bf16.msra.mxu0 0
      %415 = vmatprep.subr.bf16.mxu0 0
      %416 = vmatpush2.bf16.msra.mxu0 0
      %417 = vmatprep.subr.bf16.mxu0 0
      %418 = vmatpush2.bf16.msra.mxu0 0
      %419 = vmatprep.subr.bf16.mxu0 0
      %420 = vmatpush2.bf16.msra.mxu0 0
      %421 = vmatprep.subr.bf16.mxu0 0
      %422 = vmatpush2.bf16.msra.mxu0 0
      %423 = vmatprep.subr.bf16.mxu0 0
      %424 = vmatpush2.bf16.msra.mxu0 0
      %425 = vmatprep.subr.bf16.mxu0 0
      %426 = vmatpush2.bf16.msra.mxu0 0
      %427 = vmatprep.mubr.bf16.mxu0 0
      %428 = vmatmul.mubr.bf16.gmra.mxu0 %v385
      %v429 = vpop.f32.mrf.mxu0
      %v430 = vadd.f32 %v354, %v429
      %v431 = vpop.f32.mrf.mxu0
      %v432 = vpop.f32.mrf.mxu0
      %v433 = vadd.f32 %v357, %v432
      %v434 = vpop.f32.mrf.mxu0
      %435 = vmatprep.mubr.bf16.mxu0 0
      %436 = vmatmul.mubr.bf16.gmra.mxu0 %v387
      %v437 = vpop.f32.mrf.mxu0
      %v438 = vadd.f32 %v362, %v437
      %v439 = vpop.f32.mrf.mxu0
      %v440 = vpop.f32.mrf.mxu0
      %v441 = vadd.f32 %v365, %v440
      %v442 = vpop.f32.mrf.mxu0
      %443 = vmatprep.mubr.bf16.mxu0 0
      %444 = vmatmul.mubr.bf16.gmra.mxu0 %v390
      %v445 = vpop.f32.mrf.mxu0
      %v446 = vadd.f32 %v370, %v445
      %v447 = vpop.f32.mrf.mxu0
      %v448 = vpop.f32.mrf.mxu0
      %v449 = vpop.f32.mrf.mxu0
      %450 = vdwg.mxu0
      %v451 = vld [vmem:[%s229] sm:$0x1]
      %v452 = vlaneseq
      %v453 = vshrl.u32 %v452, 7
      %v454 = vsub.s32 0, %v453
      %v455 = vrot.slane %v451, %v454
      %v456 = vadd.f32 %v430, %v455
      %v457 = vadd.f32 %v433, %v455
      %v458 = vadd.f32 %v438, %v455
      %v459 = vadd.f32 %v441, %v455
      %v460 = vadd.f32 %v446, %v455
      %vm461 = vcmp.ge.f32.partialorder %v456, 0.0
      %vm462 = vcmp.ge.f32.partialorder %v457, 0.0
      %vm463 = vcmp.ge.f32.partialorder %v458, 0.0
      %vm464 = vcmp.ge.f32.partialorder %v459, 0.0
      %vm465 = vcmp.ge.f32.partialorder %v460, 0.0
      %v466 = vmul.f32 %v456, 0.1
      %v467 = vmul.f32 %v457, 0.1
      %v468 = vmul.f32 %v458, 0.1
      %v469 = vmul.f32 %v459, 0.1
      %v470 = vmul.f32 %v460, 0.1
      %v471 = vsel %vm461, %v456, %v466
      %v472 = vsel %vm462, %v457, %v467
      %v473 = vsel %vm463, %v458, %v468
      %v474 = vsel %vm464, %v459, %v469
      %v475 = vsel %vm465, %v460, %v470
      %v476 = vpack.c.bf16 %v472, %v471
      %v477 = vpack.c.bf16 %v474, %v473
      %v478 = vpack.c.bf16 %v475, %v475
      %v482 = vunpack.c.l.b16 %v476
      %v483 = vunpack.c.h.b16 %v476
      %v484 = vunpack.c.l.b16 %v477
      %v485 = vunpack.c.h.b16 %v477
      %v486 = vunpack.c.l.b16 %v478
      %v487 = vpack.c.b16 %v482, %v482
      %v488 = vpack.c.b16 %v483, %v483
      %v489 = vpack.c.b16 %v484, %v484
      %v490 = vpack.c.b16 %v485, %v485
      %v491 = vpack.c.b16 %v486, %v486
      %497 = vst [vmem:[%s241] sm:$0xf] %v487
      %498 = vst [vmem:[%s241 + $0x4] sm:$0xf] %v488
      %499 = vst [vmem:[%s241 + $0x8] sm:$0xf] %v489
      %500 = vst [vmem:[%s241 + $0xc] sm:$0xf] %v490
      %501 = vst [vmem:[%s241 + $0x10] sm:$0xf] %v491
      %s502 = smul.u32 5, %s21
      %p503 = scmp.lt.s32.totalorder %s20, 9
      %s504 = scalar_select %p503, %s20, 9
      %p505 = scmp.lt.s32.totalorder %s502, 4
      %s506 = scalar_select %p505, %s502, 4
      %p507 = scmp.lt.s32.totalorder %s19, 0
      %s508 = scalar_select %p507, %s19, 0
      %s509 = sadd.s32 %s508, %s506
      %s510 = smul.addr %s504, 5
      %s511 = sadd.s32 %s509, %s510
      %s512 = smul.addr %s511, 4
      %s513 = scalar_lea.vmem %s3, %s512
      // Predicated region
      $region33: #{mpd_forward.5} parent=31 // pred_check
        %p514 = pneg %p133
      $region34: #{mpd_forward.5} parent=31 // pred_check_branch
        %516 = sbr.rel (%p514) target = $region36
      $region35: #{mpd_forward.5} parent=31 // pred_region
        %s517 = smul.u32 5, %s21
      $region36: #{mpd_forward.5} parent=31 // pred_fallthru
        _
    $region32: #{mpd_forward.5} parent=5 // pred_fallthru
      _
    %p518 = scmp.le.s32.totalorder 2, %s9
    // Predicated region
    $region37: #{mpd_forward.5} parent=5 // pred_check
      %p519 = pneg %p518
    $region38: #{mpd_forward.5} parent=5 // pred_check_branch
      %521 = sbr.rel (%p519) target = $region40
    $region39: #{mpd_forward.5} parent=5 // pred_region
      %s522 = ssub.s32 %s9, 2
      // Predicated region
      $region41: #{mpd_forward.5} parent=39 // pred_check
        %p523 = pneg %p139
      $region42: #{mpd_forward.5} parent=39 // pred_check_branch
        %525 = sbr.rel (%p523) target = $region44
      $region43: #{mpd_forward.5} parent=39 // pred_region
        %s526 = smul.u32 5, %s24
        %p527 = scmp.lt.s32.totalorder %s23, 9
        %s528 = scalar_select %p527, %s23, 9
        %p529 = scmp.lt.s32.totalorder %s526, 4
        %s530 = scalar_select %p529, %s526, 4
        %p531 = scmp.lt.s32.totalorder %s22, 0
        %s532 = scalar_select %p531, %s22, 0
        %s533 = sadd.s32 %s532, %s530
        %s534 = smul.addr %s528, 5
        %s535 = sadd.s32 %s533, %s534
        %s536 = smul.addr %s535, 4
        %s537 = scalar_lea.vmem %s3, %s536
      $region44: #{mpd_forward.5} parent=39 // pred_fallthru
        _
    $region40: #{mpd_forward.5} parent=5 // pred_fallthru
      _
  $region6: #{mpd_forward.5} parent=0 // loop_footer
    %s13 = sadd.s32 1, %s9
  $region7: #{mpd_forward.5} parent=0 // loop_footer_branch
    %8 = sbr.rel target = $region3
  $region8: #{mpd_forward.5} parent=0 // loop_exit
    _

// kernel: mpd_forward.6
$region0: #{mpd_forward.6}
  #allocation0 [shape = 'u32[]', space=smem, size = 0x4, offset = 0x4, fixed_abs, tag = 'smem constant byte address 0x4 - core index']
  #allocation1 [shape = 'u32[144,128]{1,0:T(1,128)}', space=vmem, size = 0x12000, scoped, tag = 'internal scratch']
  %s0 = inlined_call_operand.vmem [shape: bf16[10,24,384], index: 0, kind: input, shape index: {}]
  %s1 = inlined_call_operand.vmem [shape: bf16[2,384,128], index: 1, kind: input, shape index: {}]
  %s2 = inlined_call_operand.vmem [shape: f32[8,128], index: 2, kind: input, shape index: {}]
  %s3 = inlined_call_operand.vmem [shape: bf16[10,16,128], index: 3, kind: output, shape index: {}]
  %s4 = sld [smem:[#allocation0]]
  $region45: #{mpd_forward.6} parent=0
    _
  %s6 = ssub.s32 1, %s4
  %s7 = scalar_select 0, %s6, %s4
  loop: start=0, step=1, limit=12
  $region2: #{mpd_forward.6} parent=0 // loop_pre_header
    _
  $region3: #{mpd_forward.6} parent=0 // loop_header
    %s9 = sphi 0, %s13
    %p10 = scmp.ge.s32.totalorder %s9, 12
    %s16 = sphi 0, %s35
    %s17 = sphi 0, %s31
    %s18 = sphi 0, %s27
    %s19 = sphi 0, %s16
    %s20 = sphi 0, %s17
    %s21 = sphi 0, %s18
    %s22 = sphi 0, %s19
    %s23 = sphi 0, %s20
    %s24 = sphi 0, %s21
    %s38 = sphi 0, %s40
    %s41 = sphi 0, %s38
    %s42 = sphi 0, %s41
    %s58 = sphi 0, %s42
    %s64 = sphi 0, %s66
    %s67 = sphi 0, %s64
    %s68 = sphi 0, %s67
    %s84 = sphi 0, %s68
    %s90 = sphi 0, %s92
    %s93 = sphi 0, %s90
    %s94 = sphi 0, %s93
    %s110 = sphi 0, %s94
    %s120 = sphi 0, %s122
    %s123 = sphi 0, %s120
    %s124 = sphi 0, %s123
    %s140 = sphi 0, %s124
  $region4: #{mpd_forward.6} parent=0 // loop_header_branch
    %12 = sbr.rel (%p10) target = $region8
  $region5: #{mpd_forward.6} parent=0 // loop_body
    %s14 = ssub.s32 %s9, 1
    %s15 = ssub.s32 %s9, 2
    %s25 = sadd.s32 1, %s18
    %p26 = scmp.ge.s32.totalorder %s25, 1
    %s27 = scalar_select %p26, 0, %s25
    %s28 = sadd.s32 1, %s17
    %s29 = scalar_select %p26, %s28, %s17
    %p30 = scmp.ge.s32.totalorder %s29, 10
    %s31 = scalar_select %p30, 0, %s29
    %s32 = sadd.s32 1, %s16
    %s33 = scalar_select %p30, %s32, %s16
    %p34 = scmp.ge.s32.totalorder %s33, 1
    %s35 = scalar_select %p34, 0, %s33
    %s36 = ssub.s32 %s17, %s31
    %p37 = scmp.eq.s32.totalorder %s36, 0
    %s39 = sadd.s32 %s38, 1
    %s40 = scalar_select %p37, %s38, %s39
    %p43 = pneg %p37
    %p44 = scmp.eq.s32.totalorder %s9, 9
    %p45 = por %p43, %p44
    %p46 = scmp.ne.s32.totalorder %s38, %s41
    %p47 = scmp.eq.s32.totalorder %s9, 0
    %p48 = por %p46, %p47
    %p49 = scmp.ne.s32.totalorder %s38, %s41
    %p50 = scmp.eq.s32.totalorder %s14, 9
    %p51 = por %p49, %p50
    %p52 = scmp.ne.s32.totalorder %s41, %s42
    %p53 = scmp.eq.s32.totalorder %s14, 0
    %p54 = por %p52, %p53
    %p55 = scmp.ne.s32.totalorder %s41, %s42
    %p56 = scmp.eq.s32.totalorder %s15, 9
    %p57 = por %p55, %p56
    %p59 = scmp.ne.s32.totalorder %s42, %s58
    %p60 = scmp.eq.s32.totalorder %s15, 0
    %p61 = por %p59, %p60
    %s62 = ssub.s32 %s16, %s35
    %p63 = scmp.eq.s32.totalorder %s62, 0
    %s65 = sadd.s32 %s64, 1
    %s66 = scalar_select %p63, %s64, %s65
    %p69 = pneg %p63
    %p70 = scmp.eq.s32.totalorder %s9, 9
    %p71 = por %p69, %p70
    %p72 = scmp.ne.s32.totalorder %s64, %s67
    %p73 = scmp.eq.s32.totalorder %s9, 0
    %p74 = por %p72, %p73
    %p75 = scmp.ne.s32.totalorder %s64, %s67
    %p76 = scmp.eq.s32.totalorder %s14, 9
    %p77 = por %p75, %p76
    %p78 = scmp.ne.s32.totalorder %s67, %s68
    %p79 = scmp.eq.s32.totalorder %s14, 0
    %p80 = por %p78, %p79
    %p81 = scmp.ne.s32.totalorder %s67, %s68
    %p82 = scmp.eq.s32.totalorder %s15, 9
    %p83 = por %p81, %p82
    %p85 = scmp.ne.s32.totalorder %s68, %s84
    %p86 = scmp.eq.s32.totalorder %s15, 0
    %p87 = por %p85, %p86
    %s88 = ssub.s32 %s16, %s35
    %p89 = scmp.eq.s32.totalorder %s88, 0
    %s91 = sadd.s32 %s90, 1
    %s92 = scalar_select %p89, %s90, %s91
    %p95 = pneg %p89
    %p96 = scmp.eq.s32.totalorder %s9, 9
    %p97 = por %p95, %p96
    %p98 = scmp.ne.s32.totalorder %s90, %s93
    %p99 = scmp.eq.s32.totalorder %s9, 0
    %p100 = por %p98, %p99
    %p101 = scmp.ne.s32.totalorder %s90, %s93
    %p102 = scmp.eq.s32.totalorder %s14, 9
    %p103 = por %p101, %p102
    %p104 = scmp.ne.s32.totalorder %s93, %s94
    %p105 = scmp.eq.s32.totalorder %s14, 0
    %p106 = por %p104, %p105
    %p107 = scmp.ne.s32.totalorder %s93, %s94
    %p108 = scmp.eq.s32.totalorder %s15, 9
    %p109 = por %p107, %p108
    %p111 = scmp.ne.s32.totalorder %s94, %s110
    %p112 = scmp.eq.s32.totalorder %s15, 0
    %p113 = por %p111, %p112
    %s114 = ssub.s32 %s17, %s31
    %s115 = ssub.s32 %s18, %s27
    %s116 = sor.u32 %s114, %s115
    %s117 = ssub.s32 %s16, %s35
    %s118 = sor.u32 %s116, %s117
    %p119 = scmp.eq.s32.totalorder %s118, 0
    %s121 = sadd.s32 %s120, 1
    %s122 = scalar_select %p119, %s120, %s121
    %p125 = pneg %p119
    %p126 = scmp.eq.s32.totalorder %s9, 9
    %p127 = por %p125, %p126
    %p128 = scmp.ne.s32.totalorder %s120, %s123
    %p129 = scmp.eq.s32.totalorder %s9, 0
    %p130 = por %p128, %p129
    %p131 = scmp.ne.s32.totalorder %s120, %s123
    %p132 = scmp.eq.s32.totalorder %s14, 9
    %p133 = por %p131, %p132
    %p134 = scmp.ne.s32.totalorder %s123, %s124
    %p135 = scmp.eq.s32.totalorder %s14, 0
    %p136 = por %p134, %p135
    %p137 = scmp.ne.s32.totalorder %s123, %s124
    %p138 = scmp.eq.s32.totalorder %s15, 9
    %p139 = por %p137, %p138
    %p141 = scmp.ne.s32.totalorder %s124, %s140
    %p142 = scmp.eq.s32.totalorder %s15, 0
    %p143 = por %p141, %p142
    %p144 = scmp.le.s32.totalorder 1, %s9
    %p145 = scmp.lt.s32.totalorder %s9, 11
    %p146 = pnand %p144, %p145
    %p147 = pneg %p146
    // Predicated region
    $region9: #{mpd_forward.6} parent=5 // pred_check
      _
    $region10: #{mpd_forward.6} parent=5 // pred_check_branch
      %149 = sbr.rel (%p146) target = $region12
    $region11: #{mpd_forward.6} parent=5 // pred_region
      %s150 = ssub.s32 %s9, 1
      // Predicated region
      $region13: #{mpd_forward.6} parent=11 // pred_check
        %p151 = pneg %p80
      $region14: #{mpd_forward.6} parent=11 // pred_check_branch
        %153 = sbr.rel (%p151) target = $region16
      $region15: #{mpd_forward.6} parent=11 // pred_region
        %p154 = scmp.lt.s32.totalorder %s19, 0
        %s155 = scalar_select %p154, %s19, 0
        %s156 = smul.addr %s155, 4
        %s157 = scalar_lea.vmem %s1, %s156
      $region16: #{mpd_forward.6} parent=11 // pred_fallthru
        _
      // Predicated region
      $region17: #{mpd_forward.6} parent=11 // pred_check
        %p158 = pneg %p106
      $region18: #{mpd_forward.6} parent=11 // pred_check_branch
        %160 = sbr.rel (%p158) target = $region20
      $region19: #{mpd_forward.6} parent=11 // pred_region
        %p161 = scmp.lt.s32.totalorder %s19, 0
        %s162 = scalar_select %p161, %s19, 0
        %s163 = smul.addr %s162, 8
        %s164 = scalar_lea.vmem %s2, %s163
      $region20: #{mpd_forward.6} parent=11 // pred_fallthru
        _
    $region12: #{mpd_forward.6} parent=5 // pred_fallthru
      _
    %p165 = scmp.lt.s32.totalorder %s9, 10
    // Predicated region
    $region21: #{mpd_forward.6} parent=5 // pred_check
      %p166 = pneg %p165
    $region22: #{mpd_forward.6} parent=5 // pred_check_branch
      %168 = sbr.rel (%p166) target = $region24
    $region23: #{mpd_forward.6} parent=5 // pred_region
      // Predicated region
      $region25: #{mpd_forward.6} parent=23 // pred_check
        %p169 = pneg %p48
      $region26: #{mpd_forward.6} parent=23 // pred_check_branch
        %171 = sbr.rel (%p169) target = $region28
      $region27: #{mpd_forward.6} parent=23 // pred_region
        %p172 = scmp.lt.s32.totalorder %s17, 9
        %s173 = scalar_select %p172, %s17, 9
        %s174 = smul.addr %s173, 9
        %s175 = smul.addr %s174, 4
        %s176 = scalar_lea.vmem %s0, %s175
      $region28: #{mpd_forward.6} parent=23 // pred_fallthru
        _
    $region24: #{mpd_forward.6} parent=5 // pred_fallthru
      _
    %p177 = scmp.le.s32.totalorder 1, %s9
    %p178 = scmp.lt.s32.totalorder %s9, 11
    %p179 = pnand %p177, %p178
    %p180 = pneg %p179
    // Predicated region
    $region29: #{mpd_forward.6} parent=5 // pred_check
      _
    $region30: #{mpd_forward.6} parent=5 // pred_check_branch
      %182 = sbr.rel (%p179) target = $region32
    $region31: #{mpd_forward.6} parent=5 // pred_region
      %s183 = ssub.s32 %s9, 1
      %p184 = scmp.lt.s32.totalorder %s20, 9
      %s185 = scalar_select %p184, %s20, 9
      %s186 = smul.addr %s185, 9
      %s187 = smul.addr %s186, 4
      %s188 = scalar_lea.vmem %s0, %s187
      %p189 = pneg %p54
      %p190 = pneg %p51
      %p191 = scmp.lt.s32.totalorder %s19, 0
      %s192 = scalar_select %p191, %s19, 0
      %s193 = smul.addr %s192, 4
      %s194 = scalar_lea.vmem %s1, %s193
      %p195 = pneg %p80
      %p196 = pneg %p77
      %p197 = scmp.lt.s32.totalorder %s19, 0
      %s198 = scalar_select %p197, %s19, 0
      %s199 = smul.addr %s198, 8
      %s200 = scalar_lea.vmem %s2, %s199
      %p201 = pneg %p106
      %p202 = pneg %p103
      %p203 = pneg %p136
      %p204 = pneg %p133
      %s205 = smul.u32 2, %s21
      %p206 = scmp.lt.s32.totalorder %s20, 9
      %s207 = scalar_select %p206, %s20, 9
      %p208 = scmp.lt.s32.totalorder %s205, 1
      %s209 = scalar_select %p208, %s205, 1
      %p210 = scmp.lt.s32.totalorder %s19, 0
      %s211 = scalar_select %p210, %s19, 0
      %s212 = sadd.s32 %s211, %s209
      %s213 = smul.addr %s207, 2
      %s214 = sadd.s32 %s212, %s213
      %s215 = smul.addr %s214, 4
      %s216 = scalar_lea.vmem %s3, %s215
      %p217 = scmp.lt.s32.totalorder %s20, 9
      %s218 = scalar_select %p217, %s20, 9
      %s219 = smul.addr %s218, 9
      %s220 = smul.addr %s219, 4
      %s221 = scalar_lea.vmem %s0, %s220
      %p222 = scmp.lt.s32.totalorder %s19, 0
      %s223 = scalar_select %p222, %s19, 0
      %s224 = smul.addr %s223, 4
      %s225 = scalar_lea.vmem %s1, %s224
      %p226 = scmp.lt.s32.totalorder %s19, 0
      %s227 = scalar_select %p226, %s19, 0
      %s228 = smul.addr %s227, 8
      %s229 = scalar_lea.vmem %s2, %s228
      %s230 = smul.u32 2, %s21
      %p231 = scmp.lt.s32.totalorder %s20, 9
      %s232 = scalar_select %p231, %s20, 9
      %p233 = scmp.lt.s32.totalorder %s230, 1
      %s234 = scalar_select %p233, %s230, 1
      %p235 = scmp.lt.s32.totalorder %s19, 0
      %s236 = scalar_select %p235, %s19, 0
      %s237 = sadd.s32 %s236, %s234
      %s238 = smul.addr %s232, 2
      %s239 = sadd.s32 %s237, %s238
      %s240 = smul.addr %s239, 4
      %s241 = scalar_lea.vmem %s3, %s240
      %s242 = smul.u32 2, %s21
      %v244 = vld [vmem:[%s221] sm:$0xff]
      %v245 = vld [vmem:[%s221 + $0x8] sm:$0xf]
      %v246 = vld [vmem:[%s221 + $0xc] sm:$0xff]
      %v247 = vld [vmem:[%s221 + $0x14] sm:$0xf]
      %v248 = vld [vmem:[%s225] sm:$0xf]
      %v249 = vld [vmem:[%s225 + $0x4] sm:$0xf]
      %v250 = vld [vmem:[%s225 + $0x8] sm:$0xf]
      %v251 = vld [vmem:[%s225 + $0xc] sm:$0xf]
      %v252 = vld [vmem:[%s225 + $0x10] sm:$0xf]
      %v253 = vld [vmem:[%s225 + $0x14] sm:$0xf]
      %v254 = vld [vmem:[%s225 + $0x18] sm:$0xf]
      %v255 = vld [vmem:[%s225 + $0x1c] sm:$0xf]
      %v256 = vld [vmem:[%s225 + $0x20] sm:$0xf]
      %v257 = vld [vmem:[%s225 + $0x24] sm:$0xf]
      %v258 = vld [vmem:[%s225 + $0x28] sm:$0xf]
      %v259 = vld [vmem:[%s225 + $0x2c] sm:$0xf]
      %v260 = vld [vmem:[%s225 + $0x30] sm:$0xf]
      %v261 = vld [vmem:[%s225 + $0x34] sm:$0xf]
      %v262 = vld [vmem:[%s225 + $0x38] sm:$0xf]
      %v263 = vld [vmem:[%s225 + $0x3c] sm:$0xf]
      %v264 = vld [vmem:[%s225 + $0x40] sm:$0xf]
      %v265 = vld [vmem:[%s225 + $0x44] sm:$0xf]
      %v266 = vld [vmem:[%s225 + $0x48] sm:$0xf]
      %v267 = vld [vmem:[%s225 + $0x4c] sm:$0xf]
      %v268 = vld [vmem:[%s225 + $0x50] sm:$0xf]
      %v269 = vld [vmem:[%s225 + $0x54] sm:$0xf]
      %v270 = vld [vmem:[%s225 + $0x58] sm:$0xf]
      %v271 = vld [vmem:[%s225 + $0x5c] sm:$0xf]
      %v272 = vld [vmem:[%s225 + $0x60] sm:$0xf]
      %v273 = vld [vmem:[%s225 + $0x64] sm:$0xf]
      %v274 = vld [vmem:[%s225 + $0x68] sm:$0xf]
      %v275 = vld [vmem:[%s225 + $0x6c] sm:$0xf]
      %v276 = vld [vmem:[%s225 + $0x70] sm:$0xf]
      %v277 = vld [vmem:[%s225 + $0x74] sm:$0xf]
      %v278 = vld [vmem:[%s225 + $0x78] sm:$0xf]
      %v279 = vld [vmem:[%s225 + $0x7c] sm:$0xf]
      %v280 = vld [vmem:[%s225 + $0x80] sm:$0xf]
      %v281 = vld [vmem:[%s225 + $0x84] sm:$0xf]
      %v282 = vld [vmem:[%s225 + $0x88] sm:$0xf]
      %v283 = vld [vmem:[%s225 + $0x8c] sm:$0xf]
      %v284 = vld [vmem:[%s225 + $0x90] sm:$0xf]
      %v285 = vld [vmem:[%s225 + $0x94] sm:$0xf]
      %v286 = vld [vmem:[%s225 + $0x98] sm:$0xf]
      %v287 = vld [vmem:[%s225 + $0x9c] sm:$0xf]
      %v288 = vld [vmem:[%s225 + $0xa0] sm:$0xf]
      %v289 = vld [vmem:[%s225 + $0xa4] sm:$0xf]
      %v290 = vld [vmem:[%s225 + $0xa8] sm:$0xf]
      %v291 = vld [vmem:[%s225 + $0xac] sm:$0xf]
      %v292 = vld [vmem:[%s225 + $0xb0] sm:$0xf]
      %v293 = vld [vmem:[%s225 + $0xb4] sm:$0xf]
      %v294 = vld [vmem:[%s225 + $0xb8] sm:$0xf]
      %v295 = vld [vmem:[%s225 + $0xbc] sm:$0xf]
      %v296 = vld [vmem:[%s221] sm:$0xff]
      %v297 = vld [vmem:[%s221 + $0x8] sm:$0xf]
      %v298 = vld [vmem:[%s221 + $0xc] sm:$0xff]
      %v299 = vld [vmem:[%s221 + $0x14] sm:$0xf]
      %v300 = vld [vmem:[%s221 + $0x18] sm:$0x11]
      %v301 = vld [vmem:[%s221 + $0x20] sm:$0x1]
      %s302 = scalar_lea.vmem %s225, 192
      %v303 = vld [vmem:[%s302] sm:$0xf]
      %v304 = vld [vmem:[%s302 + $0x4] sm:$0xf]
      %v305 = vld [vmem:[%s302 + $0x8] sm:$0xf]
      %v306 = vld [vmem:[%s302 + $0xc] sm:$0xf]
      %v307 = vld [vmem:[%s302 + $0x10] sm:$0xf]
      %v308 = vld [vmem:[%s302 + $0x14] sm:$0xf]
      %v309 = vld [vmem:[%s302 + $0x18] sm:$0xf]
      %v310 = vld [vmem:[%s302 + $0x1c] sm:$0xf]
      %v311 = vld [vmem:[%s302 + $0x20] sm:$0xf]
      %v312 = vld [vmem:[%s302 + $0x24] sm:$0xf]
      %v313 = vld [vmem:[%s302 + $0x28] sm:$0xf]
      %v314 = vld [vmem:[%s302 + $0x2c] sm:$0xf]
      %v315 = vld [vmem:[%s302 + $0x30] sm:$0xf]
      %v316 = vld [vmem:[%s302 + $0x34] sm:$0xf]
      %v317 = vld [vmem:[%s302 + $0x38] sm:$0xf]
      %v318 = vld [vmem:[%s302 + $0x3c] sm:$0xf]
      %v319 = vld [vmem:[%s302 + $0x40] sm:$0xf]
      %v320 = vld [vmem:[%s302 + $0x44] sm:$0xf]
      %v321 = vld [vmem:[%s302 + $0x48] sm:$0xf]
      %v322 = vld [vmem:[%s302 + $0x4c] sm:$0xf]
      %v323 = vld [vmem:[%s302 + $0x50] sm:$0xf]
      %v324 = vld [vmem:[%s302 + $0x54] sm:$0xf]
      %v325 = vld [vmem:[%s302 + $0x58] sm:$0xf]
      %v326 = vld [vmem:[%s302 + $0x5c] sm:$0xf]
      %v327 = vld [vmem:[%s302 + $0x60] sm:$0xf]
      %v328 = vld [vmem:[%s302 + $0x64] sm:$0xf]
      %v329 = vld [vmem:[%s302 + $0x68] sm:$0xf]
      %v330 = vld [vmem:[%s302 + $0x6c] sm:$0xf]
      %v331 = vld [vmem:[%s302 + $0x70] sm:$0xf]
      %v332 = vld [vmem:[%s302 + $0x74] sm:$0xf]
      %v333 = vld [vmem:[%s302 + $0x78] sm:$0xf]
      %v334 = vld [vmem:[%s302 + $0x7c] sm:$0xf]
      %v335 = vld [vmem:[%s302 + $0x80] sm:$0xf]
      %v336 = vld [vmem:[%s302 + $0x84] sm:$0xf]
      %v337 = vld [vmem:[%s302 + $0x88] sm:$0xf]
      %v338 = vld [vmem:[%s302 + $0x8c] sm:$0xf]
      %v339 = vld [vmem:[%s302 + $0x90] sm:$0xf]
      %v340 = vld [vmem:[%s302 + $0x94] sm:$0xf]
      %v341 = vld [vmem:[%s302 + $0x98] sm:$0xf]
      %v342 = vld [vmem:[%s302 + $0x9c] sm:$0xf]
      %v343 = vld [vmem:[%s302 + $0xa0] sm:$0xf]
      %v344 = vld [vmem:[%s302 + $0xa4] sm:$0xf]
      %v345 = vld [vmem:[%s302 + $0xa8] sm:$0xf]
      %v346 = vld [vmem:[%s302 + $0xac] sm:$0xf]
      %v347 = vld [vmem:[%s302 + $0xb0] sm:$0xf]
      %v348 = vld [vmem:[%s302 + $0xb4] sm:$0xf]
      %v349 = vld [vmem:[%s302 + $0xb8] sm:$0xf]
      %v350 = vld [vmem:[%s302 + $0xbc] sm:$0xf]
      %v357 = vunpack.c.l.b16 %v296
      %v358 = vunpack.c.h.b16 %v296
      %v359 = vunpack.c.l.b16 %v297
      %v360 = vunpack.c.l.b16 %v298
      %v361 = vunpack.c.h.b16 %v298
      %v362 = vunpack.c.l.b16 %v299
      %v363 = vunpack.c.l.b16 %v300
      %v364 = vunpack.c.h.b16 %v300
      %v365 = vunpack.c.l.b16 %v301
      %v366 = vpack.c.b16 %v360, %v357
      %v367 = vpack.c.b16 %v361, %v358
      %v368 = vpack.c.b16 %v362, %v359
      %v369 = vpack.c.b16 %v363, %v363
      %v370 = vpack.c.b16 %v364, %v364
      %v371 = vpack.c.b16 %v365, %v365
      %vm372 = vsmask.f32 7424
      %v374 = vshrl.u32 %v366, 16
      %v376 = vshll.u32 %v366, 16
      %v378 = vrot.slane %v376, 1
      %v379 = vor.u32 %v374, %v378
      %v381 = vshll.u32 %v369, 16
      %v383 = vrot.slane %v381, 1
      %v384 = vsel %vm372, %v379, %v383
      %v386 = vshrl.u32 %v367, 16
      %v388 = vshll.u32 %v367, 16
      %v390 = vrot.slane %v388, 1
      %v391 = vor.u32 %v386, %v390
      %v393 = vshll.u32 %v370, 16
      %v395 = vrot.slane %v393, 1
      %v396 = vsel %vm372, %v391, %v395
      %v398 = vshrl.u32 %v368, 16
      %v400 = vshll.u32 %v368, 16
      %v402 = vrot.slane %v400, 1
      %v403 = vor.u32 %v398, %v402
      %v405 = vshll.u32 %v371, 16
      %v407 = vrot.slane %v405, 1
      %v408 = vsel %vm372, %v403, %v407
      %v460 = vunpack.c.l.b16 %v303
      %v461 = vunpack.c.l.b16 %v304
      %v462 = vunpack.c.l.b16 %v305
      %v463 = vunpack.c.l.b16 %v306
      %v464 = vunpack.c.l.b16 %v307
      %v465 = vunpack.c.l.b16 %v308
      %v466 = vunpack.c.l.b16 %v309
      %v467 = vunpack.c.l.b16 %v310
      %v468 = vunpack.c.l.b16 %v311
      %v469 = vunpack.c.l.b16 %v312
      %v470 = vunpack.c.l.b16 %v313
      %v471 = vunpack.c.l.b16 %v314
      %v472 = vunpack.c.l.b16 %v315
      %v473 = vunpack.c.l.b16 %v316
      %v474 = vunpack.c.l.b16 %v317
      %v475 = vunpack.c.l.b16 %v318
      %v476 = vunpack.c.l.b16 %v319
      %v477 = vunpack.c.l.b16 %v320
      %v478 = vunpack.c.l.b16 %v321
      %v479 = vunpack.c.l.b16 %v322
      %v480 = vunpack.c.l.b16 %v323
      %v481 = vunpack.c.l.b16 %v324
      %v482 = vunpack.c.l.b16 %v325
      %v483 = vunpack.c.l.b16 %v326
      %v484 = vunpack.c.l.b16 %v327
      %v485 = vunpack.c.l.b16 %v328
      %v486 = vunpack.c.l.b16 %v329
      %v487 = vunpack.c.l.b16 %v330
      %v488 = vunpack.c.l.b16 %v331
      %v489 = vunpack.c.l.b16 %v332
      %v490 = vunpack.c.l.b16 %v333
      %v491 = vunpack.c.l.b16 %v334
      %v492 = vunpack.c.l.b16 %v335
      %v493 = vunpack.c.l.b16 %v336
      %v494 = vunpack.c.l.b16 %v337
      %v495 = vunpack.c.l.b16 %v338
      %v496 = vunpack.c.l.b16 %v339
      %v497 = vunpack.c.l.b16 %v340
      %v498 = vunpack.c.l.b16 %v341
      %v499 = vunpack.c.l.b16 %v342
      %v500 = vunpack.c.l.b16 %v343
      %v501 = vunpack.c.l.b16 %v344
      %v502 = vunpack.c.l.b16 %v345
      %v503 = vunpack.c.l.b16 %v346
      %v504 = vunpack.c.l.b16 %v347
      %v505 = vunpack.c.l.b16 %v348
      %v506 = vunpack.c.l.b16 %v349
      %v507 = vunpack.c.l.b16 %v350
      %v508 = vpack.c.b16 %v461, %v460
      %v509 = vpack.c.b16 %v463, %v462
      %v510 = vpack.c.b16 %v465, %v464
      %v511 = vpack.c.b16 %v467, %v466
      %v512 = vpack.c.b16 %v469, %v468
      %v513 = vpack.c.b16 %v471, %v470
      %v514 = vpack.c.b16 %v473, %v472
      %v515 = vpack.c.b16 %v475, %v474
      %v516 = vpack.c.b16 %v477, %v476
      %v517 = vpack.c.b16 %v479, %v478
      %v518 = vpack.c.b16 %v481, %v480
      %v519 = vpack.c.b16 %v483, %v482
      %v520 = vpack.c.b16 %v485, %v484
      %v521 = vpack.c.b16 %v487, %v486
      %v522 = vpack.c.b16 %v489, %v488
      %v523 = vpack.c.b16 %v491, %v490
      %v524 = vpack.c.b16 %v493, %v492
      %v525 = vpack.c.b16 %v495, %v494
      %v526 = vpack.c.b16 %v497, %v496
      %v527 = vpack.c.b16 %v499, %v498
      %v528 = vpack.c.b16 %v501, %v500
      %v529 = vpack.c.b16 %v503, %v502
      %v530 = vpack.c.b16 %v505, %v504
      %v531 = vpack.c.b16 %v507, %v506
      %556 = vmatprep.subr.bf16.mxu0 0
      %557 = vmatpush1.bf16.msra.mxu0 %v515
      %558 = vmatprep.subr.bf16.mxu0 0
      %559 = vmatpush1.bf16.msra.mxu0 %v514
      %560 = vmatprep.subr.bf16.mxu0 0
      %561 = vmatpush1.bf16.msra.mxu0 %v513
      %562 = vmatprep.subr.bf16.mxu0 0
      %563 = vmatpush1.bf16.msra.mxu0 %v512
      %564 = vmatprep.subr.bf16.mxu0 0
      %565 = vmatpush1.bf16.msra.mxu0 %v511
      %566 = vmatprep.subr.bf16.mxu0 0
      %567 = vmatpush1.bf16.msra.mxu0 %v510
      %568 = vmatprep.subr.bf16.mxu0 0
      %569 = vmatpush1.bf16.msra.mxu0 %v509
      %570 = vmatprep.subr.bf16.mxu0 0
      %571 = vmatpush1.bf16.msra.mxu0 %v508
      %572 = vmatprep.subr.bf16.mxu0 0
      %573 = vmatpush2.bf16.msra.mxu0 %v523
      %574 = vmatprep.subr.bf16.mxu0 0
      %575 = vmatpush2.bf16.msra.mxu0 %v522
      %576 = vmatprep.subr.bf16.mxu0 0
      %577 = vmatpush2.bf16.msra.mxu0 %v521
      %578 = vmatprep.subr.bf16.mxu0 0
      %579 = vmatpush2.bf16.msra.mxu0 %v520
      %580 = vmatprep.subr.bf16.mxu0 0
      %581 = vmatpush2.bf16.msra.mxu0 %v519
      %582 = vmatprep.subr.bf16.mxu0 0
      %583 = vmatpush2.bf16.msra.mxu0 %v518
      %584 = vmatprep.subr.bf16.mxu0 0
      %585 = vmatpush2.bf16.msra.mxu0 %v517
      %586 = vmatprep.subr.bf16.mxu0 0
      %587 = vmatpush2.bf16.msra.mxu0 %v516
      %588 = vmatprep.mubr.bf16.mxu0 %v396
      %589 = vmatmul.mubr.bf16.gmra.mxu0 %v384
      %v590 = vpop.f32.mrf.mxu0
      %v591 = vadd.f32 0.0, %v590
      %v592 = vpop.f32.mrf.mxu0
      %v593 = vpop.f32.mrf.mxu0
      %v594 = vadd.f32 0.0, %v593
      %v595 = vpop.f32.mrf.mxu0
      %596 = vdwg.mxu0
      %597 = vmatprep.subr.bf16.mxu0 0
      %598 = vmatpush1.bf16.msra.mxu0 %v531
      %599 = vmatprep.subr.bf16.mxu0 0
      %600 = vmatpush1.bf16.msra.mxu0 %v530
      %601 = vmatprep.subr.bf16.mxu0 0
      %602 = vmatpush1.bf16.msra.mxu0 %v529
      %603 = vmatprep.subr.bf16.mxu0 0
      %604 = vmatpush1.bf16.msra.mxu0 %v528
      %605 = vmatprep.subr.bf16.mxu0 0
      %606 = vmatpush1.bf16.msra.mxu0 %v527
      %607 = vmatprep.subr.bf16.mxu0 0
      %608 = vmatpush1.bf16.msra.mxu0 %v526
      %609 = vmatprep.subr.bf16.mxu0 0
      %610 = vmatpush1.bf16.msra.mxu0 %v525
      %611 = vmatprep.subr.bf16.mxu0 0
      %612 = vmatpush1.bf16.msra.mxu0 %v524
      %613 = vmatprep.subr.bf16.mxu0 0
      %614 = vmatpush2.bf16.msra.mxu0 0
      %615 = vmatprep.subr.bf16.mxu0 0
      %616 = vmatpush2.bf16.msra.mxu0 0
      %617 = vmatprep.subr.bf16.mxu0 0
      %618 = vmatpush2.bf16.msra.mxu0 0
      %619 = vmatprep.subr.bf16.mxu0 0
      %620 = vmatpush2.bf16.msra.mxu0 0
      %621 = vmatprep.subr.bf16.mxu0 0
      %622 = vmatpush2.bf16.msra.mxu0 0
      %623 = vmatprep.subr.bf16.mxu0 0
      %624 = vmatpush2.bf16.msra.mxu0 0
      %625 = vmatprep.subr.bf16.mxu0 0
      %626 = vmatpush2.bf16.msra.mxu0 0
      %627 = vmatprep.subr.bf16.mxu0 0
      %628 = vmatpush2.bf16.msra.mxu0 0
      %629 = vmatprep.mubr.bf16.mxu0 0
      %630 = vmatmul.mubr.bf16.gmra.mxu0 %v408
      %v631 = vpop.f32.mrf.mxu0
      %v632 = vadd.f32 %v591, %v631
      %v633 = vpop.f32.mrf.mxu0
      %v634 = vpop.f32.mrf.mxu0
      %v635 = vadd.f32 %v594, %v634
      %v636 = vpop.f32.mrf.mxu0
      %637 = vdwg.mxu0
      %v642 = vunpack.c.l.b16 %v244
      %v643 = vunpack.c.h.b16 %v244
      %v644 = vunpack.c.l.b16 %v245
      %v645 = vunpack.c.l.b16 %v246
      %v646 = vunpack.c.h.b16 %v246
      %v647 = vunpack.c.l.b16 %v247
      %v648 = vpack.c.b16 %v645, %v642
      %v649 = vpack.c.b16 %v646, %v643
      %v650 = vpack.c.b16 %v647, %v644
      %v702 = vunpack.c.l.b16 %v248
      %v703 = vunpack.c.l.b16 %v249
      %v704 = vunpack.c.l.b16 %v250
      %v705 = vunpack.c.l.b16 %v251
      %v706 = vunpack.c.l.b16 %v252
      %v707 = vunpack.c.l.b16 %v253
      %v708 = vunpack.c.l.b16 %v254
      %v709 = vunpack.c.l.b16 %v255
      %v710 = vunpack.c.l.b16 %v256
      %v711 = vunpack.c.l.b16 %v257
      %v712 = vunpack.c.l.b16 %v258
      %v713 = vunpack.c.l.b16 %v259
      %v714 = vunpack.c.l.b16 %v260
      %v715 = vunpack.c.l.b16 %v261
      %v716 = vunpack.c.l.b16 %v262
      %v717 = vunpack.c.l.b16 %v263
      %v718 = vunpack.c.l.b16 %v264
      %v719 = vunpack.c.l.b16 %v265
      %v720 = vunpack.c.l.b16 %v266
      %v721 = vunpack.c.l.b16 %v267
      %v722 = vunpack.c.l.b16 %v268
      %v723 = vunpack.c.l.b16 %v269
      %v724 = vunpack.c.l.b16 %v270
      %v725 = vunpack.c.l.b16 %v271
      %v726 = vunpack.c.l.b16 %v272
      %v727 = vunpack.c.l.b16 %v273
      %v728 = vunpack.c.l.b16 %v274
      %v729 = vunpack.c.l.b16 %v275
      %v730 = vunpack.c.l.b16 %v276
      %v731 = vunpack.c.l.b16 %v277
      %v732 = vunpack.c.l.b16 %v278
      %v733 = vunpack.c.l.b16 %v279
      %v734 = vunpack.c.l.b16 %v280
      %v735 = vunpack.c.l.b16 %v281
      %v736 = vunpack.c.l.b16 %v282
      %v737 = vunpack.c.l.b16 %v283
      %v738 = vunpack.c.l.b16 %v284
      %v739 = vunpack.c.l.b16 %v285
      %v740 = vunpack.c.l.b16 %v286
      %v741 = vunpack.c.l.b16 %v287
      %v742 = vunpack.c.l.b16 %v288
      %v743 = vunpack.c.l.b16 %v289
      %v744 = vunpack.c.l.b16 %v290
      %v745 = vunpack.c.l.b16 %v291
      %v746 = vunpack.c.l.b16 %v292
      %v747 = vunpack.c.l.b16 %v293
      %v748 = vunpack.c.l.b16 %v294
      %v749 = vunpack.c.l.b16 %v295
      %v750 = vpack.c.b16 %v703, %v702
      %v751 = vpack.c.b16 %v705, %v704
      %v752 = vpack.c.b16 %v707, %v706
      %v753 = vpack.c.b16 %v709, %v708
      %v754 = vpack.c.b16 %v711, %v710
      %v755 = vpack.c.b16 %v713, %v712
      %v756 = vpack.c.b16 %v715, %v714
      %v757 = vpack.c.b16 %v717, %v716
      %v758 = vpack.c.b16 %v719, %v718
      %v759 = vpack.c.b16 %v721, %v720
      %v760 = vpack.c.b16 %v723, %v722
      %v761 = vpack.c.b16 %v725, %v724
      %v762 = vpack.c.b16 %v727, %v726
      %v763 = vpack.c.b16 %v729, %v728
      %v764 = vpack.c.b16 %v731, %v730
      %v765 = vpack.c.b16 %v733, %v732
      %v766 = vpack.c.b16 %v735, %v734
      %v767 = vpack.c.b16 %v737, %v736
      %v768 = vpack.c.b16 %v739, %v738
      %v769 = vpack.c.b16 %v741, %v740
      %v770 = vpack.c.b16 %v743, %v742
      %v771 = vpack.c.b16 %v745, %v744
      %v772 = vpack.c.b16 %v747, %v746
      %v773 = vpack.c.b16 %v749, %v748
      %798 = vmatprep.subr.bf16.mxu0 0
      %799 = vmatpush1.bf16.msra.mxu0 %v757
      %800 = vmatprep.subr.bf16.mxu0 0
      %801 = vmatpush1.bf16.msra.mxu0 %v756
      %802 = vmatprep.subr.bf16.mxu0 0
      %803 = vmatpush1.bf16.msra.mxu0 %v755
      %804 = vmatprep.subr.bf16.mxu0 0
      %805 = vmatpush1.bf16.msra.mxu0 %v754
      %806 = vmatprep.subr.bf16.mxu0 0
      %807 = vmatpush1.bf16.msra.mxu0 %v753
      %808 = vmatprep.subr.bf16.mxu0 0
      %809 = vmatpush1.bf16.msra.mxu0 %v752
      %810 = vmatprep.subr.bf16.mxu0 0
      %811 = vmatpush1.bf16.msra.mxu0 %v751
      %812 = vmatprep.subr.bf16.mxu0 0
      %813 = vmatpush1.bf16.msra.mxu0 %v750
      %814 = vmatprep.subr.bf16.mxu0 0
      %815 = vmatpush2.bf16.msra.mxu0 %v765
      %816 = vmatprep.subr.bf16.mxu0 0
      %817 = vmatpush2.bf16.msra.mxu0 %v764
      %818 = vmatprep.subr.bf16.mxu0 0
      %819 = vmatpush2.bf16.msra.mxu0 %v763
      %820 = vmatprep.subr.bf16.mxu0 0
      %821 = vmatpush2.bf16.msra.mxu0 %v762
      %822 = vmatprep.subr.bf16.mxu0 0
      %823 = vmatpush2.bf16.msra.mxu0 %v761
      %824 = vmatprep.subr.bf16.mxu0 0
      %825 = vmatpush2.bf16.msra.mxu0 %v760
      %826 = vmatprep.subr.bf16.mxu0 0
      %827 = vmatpush2.bf16.msra.mxu0 %v759
      %828 = vmatprep.subr.bf16.mxu0 0
      %829 = vmatpush2.bf16.msra.mxu0 %v758
      %830 = vmatprep.mubr.bf16.mxu0 %v649
      %831 = vmatmul.mubr.bf16.gmra.mxu0 %v648
      %v832 = vpop.f32.mrf.mxu0
      %v833 = vadd.f32 %v632, %v832
      %v834 = vpop.f32.mrf.mxu0
      %v835 = vpop.f32.mrf.mxu0
      %v836 = vadd.f32 %v635, %v835
      %v837 = vpop.f32.mrf.mxu0
      %838 = vdwg.mxu0
      %839 = vmatprep.subr.bf16.mxu0 0
      %840 = vmatpush1.bf16.msra.mxu0 %v773
      %841 = vmatprep.subr.bf16.mxu0 0
      %842 = vmatpush1.bf16.msra.mxu0 %v772
      %843 = vmatprep.subr.bf16.mxu0 0
      %844 = vmatpush1.bf16.msra.mxu0 %v771
      %845 = vmatprep.subr.bf16.mxu0 0
      %846 = vmatpush1.bf16.msra.mxu0 %v770
      %847 = vmatprep.subr.bf16.mxu0 0
      %848 = vmatpush1.bf16.msra.mxu0 %v769
      %849 = vmatprep.subr.bf16.mxu0 0
      %850 = vmatpush1.bf16.msra.mxu0 %v768
      %851 = vmatprep.subr.bf16.mxu0 0
      %852 = vmatpush1.bf16.msra.mxu0 %v767
      %853 = vmatprep.subr.bf16.mxu0 0
      %854 = vmatpush1.bf16.msra.mxu0 %v766
      %855 = vmatprep.subr.bf16.mxu0 0
      %856 = vmatpush2.bf16.msra.mxu0 0
      %857 = vmatprep.subr.bf16.mxu0 0
      %858 = vmatpush2.bf16.msra.mxu0 0
      %859 = vmatprep.subr.bf16.mxu0 0
      %860 = vmatpush2.bf16.msra.mxu0 0
      %861 = vmatprep.subr.bf16.mxu0 0
      %862 = vmatpush2.bf16.msra.mxu0 0
      %863 = vmatprep.subr.bf16.mxu0 0
      %864 = vmatpush2.bf16.msra.mxu0 0
      %865 = vmatprep.subr.bf16.mxu0 0
      %866 = vmatpush2.bf16.msra.mxu0 0
      %867 = vmatprep.subr.bf16.mxu0 0
      %868 = vmatpush2.bf16.msra.mxu0 0
      %869 = vmatprep.subr.bf16.mxu0 0
      %870 = vmatpush2.bf16.msra.mxu0 0
      %871 = vmatprep.mubr.bf16.mxu0 0
      %872 = vmatmul.mubr.bf16.gmra.mxu0 %v650
      %v873 = vpop.f32.mrf.mxu0
      %v874 = vadd.f32 %v833, %v873
      %v875 = vpop.f32.mrf.mxu0
      %v876 = vpop.f32.mrf.mxu0
      %v877 = vadd.f32 %v836, %v876
      %v878 = vpop.f32.mrf.mxu0
      %879 = vdwg.mxu0
      %v880 = vld [vmem:[%s229] sm:$0x1]
      %v881 = vlaneseq
      %v882 = vshrl.u32 %v881, 7
      %v883 = vsub.s32 0, %v882
      %v884 = vrot.slane %v880, %v883
      %v885 = vadd.f32 %v874, %v884
      %v886 = vadd.f32 %v877, %v884
      %vm887 = vcmp.ge.f32.partialorder %v885, 0.0
      %vm888 = vcmp.ge.f32.partialorder %v886, 0.0
      %v889 = vmul.f32 %v885, 0.1
      %v890 = vmul.f32 %v886, 0.1
      %v891 = vsel %vm887, %v885, %v889
      %v892 = vsel %vm888, %v886, %v890
      %v893 = vpack.c.bf16 %v892, %v891
      %v895 = vunpack.c.l.b16 %v893
      %v896 = vunpack.c.h.b16 %v893
      %v897 = vpack.c.b16 %v895, %v895
      %v898 = vpack.c.b16 %v896, %v896
      %901 = vst [vmem:[%s241] sm:$0xf] %v897
      %902 = vst [vmem:[%s241 + $0x4] sm:$0xf] %v898
      %s903 = smul.u32 2, %s21
      %p904 = scmp.lt.s32.totalorder %s20, 9
      %s905 = scalar_select %p904, %s20, 9
      %p906 = scmp.lt.s32.totalorder %s903, 1
      %s907 = scalar_select %p906, %s903, 1
      %p908 = scmp.lt.s32.totalorder %s19, 0
      %s909 = scalar_select %p908, %s19, 0
      %s910 = sadd.s32 %s909, %s907
      %s911 = smul.addr %s905, 2
      %s912 = sadd.s32 %s910, %s911
      %s913 = smul.addr %s912, 4
      %s914 = scalar_lea.vmem %s3, %s913
      // Predicated region
      $region33: #{mpd_forward.6} parent=31 // pred_check
        %p915 = pneg %p133
      $region34: #{mpd_forward.6} parent=31 // pred_check_branch
        %917 = sbr.rel (%p915) target = $region36
      $region35: #{mpd_forward.6} parent=31 // pred_region
        %s918 = smul.u32 2, %s21
      $region36: #{mpd_forward.6} parent=31 // pred_fallthru
        _
    $region32: #{mpd_forward.6} parent=5 // pred_fallthru
      _
    %p919 = scmp.le.s32.totalorder 2, %s9
    // Predicated region
    $region37: #{mpd_forward.6} parent=5 // pred_check
      %p920 = pneg %p919
    $region38: #{mpd_forward.6} parent=5 // pred_check_branch
      %922 = sbr.rel (%p920) target = $region40
    $region39: #{mpd_forward.6} parent=5 // pred_region
      %s923 = ssub.s32 %s9, 2
      // Predicated region
      $region41: #{mpd_forward.6} parent=39 // pred_check
        %p924 = pneg %p139
      $region42: #{mpd_forward.6} parent=39 // pred_check_branch
        %926 = sbr.rel (%p924) target = $region44
      $region43: #{mpd_forward.6} parent=39 // pred_region
        %s927 = smul.u32 2, %s24
        %p928 = scmp.lt.s32.totalorder %s23, 9
        %s929 = scalar_select %p928, %s23, 9
        %p930 = scmp.lt.s32.totalorder %s927, 1
        %s931 = scalar_select %p930, %s927, 1
        %p932 = scmp.lt.s32.totalorder %s22, 0
        %s933 = scalar_select %p932, %s22, 0
        %s934 = sadd.s32 %s933, %s931
        %s935 = smul.addr %s929, 2
        %s936 = sadd.s32 %s934, %s935
        %s937 = smul.addr %s936, 4
        %s938 = scalar_lea.vmem %s3, %s937
      $region44: #{mpd_forward.6} parent=39 // pred_fallthru
        _
    $region40: #{mpd_forward.6} parent=5 // pred_fallthru
      _
  $region6: #{mpd_forward.6} parent=0 // loop_footer
    %s13 = sadd.s32 1, %s9
  $region7: #{mpd_forward.6} parent=0 // loop_footer_branch
    %8 = sbr.rel target = $region3
  $region8: #{mpd_forward.6} parent=0 // loop_exit
    _

// kernel: mpd_forward.7
$region0: #{mpd_forward.7}
  #allocation0 [shape = 'u32[]', space=smem, size = 0x4, offset = 0x4, fixed_abs, tag = 'smem constant byte address 0x4 - core index']
  #allocation1 [shape = 'u32[144,128]{1,0:T(1,128)}', space=vmem, size = 0x12000, scoped, tag = 'internal scratch']
  %s0 = inlined_call_operand.vmem [shape: bf16[10,16,384], index: 0, kind: input, shape index: {}]
  %s1 = inlined_call_operand.vmem [shape: bf16[2,384,128], index: 1, kind: input, shape index: {}]
  %s2 = inlined_call_operand.vmem [shape: f32[8,128], index: 2, kind: input, shape index: {}]
  %s3 = inlined_call_operand.vmem [shape: bf16[10,8,128], index: 3, kind: output, shape index: {}]
  %s4 = sld [smem:[#allocation0]]
  $region45: #{mpd_forward.7} parent=0
    _
  %s6 = ssub.s32 1, %s4
  %s7 = scalar_select 0, %s6, %s4
  loop: start=0, step=1, limit=12
  $region2: #{mpd_forward.7} parent=0 // loop_pre_header
    _
  $region3: #{mpd_forward.7} parent=0 // loop_header
    %s9 = sphi 0, %s13
    %p10 = scmp.ge.s32.totalorder %s9, 12
    %s16 = sphi 0, %s35
    %s17 = sphi 0, %s31
    %s18 = sphi 0, %s27
    %s19 = sphi 0, %s16
    %s20 = sphi 0, %s17
    %s21 = sphi 0, %s18
    %s22 = sphi 0, %s19
    %s23 = sphi 0, %s20
    %s24 = sphi 0, %s21
    %s38 = sphi 0, %s40
    %s41 = sphi 0, %s38
    %s42 = sphi 0, %s41
    %s58 = sphi 0, %s42
    %s64 = sphi 0, %s66
    %s67 = sphi 0, %s64
    %s68 = sphi 0, %s67
    %s84 = sphi 0, %s68
    %s90 = sphi 0, %s92
    %s93 = sphi 0, %s90
    %s94 = sphi 0, %s93
    %s110 = sphi 0, %s94
    %s120 = sphi 0, %s122
    %s123 = sphi 0, %s120
    %s124 = sphi 0, %s123
    %s140 = sphi 0, %s124
  $region4: #{mpd_forward.7} parent=0 // loop_header_branch
    %12 = sbr.rel (%p10) target = $region8
  $region5: #{mpd_forward.7} parent=0 // loop_body
    %s14 = ssub.s32 %s9, 1
    %s15 = ssub.s32 %s9, 2
    %s25 = sadd.s32 1, %s18
    %p26 = scmp.ge.s32.totalorder %s25, 1
    %s27 = scalar_select %p26, 0, %s25
    %s28 = sadd.s32 1, %s17
    %s29 = scalar_select %p26, %s28, %s17
    %p30 = scmp.ge.s32.totalorder %s29, 10
    %s31 = scalar_select %p30, 0, %s29
    %s32 = sadd.s32 1, %s16
    %s33 = scalar_select %p30, %s32, %s16
    %p34 = scmp.ge.s32.totalorder %s33, 1
    %s35 = scalar_select %p34, 0, %s33
    %s36 = ssub.s32 %s17, %s31
    %p37 = scmp.eq.s32.totalorder %s36, 0
    %s39 = sadd.s32 %s38, 1
    %s40 = scalar_select %p37, %s38, %s39
    %p43 = pneg %p37
    %p44 = scmp.eq.s32.totalorder %s9, 9
    %p45 = por %p43, %p44
    %p46 = scmp.ne.s32.totalorder %s38, %s41
    %p47 = scmp.eq.s32.totalorder %s9, 0
    %p48 = por %p46, %p47
    %p49 = scmp.ne.s32.totalorder %s38, %s41
    %p50 = scmp.eq.s32.totalorder %s14, 9
    %p51 = por %p49, %p50
    %p52 = scmp.ne.s32.totalorder %s41, %s42
    %p53 = scmp.eq.s32.totalorder %s14, 0
    %p54 = por %p52, %p53
    %p55 = scmp.ne.s32.totalorder %s41, %s42
    %p56 = scmp.eq.s32.totalorder %s15, 9
    %p57 = por %p55, %p56
    %p59 = scmp.ne.s32.totalorder %s42, %s58
    %p60 = scmp.eq.s32.totalorder %s15, 0
    %p61 = por %p59, %p60
    %s62 = ssub.s32 %s16, %s35
    %p63 = scmp.eq.s32.totalorder %s62, 0
    %s65 = sadd.s32 %s64, 1
    %s66 = scalar_select %p63, %s64, %s65
    %p69 = pneg %p63
    %p70 = scmp.eq.s32.totalorder %s9, 9
    %p71 = por %p69, %p70
    %p72 = scmp.ne.s32.totalorder %s64, %s67
    %p73 = scmp.eq.s32.totalorder %s9, 0
    %p74 = por %p72, %p73
    %p75 = scmp.ne.s32.totalorder %s64, %s67
    %p76 = scmp.eq.s32.totalorder %s14, 9
    %p77 = por %p75, %p76
    %p78 = scmp.ne.s32.totalorder %s67, %s68
    %p79 = scmp.eq.s32.totalorder %s14, 0
    %p80 = por %p78, %p79
    %p81 = scmp.ne.s32.totalorder %s67, %s68
    %p82 = scmp.eq.s32.totalorder %s15, 9
    %p83 = por %p81, %p82
    %p85 = scmp.ne.s32.totalorder %s68, %s84
    %p86 = scmp.eq.s32.totalorder %s15, 0
    %p87 = por %p85, %p86
    %s88 = ssub.s32 %s16, %s35
    %p89 = scmp.eq.s32.totalorder %s88, 0
    %s91 = sadd.s32 %s90, 1
    %s92 = scalar_select %p89, %s90, %s91
    %p95 = pneg %p89
    %p96 = scmp.eq.s32.totalorder %s9, 9
    %p97 = por %p95, %p96
    %p98 = scmp.ne.s32.totalorder %s90, %s93
    %p99 = scmp.eq.s32.totalorder %s9, 0
    %p100 = por %p98, %p99
    %p101 = scmp.ne.s32.totalorder %s90, %s93
    %p102 = scmp.eq.s32.totalorder %s14, 9
    %p103 = por %p101, %p102
    %p104 = scmp.ne.s32.totalorder %s93, %s94
    %p105 = scmp.eq.s32.totalorder %s14, 0
    %p106 = por %p104, %p105
    %p107 = scmp.ne.s32.totalorder %s93, %s94
    %p108 = scmp.eq.s32.totalorder %s15, 9
    %p109 = por %p107, %p108
    %p111 = scmp.ne.s32.totalorder %s94, %s110
    %p112 = scmp.eq.s32.totalorder %s15, 0
    %p113 = por %p111, %p112
    %s114 = ssub.s32 %s17, %s31
    %s115 = ssub.s32 %s18, %s27
    %s116 = sor.u32 %s114, %s115
    %s117 = ssub.s32 %s16, %s35
    %s118 = sor.u32 %s116, %s117
    %p119 = scmp.eq.s32.totalorder %s118, 0
    %s121 = sadd.s32 %s120, 1
    %s122 = scalar_select %p119, %s120, %s121
    %p125 = pneg %p119
    %p126 = scmp.eq.s32.totalorder %s9, 9
    %p127 = por %p125, %p126
    %p128 = scmp.ne.s32.totalorder %s120, %s123
    %p129 = scmp.eq.s32.totalorder %s9, 0
    %p130 = por %p128, %p129
    %p131 = scmp.ne.s32.totalorder %s120, %s123
    %p132 = scmp.eq.s32.totalorder %s14, 9
    %p133 = por %p131, %p132
    %p134 = scmp.ne.s32.totalorder %s123, %s124
    %p135 = scmp.eq.s32.totalorder %s14, 0
    %p136 = por %p134, %p135
    %p137 = scmp.ne.s32.totalorder %s123, %s124
    %p138 = scmp.eq.s32.totalorder %s15, 9
    %p139 = por %p137, %p138
    %p141 = scmp.ne.s32.totalorder %s124, %s140
    %p142 = scmp.eq.s32.totalorder %s15, 0
    %p143 = por %p141, %p142
    %p144 = scmp.le.s32.totalorder 1, %s9
    %p145 = scmp.lt.s32.totalorder %s9, 11
    %p146 = pnand %p144, %p145
    %p147 = pneg %p146
    // Predicated region
    $region9: #{mpd_forward.7} parent=5 // pred_check
      _
    $region10: #{mpd_forward.7} parent=5 // pred_check_branch
      %149 = sbr.rel (%p146) target = $region12
    $region11: #{mpd_forward.7} parent=5 // pred_region
      %s150 = ssub.s32 %s9, 1
      // Predicated region
      $region13: #{mpd_forward.7} parent=11 // pred_check
        %p151 = pneg %p80
      $region14: #{mpd_forward.7} parent=11 // pred_check_branch
        %153 = sbr.rel (%p151) target = $region16
      $region15: #{mpd_forward.7} parent=11 // pred_region
        %p154 = scmp.lt.s32.totalorder %s19, 0
        %s155 = scalar_select %p154, %s19, 0
        %s156 = smul.addr %s155, 4
        %s157 = scalar_lea.vmem %s1, %s156
      $region16: #{mpd_forward.7} parent=11 // pred_fallthru
        _
      // Predicated region
      $region17: #{mpd_forward.7} parent=11 // pred_check
        %p158 = pneg %p106
      $region18: #{mpd_forward.7} parent=11 // pred_check_branch
        %160 = sbr.rel (%p158) target = $region20
      $region19: #{mpd_forward.7} parent=11 // pred_region
        %p161 = scmp.lt.s32.totalorder %s19, 0
        %s162 = scalar_select %p161, %s19, 0
        %s163 = smul.addr %s162, 8
        %s164 = scalar_lea.vmem %s2, %s163
      $region20: #{mpd_forward.7} parent=11 // pred_fallthru
        _
    $region12: #{mpd_forward.7} parent=5 // pred_fallthru
      _
    %p165 = scmp.lt.s32.totalorder %s9, 10
    // Predicated region
    $region21: #{mpd_forward.7} parent=5 // pred_check
      %p166 = pneg %p165
    $region22: #{mpd_forward.7} parent=5 // pred_check_branch
      %168 = sbr.rel (%p166) target = $region24
    $region23: #{mpd_forward.7} parent=5 // pred_region
      // Predicated region
      $region25: #{mpd_forward.7} parent=23 // pred_check
        %p169 = pneg %p48
      $region26: #{mpd_forward.7} parent=23 // pred_check_branch
        %171 = sbr.rel (%p169) target = $region28
      $region27: #{mpd_forward.7} parent=23 // pred_region
        %p172 = scmp.lt.s32.totalorder %s17, 9
        %s173 = scalar_select %p172, %s17, 9
        %s174 = smul.addr %s173, 6
        %s175 = smul.addr %s174, 4
        %s176 = scalar_lea.vmem %s0, %s175
      $region28: #{mpd_forward.7} parent=23 // pred_fallthru
        _
    $region24: #{mpd_forward.7} parent=5 // pred_fallthru
      _
    %p177 = scmp.le.s32.totalorder 1, %s9
    %p178 = scmp.lt.s32.totalorder %s9, 11
    %p179 = pnand %p177, %p178
    %p180 = pneg %p179
    // Predicated region
    $region29: #{mpd_forward.7} parent=5 // pred_check
      _
    $region30: #{mpd_forward.7} parent=5 // pred_check_branch
      %182 = sbr.rel (%p179) target = $region32
    $region31: #{mpd_forward.7} parent=5 // pred_region
      %s183 = ssub.s32 %s9, 1
      %p184 = scmp.lt.s32.totalorder %s20, 9
      %s185 = scalar_select %p184, %s20, 9
      %s186 = smul.addr %s185, 6
      %s187 = smul.addr %s186, 4
      %s188 = scalar_lea.vmem %s0, %s187
      %p189 = pneg %p54
      %p190 = pneg %p51
      %p191 = scmp.lt.s32.totalorder %s19, 0
      %s192 = scalar_select %p191, %s19, 0
      %s193 = smul.addr %s192, 4
      %s194 = scalar_lea.vmem %s1, %s193
      %p195 = pneg %p80
      %p196 = pneg %p77
      %p197 = scmp.lt.s32.totalorder %s19, 0
      %s198 = scalar_select %p197, %s19, 0
      %s199 = smul.addr %s198, 8
      %s200 = scalar_lea.vmem %s2, %s199
      %p201 = pneg %p106
      %p202 = pneg %p103
      %p203 = pneg %p136
      %p204 = pneg %p133
      %p205 = scmp.lt.s32.totalorder %s20, 9
      %s206 = scalar_select %p205, %s20, 9
      %p207 = scmp.lt.s32.totalorder %s21, 0
      %s208 = scalar_select %p207, %s21, 0
      %p209 = scmp.lt.s32.totalorder %s19, 0
      %s210 = scalar_select %p209, %s19, 0
      %s211 = sadd.s32 %s210, %s208
      %s212 = sadd.s32 %s211, %s206
      %s213 = smul.addr %s212, 4
      %s214 = scalar_lea.vmem %s3, %s213
      %p215 = scmp.lt.s32.totalorder %s20, 9
      %s216 = scalar_select %p215, %s20, 9
      %s217 = smul.addr %s216, 6
      %s218 = smul.addr %s217, 4
      %s219 = scalar_lea.vmem %s0, %s218
      %p220 = scmp.lt.s32.totalorder %s19, 0
      %s221 = scalar_select %p220, %s19, 0
      %s222 = smul.addr %s221, 4
      %s223 = scalar_lea.vmem %s1, %s222
      %p224 = scmp.lt.s32.totalorder %s19, 0
      %s225 = scalar_select %p224, %s19, 0
      %s226 = smul.addr %s225, 8
      %s227 = scalar_lea.vmem %s2, %s226
      %p228 = scmp.lt.s32.totalorder %s20, 9
      %s229 = scalar_select %p228, %s20, 9
      %p230 = scmp.lt.s32.totalorder %s21, 0
      %s231 = scalar_select %p230, %s21, 0
      %p232 = scmp.lt.s32.totalorder %s19, 0
      %s233 = scalar_select %p232, %s19, 0
      %s234 = sadd.s32 %s233, %s231
      %s235 = sadd.s32 %s234, %s229
      %s236 = smul.addr %s235, 4
      %s237 = scalar_lea.vmem %s3, %s236
      %v239 = vld [vmem:[%s219] sm:$0xff]
      %v240 = vld [vmem:[%s219 + $0x8] sm:$0xf]
      %v241 = vld [vmem:[%s223] sm:$0xf]
      %v242 = vld [vmem:[%s223 + $0x4] sm:$0xf]
      %v243 = vld [vmem:[%s223 + $0x8] sm:$0xf]
      %v244 = vld [vmem:[%s223 + $0xc] sm:$0xf]
      %v245 = vld [vmem:[%s223 + $0x10] sm:$0xf]
      %v246 = vld [vmem:[%s223 + $0x14] sm:$0xf]
      %v247 = vld [vmem:[%s223 + $0x18] sm:$0xf]
      %v248 = vld [vmem:[%s223 + $0x1c] sm:$0xf]
      %v249 = vld [vmem:[%s223 + $0x20] sm:$0xf]
      %v250 = vld [vmem:[%s223 + $0x24] sm:$0xf]
      %v251 = vld [vmem:[%s223 + $0x28] sm:$0xf]
      %v252 = vld [vmem:[%s223 + $0x2c] sm:$0xf]
      %v253 = vld [vmem:[%s223 + $0x30] sm:$0xf]
      %v254 = vld [vmem:[%s223 + $0x34] sm:$0xf]
      %v255 = vld [vmem:[%s223 + $0x38] sm:$0xf]
      %v256 = vld [vmem:[%s223 + $0x3c] sm:$0xf]
      %v257 = vld [vmem:[%s223 + $0x40] sm:$0xf]
      %v258 = vld [vmem:[%s223 + $0x44] sm:$0xf]
      %v259 = vld [vmem:[%s223 + $0x48] sm:$0xf]
      %v260 = vld [vmem:[%s223 + $0x4c] sm:$0xf]
      %v261 = vld [vmem:[%s223 + $0x50] sm:$0xf]
      %v262 = vld [vmem:[%s223 + $0x54] sm:$0xf]
      %v263 = vld [vmem:[%s223 + $0x58] sm:$0xf]
      %v264 = vld [vmem:[%s223 + $0x5c] sm:$0xf]
      %v265 = vld [vmem:[%s223 + $0x60] sm:$0xf]
      %v266 = vld [vmem:[%s223 + $0x64] sm:$0xf]
      %v267 = vld [vmem:[%s223 + $0x68] sm:$0xf]
      %v268 = vld [vmem:[%s223 + $0x6c] sm:$0xf]
      %v269 = vld [vmem:[%s223 + $0x70] sm:$0xf]
      %v270 = vld [vmem:[%s223 + $0x74] sm:$0xf]
      %v271 = vld [vmem:[%s223 + $0x78] sm:$0xf]
      %v272 = vld [vmem:[%s223 + $0x7c] sm:$0xf]
      %v273 = vld [vmem:[%s223 + $0x80] sm:$0xf]
      %v274 = vld [vmem:[%s223 + $0x84] sm:$0xf]
      %v275 = vld [vmem:[%s223 + $0x88] sm:$0xf]
      %v276 = vld [vmem:[%s223 + $0x8c] sm:$0xf]
      %v277 = vld [vmem:[%s223 + $0x90] sm:$0xf]
      %v278 = vld [vmem:[%s223 + $0x94] sm:$0xf]
      %v279 = vld [vmem:[%s223 + $0x98] sm:$0xf]
      %v280 = vld [vmem:[%s223 + $0x9c] sm:$0xf]
      %v281 = vld [vmem:[%s223 + $0xa0] sm:$0xf]
      %v282 = vld [vmem:[%s223 + $0xa4] sm:$0xf]
      %v283 = vld [vmem:[%s223 + $0xa8] sm:$0xf]
      %v284 = vld [vmem:[%s223 + $0xac] sm:$0xf]
      %v285 = vld [vmem:[%s223 + $0xb0] sm:$0xf]
      %v286 = vld [vmem:[%s223 + $0xb4] sm:$0xf]
      %v287 = vld [vmem:[%s223 + $0xb8] sm:$0xf]
      %v288 = vld [vmem:[%s223 + $0xbc] sm:$0xf]
      %v289 = vld [vmem:[%s219] sm:$0xff]
      %v290 = vld [vmem:[%s219 + $0x8] sm:$0xf]
      %v291 = vld [vmem:[%s219 + $0xc] sm:$0x11]
      %v292 = vld [vmem:[%s219 + $0x14] sm:$0x1]
      %s293 = scalar_lea.vmem %s223, 192
      %v294 = vld [vmem:[%s293] sm:$0xf]
      %v295 = vld [vmem:[%s293 + $0x4] sm:$0xf]
      %v296 = vld [vmem:[%s293 + $0x8] sm:$0xf]
      %v297 = vld [vmem:[%s293 + $0xc] sm:$0xf]
      %v298 = vld [vmem:[%s293 + $0x10] sm:$0xf]
      %v299 = vld [vmem:[%s293 + $0x14] sm:$0xf]
      %v300 = vld [vmem:[%s293 + $0x18] sm:$0xf]
      %v301 = vld [vmem:[%s293 + $0x1c] sm:$0xf]
      %v302 = vld [vmem:[%s293 + $0x20] sm:$0xf]
      %v303 = vld [vmem:[%s293 + $0x24] sm:$0xf]
      %v304 = vld [vmem:[%s293 + $0x28] sm:$0xf]
      %v305 = vld [vmem:[%s293 + $0x2c] sm:$0xf]
      %v306 = vld [vmem:[%s293 + $0x30] sm:$0xf]
      %v307 = vld [vmem:[%s293 + $0x34] sm:$0xf]
      %v308 = vld [vmem:[%s293 + $0x38] sm:$0xf]
      %v309 = vld [vmem:[%s293 + $0x3c] sm:$0xf]
      %v310 = vld [vmem:[%s293 + $0x40] sm:$0xf]
      %v311 = vld [vmem:[%s293 + $0x44] sm:$0xf]
      %v312 = vld [vmem:[%s293 + $0x48] sm:$0xf]
      %v313 = vld [vmem:[%s293 + $0x4c] sm:$0xf]
      %v314 = vld [vmem:[%s293 + $0x50] sm:$0xf]
      %v315 = vld [vmem:[%s293 + $0x54] sm:$0xf]
      %v316 = vld [vmem:[%s293 + $0x58] sm:$0xf]
      %v317 = vld [vmem:[%s293 + $0x5c] sm:$0xf]
      %v318 = vld [vmem:[%s293 + $0x60] sm:$0xf]
      %v319 = vld [vmem:[%s293 + $0x64] sm:$0xf]
      %v320 = vld [vmem:[%s293 + $0x68] sm:$0xf]
      %v321 = vld [vmem:[%s293 + $0x6c] sm:$0xf]
      %v322 = vld [vmem:[%s293 + $0x70] sm:$0xf]
      %v323 = vld [vmem:[%s293 + $0x74] sm:$0xf]
      %v324 = vld [vmem:[%s293 + $0x78] sm:$0xf]
      %v325 = vld [vmem:[%s293 + $0x7c] sm:$0xf]
      %v326 = vld [vmem:[%s293 + $0x80] sm:$0xf]
      %v327 = vld [vmem:[%s293 + $0x84] sm:$0xf]
      %v328 = vld [vmem:[%s293 + $0x88] sm:$0xf]
      %v329 = vld [vmem:[%s293 + $0x8c] sm:$0xf]
      %v330 = vld [vmem:[%s293 + $0x90] sm:$0xf]
      %v331 = vld [vmem:[%s293 + $0x94] sm:$0xf]
      %v332 = vld [vmem:[%s293 + $0x98] sm:$0xf]
      %v333 = vld [vmem:[%s293 + $0x9c] sm:$0xf]
      %v334 = vld [vmem:[%s293 + $0xa0] sm:$0xf]
      %v335 = vld [vmem:[%s293 + $0xa4] sm:$0xf]
      %v336 = vld [vmem:[%s293 + $0xa8] sm:$0xf]
      %v337 = vld [vmem:[%s293 + $0xac] sm:$0xf]
      %v338 = vld [vmem:[%s293 + $0xb0] sm:$0xf]
      %v339 = vld [vmem:[%s293 + $0xb4] sm:$0xf]
      %v340 = vld [vmem:[%s293 + $0xb8] sm:$0xf]
      %v341 = vld [vmem:[%s293 + $0xbc] sm:$0xf]
      %v346 = vunpack.c.l.b16 %v289
      %v347 = vunpack.c.h.b16 %v289
      %v348 = vunpack.c.l.b16 %v290
      %v349 = vunpack.c.l.b16 %v291
      %v350 = vunpack.c.h.b16 %v291
      %v351 = vunpack.c.l.b16 %v292
      %v352 = vpack.c.b16 %v349, %v346
      %v353 = vpack.c.b16 %v350, %v347
      %v354 = vpack.c.b16 %v351, %v348
      %v356 = vshrl.u32 %v352, 16
      %v358 = vshll.u32 %v352, 16
      %v360 = vrot.slane %v358, 1
      %v361 = vor.u32 %v356, %v360
      %v363 = vshrl.u32 %v353, 16
      %v365 = vshll.u32 %v353, 16
      %v367 = vrot.slane %v365, 1
      %v368 = vor.u32 %v363, %v367
      %v370 = vshrl.u32 %v354, 16
      %v372 = vshll.u32 %v354, 16
      %v374 = vrot.slane %v372, 1
      %v375 = vor.u32 %v370, %v374
      %v427 = vunpack.c.l.b16 %v294
      %v428 = vunpack.c.l.b16 %v295
      %v429 = vunpack.c.l.b16 %v296
      %v430 = vunpack.c.l.b16 %v297
      %v431 = vunpack.c.l.b16 %v298
      %v432 = vunpack.c.l.b16 %v299
      %v433 = vunpack.c.l.b16 %v300
      %v434 = vunpack.c.l.b16 %v301
      %v435 = vunpack.c.l.b16 %v302
      %v436 = vunpack.c.l.b16 %v303
      %v437 = vunpack.c.l.b16 %v304
      %v438 = vunpack.c.l.b16 %v305
      %v439 = vunpack.c.l.b16 %v306
      %v440 = vunpack.c.l.b16 %v307
      %v441 = vunpack.c.l.b16 %v308
      %v442 = vunpack.c.l.b16 %v309
      %v443 = vunpack.c.l.b16 %v310
      %v444 = vunpack.c.l.b16 %v311
      %v445 = vunpack.c.l.b16 %v312
      %v446 = vunpack.c.l.b16 %v313
      %v447 = vunpack.c.l.b16 %v314
      %v448 = vunpack.c.l.b16 %v315
      %v449 = vunpack.c.l.b16 %v316
      %v450 = vunpack.c.l.b16 %v317
      %v451 = vunpack.c.l.b16 %v318
      %v452 = vunpack.c.l.b16 %v319
      %v453 = vunpack.c.l.b16 %v320
      %v454 = vunpack.c.l.b16 %v321
      %v455 = vunpack.c.l.b16 %v322
      %v456 = vunpack.c.l.b16 %v323
      %v457 = vunpack.c.l.b16 %v324
      %v458 = vunpack.c.l.b16 %v325
      %v459 = vunpack.c.l.b16 %v326
      %v460 = vunpack.c.l.b16 %v327
      %v461 = vunpack.c.l.b16 %v328
      %v462 = vunpack.c.l.b16 %v329
      %v463 = vunpack.c.l.b16 %v330
      %v464 = vunpack.c.l.b16 %v331
      %v465 = vunpack.c.l.b16 %v332
      %v466 = vunpack.c.l.b16 %v333
      %v467 = vunpack.c.l.b16 %v334
      %v468 = vunpack.c.l.b16 %v335
      %v469 = vunpack.c.l.b16 %v336
      %v470 = vunpack.c.l.b16 %v337
      %v471 = vunpack.c.l.b16 %v338
      %v472 = vunpack.c.l.b16 %v339
      %v473 = vunpack.c.l.b16 %v340
      %v474 = vunpack.c.l.b16 %v341
      %v475 = vpack.c.b16 %v428, %v427
      %v476 = vpack.c.b16 %v430, %v429
      %v477 = vpack.c.b16 %v432, %v431
      %v478 = vpack.c.b16 %v434, %v433
      %v479 = vpack.c.b16 %v436, %v435
      %v480 = vpack.c.b16 %v438, %v437
      %v481 = vpack.c.b16 %v440, %v439
      %v482 = vpack.c.b16 %v442, %v441
      %v483 = vpack.c.b16 %v444, %v443
      %v484 = vpack.c.b16 %v446, %v445
      %v485 = vpack.c.b16 %v448, %v447
      %v486 = vpack.c.b16 %v450, %v449
      %v487 = vpack.c.b16 %v452, %v451
      %v488 = vpack.c.b16 %v454, %v453
      %v489 = vpack.c.b16 %v456, %v455
      %v490 = vpack.c.b16 %v458, %v457
      %v491 = vpack.c.b16 %v460, %v459
      %v492 = vpack.c.b16 %v462, %v461
      %v493 = vpack.c.b16 %v464, %v463
      %v494 = vpack.c.b16 %v466, %v465
      %v495 = vpack.c.b16 %v468, %v467
      %v496 = vpack.c.b16 %v470, %v469
      %v497 = vpack.c.b16 %v472, %v471
      %v498 = vpack.c.b16 %v474, %v473
      %523 = vmatprep.subr.bf16.mxu0 0
      %524 = vmatpush1.bf16.msra.mxu0 %v482
      %525 = vmatprep.subr.bf16.mxu0 0
      %526 = vmatpush1.bf16.msra.mxu0 %v481
      %527 = vmatprep.subr.bf16.mxu0 0
      %528 = vmatpush1.bf16.msra.mxu0 %v480
      %529 = vmatprep.subr.bf16.mxu0 0
      %530 = vmatpush1.bf16.msra.mxu0 %v479
      %531 = vmatprep.subr.bf16.mxu0 0
      %532 = vmatpush1.bf16.msra.mxu0 %v478
      %533 = vmatprep.subr.bf16.mxu0 0
      %534 = vmatpush1.bf16.msra.mxu0 %v477
      %535 = vmatprep.subr.bf16.mxu0 0
      %536 = vmatpush1.bf16.msra.mxu0 %v476
      %537 = vmatprep.subr.bf16.mxu0 0
      %538 = vmatpush1.bf16.msra.mxu0 %v475
      %539 = vmatprep.subr.bf16.mxu0 0
      %540 = vmatpush2.bf16.msra.mxu0 %v490
      %541 = vmatprep.subr.bf16.mxu0 0
      %542 = vmatpush2.bf16.msra.mxu0 %v489
      %543 = vmatprep.subr.bf16.mxu0 0
      %544 = vmatpush2.bf16.msra.mxu0 %v488
      %545 = vmatprep.subr.bf16.mxu0 0
      %546 = vmatpush2.bf16.msra.mxu0 %v487
      %547 = vmatprep.subr.bf16.mxu0 0
      %548 = vmatpush2.bf16.msra.mxu0 %v486
      %549 = vmatprep.subr.bf16.mxu0 0
      %550 = vmatpush2.bf16.msra.mxu0 %v485
      %551 = vmatprep.subr.bf16.mxu0 0
      %552 = vmatpush2.bf16.msra.mxu0 %v484
      %553 = vmatprep.subr.bf16.mxu0 0
      %554 = vmatpush2.bf16.msra.mxu0 %v483
      %555 = vmatprep.mubr.bf16.mxu0 %v368
      %556 = vmatmul.mubr.bf16.gmra.mxu0 %v361
      %v557 = vpop.f32.mrf.mxu0
      %v558 = vadd.f32 0.0, %v557
      %v559 = vpop.f32.mrf.mxu0
      %v560 = vpop.f32.mrf.mxu0
      %v561 = vpop.f32.mrf.mxu0
      %562 = vdwg.mxu0
      %563 = vmatprep.subr.bf16.mxu0 0
      %564 = vmatpush1.bf16.msra.mxu0 %v498
      %565 = vmatprep.subr.bf16.mxu0 0
      %566 = vmatpush1.bf16.msra.mxu0 %v497
      %567 = vmatprep.subr.bf16.mxu0 0
      %568 = vmatpush1.bf16.msra.mxu0 %v496
      %569 = vmatprep.subr.bf16.mxu0 0
      %570 = vmatpush1.bf16.msra.mxu0 %v495
      %571 = vmatprep.subr.bf16.mxu0 0
      %572 = vmatpush1.bf16.msra.mxu0 %v494
      %573 = vmatprep.subr.bf16.mxu0 0
      %574 = vmatpush1.bf16.msra.mxu0 %v493
      %575 = vmatprep.subr.bf16.mxu0 0
      %576 = vmatpush1.bf16.msra.mxu0 %v492
      %577 = vmatprep.subr.bf16.mxu0 0
      %578 = vmatpush1.bf16.msra.mxu0 %v491
      %579 = vmatprep.subr.bf16.mxu0 0
      %580 = vmatpush2.bf16.msra.mxu0 0
      %581 = vmatprep.subr.bf16.mxu0 0
      %582 = vmatpush2.bf16.msra.mxu0 0
      %583 = vmatprep.subr.bf16.mxu0 0
      %584 = vmatpush2.bf16.msra.mxu0 0
      %585 = vmatprep.subr.bf16.mxu0 0
      %586 = vmatpush2.bf16.msra.mxu0 0
      %587 = vmatprep.subr.bf16.mxu0 0
      %588 = vmatpush2.bf16.msra.mxu0 0
      %589 = vmatprep.subr.bf16.mxu0 0
      %590 = vmatpush2.bf16.msra.mxu0 0
      %591 = vmatprep.subr.bf16.mxu0 0
      %592 = vmatpush2.bf16.msra.mxu0 0
      %593 = vmatprep.subr.bf16.mxu0 0
      %594 = vmatpush2.bf16.msra.mxu0 0
      %595 = vmatprep.mubr.bf16.mxu0 0
      %596 = vmatmul.mubr.bf16.gmra.mxu0 %v375
      %v597 = vpop.f32.mrf.mxu0
      %v598 = vadd.f32 %v558, %v597
      %v599 = vpop.f32.mrf.mxu0
      %v600 = vpop.f32.mrf.mxu0
      %v601 = vpop.f32.mrf.mxu0
      %602 = vdwg.mxu0
      %v605 = vunpack.c.l.b16 %v239
      %v606 = vunpack.c.h.b16 %v239
      %v607 = vunpack.c.l.b16 %v240
      %v608 = vpack.c.b16 %v605, %v605
      %v609 = vpack.c.b16 %v606, %v606
      %v610 = vpack.c.b16 %v607, %v607
      %v662 = vunpack.c.l.b16 %v241
      %v663 = vunpack.c.l.b16 %v242
      %v664 = vunpack.c.l.b16 %v243
      %v665 = vunpack.c.l.b16 %v244
      %v666 = vunpack.c.l.b16 %v245
      %v667 = vunpack.c.l.b16 %v246
      %v668 = vunpack.c.l.b16 %v247
      %v669 = vunpack.c.l.b16 %v248
      %v670 = vunpack.c.l.b16 %v249
      %v671 = vunpack.c.l.b16 %v250
      %v672 = vunpack.c.l.b16 %v251
      %v673 = vunpack.c.l.b16 %v252
      %v674 = vunpack.c.l.b16 %v253
      %v675 = vunpack.c.l.b16 %v254
      %v676 = vunpack.c.l.b16 %v255
      %v677 = vunpack.c.l.b16 %v256
      %v678 = vunpack.c.l.b16 %v257
      %v679 = vunpack.c.l.b16 %v258
      %v680 = vunpack.c.l.b16 %v259
      %v681 = vunpack.c.l.b16 %v260
      %v682 = vunpack.c.l.b16 %v261
      %v683 = vunpack.c.l.b16 %v262
      %v684 = vunpack.c.l.b16 %v263
      %v685 = vunpack.c.l.b16 %v264
      %v686 = vunpack.c.l.b16 %v265
      %v687 = vunpack.c.l.b16 %v266
      %v688 = vunpack.c.l.b16 %v267
      %v689 = vunpack.c.l.b16 %v268
      %v690 = vunpack.c.l.b16 %v269
      %v691 = vunpack.c.l.b16 %v270
      %v692 = vunpack.c.l.b16 %v271
      %v693 = vunpack.c.l.b16 %v272
      %v694 = vunpack.c.l.b16 %v273
      %v695 = vunpack.c.l.b16 %v274
      %v696 = vunpack.c.l.b16 %v275
      %v697 = vunpack.c.l.b16 %v276
      %v698 = vunpack.c.l.b16 %v277
      %v699 = vunpack.c.l.b16 %v278
      %v700 = vunpack.c.l.b16 %v279
      %v701 = vunpack.c.l.b16 %v280
      %v702 = vunpack.c.l.b16 %v281
      %v703 = vunpack.c.l.b16 %v282
      %v704 = vunpack.c.l.b16 %v283
      %v705 = vunpack.c.l.b16 %v284
      %v706 = vunpack.c.l.b16 %v285
      %v707 = vunpack.c.l.b16 %v286
      %v708 = vunpack.c.l.b16 %v287
      %v709 = vunpack.c.l.b16 %v288
      %v710 = vpack.c.b16 %v663, %v662
      %v711 = vpack.c.b16 %v665, %v664
      %v712 = vpack.c.b16 %v667, %v666
      %v713 = vpack.c.b16 %v669, %v668
      %v714 = vpack.c.b16 %v671, %v670
      %v715 = vpack.c.b16 %v673, %v672
      %v716 = vpack.c.b16 %v675, %v674
      %v717 = vpack.c.b16 %v677, %v676
      %v718 = vpack.c.b16 %v679, %v678
      %v719 = vpack.c.b16 %v681, %v680
      %v720 = vpack.c.b16 %v683, %v682
      %v721 = vpack.c.b16 %v685, %v684
      %v722 = vpack.c.b16 %v687, %v686
      %v723 = vpack.c.b16 %v689, %v688
      %v724 = vpack.c.b16 %v691, %v690
      %v725 = vpack.c.b16 %v693, %v692
      %v726 = vpack.c.b16 %v695, %v694
      %v727 = vpack.c.b16 %v697, %v696
      %v728 = vpack.c.b16 %v699, %v698
      %v729 = vpack.c.b16 %v701, %v700
      %v730 = vpack.c.b16 %v703, %v702
      %v731 = vpack.c.b16 %v705, %v704
      %v732 = vpack.c.b16 %v707, %v706
      %v733 = vpack.c.b16 %v709, %v708
      %758 = vmatprep.subr.bf16.mxu0 0
      %759 = vmatpush1.bf16.msra.mxu0 %v717
      %760 = vmatprep.subr.bf16.mxu0 0
      %761 = vmatpush1.bf16.msra.mxu0 %v716
      %762 = vmatprep.subr.bf16.mxu0 0
      %763 = vmatpush1.bf16.msra.mxu0 %v715
      %764 = vmatprep.subr.bf16.mxu0 0
      %765 = vmatpush1.bf16.msra.mxu0 %v714
      %766 = vmatprep.subr.bf16.mxu0 0
      %767 = vmatpush1.bf16.msra.mxu0 %v713
      %768 = vmatprep.subr.bf16.mxu0 0
      %769 = vmatpush1.bf16.msra.mxu0 %v712
      %770 = vmatprep.subr.bf16.mxu0 0
      %771 = vmatpush1.bf16.msra.mxu0 %v711
      %772 = vmatprep.subr.bf16.mxu0 0
      %773 = vmatpush1.bf16.msra.mxu0 %v710
      %774 = vmatprep.subr.bf16.mxu0 0
      %775 = vmatpush2.bf16.msra.mxu0 %v725
      %776 = vmatprep.subr.bf16.mxu0 0
      %777 = vmatpush2.bf16.msra.mxu0 %v724
      %778 = vmatprep.subr.bf16.mxu0 0
      %779 = vmatpush2.bf16.msra.mxu0 %v723
      %780 = vmatprep.subr.bf16.mxu0 0
      %781 = vmatpush2.bf16.msra.mxu0 %v722
      %782 = vmatprep.subr.bf16.mxu0 0
      %783 = vmatpush2.bf16.msra.mxu0 %v721
      %784 = vmatprep.subr.bf16.mxu0 0
      %785 = vmatpush2.bf16.msra.mxu0 %v720
      %786 = vmatprep.subr.bf16.mxu0 0
      %787 = vmatpush2.bf16.msra.mxu0 %v719
      %788 = vmatprep.subr.bf16.mxu0 0
      %789 = vmatpush2.bf16.msra.mxu0 %v718
      %790 = vmatprep.mubr.bf16.mxu0 %v609
      %791 = vmatmul.mubr.bf16.gmra.mxu0 %v608
      %v792 = vpop.f32.mrf.mxu0
      %v793 = vadd.f32 %v598, %v792
      %v794 = vpop.f32.mrf.mxu0
      %v795 = vpop.f32.mrf.mxu0
      %v796 = vpop.f32.mrf.mxu0
      %797 = vdwg.mxu0
      %798 = vmatprep.subr.bf16.mxu0 0
      %799 = vmatpush1.bf16.msra.mxu0 %v733
      %800 = vmatprep.subr.bf16.mxu0 0
      %801 = vmatpush1.bf16.msra.mxu0 %v732
      %802 = vmatprep.subr.bf16.mxu0 0
      %803 = vmatpush1.bf16.msra.mxu0 %v731
      %804 = vmatprep.subr.bf16.mxu0 0
      %805 = vmatpush1.bf16.msra.mxu0 %v730
      %806 = vmatprep.subr.bf16.mxu0 0
      %807 = vmatpush1.bf16.msra.mxu0 %v729
      %808 = vmatprep.subr.bf16.mxu0 0
      %809 = vmatpush1.bf16.msra.mxu0 %v728
      %810 = vmatprep.subr.bf16.mxu0 0
      %811 = vmatpush1.bf16.msra.mxu0 %v727
      %812 = vmatprep.subr.bf16.mxu0 0
      %813 = vmatpush1.bf16.msra.mxu0 %v726
      %814 = vmatprep.subr.bf16.mxu0 0
      %815 = vmatpush2.bf16.msra.mxu0 0
      %816 = vmatprep.subr.bf16.mxu0 0
      %817 = vmatpush2.bf16.msra.mxu0 0
      %818 = vmatprep.subr.bf16.mxu0 0
      %819 = vmatpush2.bf16.msra.mxu0 0
      %820 = vmatprep.subr.bf16.mxu0 0
      %821 = vmatpush2.bf16.msra.mxu0 0
      %822 = vmatprep.subr.bf16.mxu0 0
      %823 = vmatpush2.bf16.msra.mxu0 0
      %824 = vmatprep.subr.bf16.mxu0 0
      %825 = vmatpush2.bf16.msra.mxu0 0
      %826 = vmatprep.subr.bf16.mxu0 0
      %827 = vmatpush2.bf16.msra.mxu0 0
      %828 = vmatprep.subr.bf16.mxu0 0
      %829 = vmatpush2.bf16.msra.mxu0 0
      %830 = vmatprep.mubr.bf16.mxu0 0
      %831 = vmatmul.mubr.bf16.gmra.mxu0 %v610
      %v832 = vpop.f32.mrf.mxu0
      %v833 = vadd.f32 %v793, %v832
      %v834 = vpop.f32.mrf.mxu0
      %v835 = vpop.f32.mrf.mxu0
      %v836 = vpop.f32.mrf.mxu0
      %837 = vdwg.mxu0
      %v838 = vld [vmem:[%s227] sm:$0x1]
      %v839 = vlaneseq
      %v840 = vshrl.u32 %v839, 7
      %v841 = vsub.s32 0, %v840
      %v842 = vrot.slane %v838, %v841
      %v843 = vadd.f32 %v833, %v842
      %vm844 = vcmp.ge.f32.partialorder %v843, 0.0
      %v845 = vmul.f32 %v843, 0.1
      %v846 = vsel %vm844, %v843, %v845
      %v847 = vpack.c.bf16 %v846, %v846
      %848 = vst [vmem:[%s237] sm:$0xf] %v847
      %p849 = scmp.lt.s32.totalorder %s20, 9
      %s850 = scalar_select %p849, %s20, 9
      %p851 = scmp.lt.s32.totalorder %s21, 0
      %s852 = scalar_select %p851, %s21, 0
      %p853 = scmp.lt.s32.totalorder %s19, 0
      %s854 = scalar_select %p853, %s19, 0
      %s855 = sadd.s32 %s854, %s852
      %s856 = sadd.s32 %s855, %s850
      %s857 = smul.addr %s856, 4
      %s858 = scalar_lea.vmem %s3, %s857
      // Predicated region
      $region33: #{mpd_forward.7} parent=31 // pred_check
        %p859 = pneg %p133
      $region34: #{mpd_forward.7} parent=31 // pred_check_branch
        %861 = sbr.rel (%p859) target = $region36
      $region35: #{mpd_forward.7} parent=31 // pred_region
        _
      $region36: #{mpd_forward.7} parent=31 // pred_fallthru
        _
    $region32: #{mpd_forward.7} parent=5 // pred_fallthru
      _
    %p862 = scmp.le.s32.totalorder 2, %s9
    // Predicated region
    $region37: #{mpd_forward.7} parent=5 // pred_check
      %p863 = pneg %p862
    $region38: #{mpd_forward.7} parent=5 // pred_check_branch
      %865 = sbr.rel (%p863) target = $region40
    $region39: #{mpd_forward.7} parent=5 // pred_region
      %s866 = ssub.s32 %s9, 2
      // Predicated region
      $region41: #{mpd_forward.7} parent=39 // pred_check
        %p867 = pneg %p139
      $region42: #{mpd_forward.7} parent=39 // pred_check_branch
        %869 = sbr.rel (%p867) target = $region44
      $region43: #{mpd_forward.7} parent=39 // pred_region
        %p870 = scmp.lt.s32.totalorder %s23, 9
        %s871 = scalar_select %p870, %s23, 9
        %p872 = scmp.lt.s32.totalorder %s24, 0
        %s873 = scalar_select %p872, %s24, 0
        %p874 = scmp.lt.s32.totalorder %s22, 0
        %s875 = scalar_select %p874, %s22, 0
        %s876 = sadd.s32 %s875, %s873
        %s877 = sadd.s32 %s876, %s871
        %s878 = smul.addr %s877, 4
        %s879 = scalar_lea.vmem %s3, %s878
      $region44: #{mpd_forward.7} parent=39 // pred_fallthru
        _
    $region40: #{mpd_forward.7} parent=5 // pred_fallthru
      _
  $region6: #{mpd_forward.7} parent=0 // loop_footer
    %s13 = sadd.s32 1, %s9
  $region7: #{mpd_forward.7} parent=0 // loop_footer_branch
    %8 = sbr.rel target = $region3
  $region8: #{mpd_forward.7} parent=0 // loop_exit
    _

// kernel: mpd_forward.8
$region0: #{mpd_forward.8}
  #allocation0 [shape = 'u32[]', space=smem, size = 0x4, offset = 0x4, fixed_abs, tag = 'smem constant byte address 0x4 - core index']
  #allocation1 [shape = 'u32[144,128]{1,0:T(1,128)}', space=vmem, size = 0x12000, scoped, tag = 'internal scratch']
  %s0 = inlined_call_operand.vmem [shape: bf16[10,16,384], index: 0, kind: input, shape index: {}]
  %s1 = inlined_call_operand.vmem [shape: bf16[2,384,256], index: 1, kind: input, shape index: {}]
  %s2 = inlined_call_operand.vmem [shape: f32[8,256], index: 2, kind: input, shape index: {}]
  %s3 = inlined_call_operand.vmem [shape: bf16[10,8,256], index: 3, kind: output, shape index: {}]
  %s4 = sld [smem:[#allocation0]]
  $region45: #{mpd_forward.8} parent=0
    _
  %s6 = ssub.s32 1, %s4
  %s7 = scalar_select 0, %s6, %s4
  loop: start=0, step=1, limit=12
  $region2: #{mpd_forward.8} parent=0 // loop_pre_header
    _
  $region3: #{mpd_forward.8} parent=0 // loop_header
    %s9 = sphi 0, %s13
    %p10 = scmp.ge.s32.totalorder %s9, 12
    %s16 = sphi 0, %s35
    %s17 = sphi 0, %s31
    %s18 = sphi 0, %s27
    %s19 = sphi 0, %s16
    %s20 = sphi 0, %s17
    %s21 = sphi 0, %s18
    %s22 = sphi 0, %s19
    %s23 = sphi 0, %s20
    %s24 = sphi 0, %s21
    %s38 = sphi 0, %s40
    %s41 = sphi 0, %s38
    %s42 = sphi 0, %s41
    %s58 = sphi 0, %s42
    %s64 = sphi 0, %s66
    %s67 = sphi 0, %s64
    %s68 = sphi 0, %s67
    %s84 = sphi 0, %s68
    %s90 = sphi 0, %s92
    %s93 = sphi 0, %s90
    %s94 = sphi 0, %s93
    %s110 = sphi 0, %s94
    %s120 = sphi 0, %s122
    %s123 = sphi 0, %s120
    %s124 = sphi 0, %s123
    %s140 = sphi 0, %s124
  $region4: #{mpd_forward.8} parent=0 // loop_header_branch
    %12 = sbr.rel (%p10) target = $region8
  $region5: #{mpd_forward.8} parent=0 // loop_body
    %s14 = ssub.s32 %s9, 1
    %s15 = ssub.s32 %s9, 2
    %s25 = sadd.s32 1, %s18
    %p26 = scmp.ge.s32.totalorder %s25, 1
    %s27 = scalar_select %p26, 0, %s25
    %s28 = sadd.s32 1, %s17
    %s29 = scalar_select %p26, %s28, %s17
    %p30 = scmp.ge.s32.totalorder %s29, 10
    %s31 = scalar_select %p30, 0, %s29
    %s32 = sadd.s32 1, %s16
    %s33 = scalar_select %p30, %s32, %s16
    %p34 = scmp.ge.s32.totalorder %s33, 1
    %s35 = scalar_select %p34, 0, %s33
    %s36 = ssub.s32 %s17, %s31
    %p37 = scmp.eq.s32.totalorder %s36, 0
    %s39 = sadd.s32 %s38, 1
    %s40 = scalar_select %p37, %s38, %s39
    %p43 = pneg %p37
    %p44 = scmp.eq.s32.totalorder %s9, 9
    %p45 = por %p43, %p44
    %p46 = scmp.ne.s32.totalorder %s38, %s41
    %p47 = scmp.eq.s32.totalorder %s9, 0
    %p48 = por %p46, %p47
    %p49 = scmp.ne.s32.totalorder %s38, %s41
    %p50 = scmp.eq.s32.totalorder %s14, 9
    %p51 = por %p49, %p50
    %p52 = scmp.ne.s32.totalorder %s41, %s42
    %p53 = scmp.eq.s32.totalorder %s14, 0
    %p54 = por %p52, %p53
    %p55 = scmp.ne.s32.totalorder %s41, %s42
    %p56 = scmp.eq.s32.totalorder %s15, 9
    %p57 = por %p55, %p56
    %p59 = scmp.ne.s32.totalorder %s42, %s58
    %p60 = scmp.eq.s32.totalorder %s15, 0
    %p61 = por %p59, %p60
    %s62 = ssub.s32 %s16, %s35
    %p63 = scmp.eq.s32.totalorder %s62, 0
    %s65 = sadd.s32 %s64, 1
    %s66 = scalar_select %p63, %s64, %s65
    %p69 = pneg %p63
    %p70 = scmp.eq.s32.totalorder %s9, 9
    %p71 = por %p69, %p70
    %p72 = scmp.ne.s32.totalorder %s64, %s67
    %p73 = scmp.eq.s32.totalorder %s9, 0
    %p74 = por %p72, %p73
    %p75 = scmp.ne.s32.totalorder %s64, %s67
    %p76 = scmp.eq.s32.totalorder %s14, 9
    %p77 = por %p75, %p76
    %p78 = scmp.ne.s32.totalorder %s67, %s68
    %p79 = scmp.eq.s32.totalorder %s14, 0
    %p80 = por %p78, %p79
    %p81 = scmp.ne.s32.totalorder %s67, %s68
    %p82 = scmp.eq.s32.totalorder %s15, 9
    %p83 = por %p81, %p82
    %p85 = scmp.ne.s32.totalorder %s68, %s84
    %p86 = scmp.eq.s32.totalorder %s15, 0
    %p87 = por %p85, %p86
    %s88 = ssub.s32 %s16, %s35
    %p89 = scmp.eq.s32.totalorder %s88, 0
    %s91 = sadd.s32 %s90, 1
    %s92 = scalar_select %p89, %s90, %s91
    %p95 = pneg %p89
    %p96 = scmp.eq.s32.totalorder %s9, 9
    %p97 = por %p95, %p96
    %p98 = scmp.ne.s32.totalorder %s90, %s93
    %p99 = scmp.eq.s32.totalorder %s9, 0
    %p100 = por %p98, %p99
    %p101 = scmp.ne.s32.totalorder %s90, %s93
    %p102 = scmp.eq.s32.totalorder %s14, 9
    %p103 = por %p101, %p102
    %p104 = scmp.ne.s32.totalorder %s93, %s94
    %p105 = scmp.eq.s32.totalorder %s14, 0
    %p106 = por %p104, %p105
    %p107 = scmp.ne.s32.totalorder %s93, %s94
    %p108 = scmp.eq.s32.totalorder %s15, 9
    %p109 = por %p107, %p108
    %p111 = scmp.ne.s32.totalorder %s94, %s110
    %p112 = scmp.eq.s32.totalorder %s15, 0
    %p113 = por %p111, %p112
    %s114 = ssub.s32 %s17, %s31
    %s115 = ssub.s32 %s18, %s27
    %s116 = sor.u32 %s114, %s115
    %s117 = ssub.s32 %s16, %s35
    %s118 = sor.u32 %s116, %s117
    %p119 = scmp.eq.s32.totalorder %s118, 0
    %s121 = sadd.s32 %s120, 1
    %s122 = scalar_select %p119, %s120, %s121
    %p125 = pneg %p119
    %p126 = scmp.eq.s32.totalorder %s9, 9
    %p127 = por %p125, %p126
    %p128 = scmp.ne.s32.totalorder %s120, %s123
    %p129 = scmp.eq.s32.totalorder %s9, 0
    %p130 = por %p128, %p129
    %p131 = scmp.ne.s32.totalorder %s120, %s123
    %p132 = scmp.eq.s32.totalorder %s14, 9
    %p133 = por %p131, %p132
    %p134 = scmp.ne.s32.totalorder %s123, %s124
    %p135 = scmp.eq.s32.totalorder %s14, 0
    %p136 = por %p134, %p135
    %p137 = scmp.ne.s32.totalorder %s123, %s124
    %p138 = scmp.eq.s32.totalorder %s15, 9
    %p139 = por %p137, %p138
    %p141 = scmp.ne.s32.totalorder %s124, %s140
    %p142 = scmp.eq.s32.totalorder %s15, 0
    %p143 = por %p141, %p142
    %p144 = scmp.le.s32.totalorder 1, %s9
    %p145 = scmp.lt.s32.totalorder %s9, 11
    %p146 = pnand %p144, %p145
    %p147 = pneg %p146
    // Predicated region
    $region9: #{mpd_forward.8} parent=5 // pred_check
      _
    $region10: #{mpd_forward.8} parent=5 // pred_check_branch
      %149 = sbr.rel (%p146) target = $region12
    $region11: #{mpd_forward.8} parent=5 // pred_region
      %s150 = ssub.s32 %s9, 1
      // Predicated region
      $region13: #{mpd_forward.8} parent=11 // pred_check
        %p151 = pneg %p80
      $region14: #{mpd_forward.8} parent=11 // pred_check_branch
        %153 = sbr.rel (%p151) target = $region16
      $region15: #{mpd_forward.8} parent=11 // pred_region
        %s154 = smul.u32 2, %s19
        %p155 = scmp.lt.s32.totalorder %s154, 1
        %s156 = scalar_select %p155, %s154, 1
        %s157 = smul.addr %s156, 4
        %s158 = scalar_lea.vmem %s1, %s157
        %s159 = smul.u32 2, %s19
      $region16: #{mpd_forward.8} parent=11 // pred_fallthru
        _
      // Predicated region
      $region17: #{mpd_forward.8} parent=11 // pred_check
        %p160 = pneg %p106
      $region18: #{mpd_forward.8} parent=11 // pred_check_branch
        %162 = sbr.rel (%p160) target = $region20
      $region19: #{mpd_forward.8} parent=11 // pred_region
        %s163 = smul.u32 2, %s19
        %p164 = scmp.lt.s32.totalorder %s163, 1
        %s165 = scalar_select %p164, %s163, 1
        %s166 = smul.addr %s165, 8
        %s167 = scalar_lea.vmem %s2, %s166
        %s168 = smul.u32 2, %s19
      $region20: #{mpd_forward.8} parent=11 // pred_fallthru
        _
    $region12: #{mpd_forward.8} parent=5 // pred_fallthru
      _
    %p169 = scmp.lt.s32.totalorder %s9, 10
    // Predicated region
    $region21: #{mpd_forward.8} parent=5 // pred_check
      %p170 = pneg %p169
    $region22: #{mpd_forward.8} parent=5 // pred_check_branch
      %172 = sbr.rel (%p170) target = $region24
    $region23: #{mpd_forward.8} parent=5 // pred_region
      // Predicated region
      $region25: #{mpd_forward.8} parent=23 // pred_check
        %p173 = pneg %p48
      $region26: #{mpd_forward.8} parent=23 // pred_check_branch
        %175 = sbr.rel (%p173) target = $region28
      $region27: #{mpd_forward.8} parent=23 // pred_region
        %p176 = scmp.lt.s32.totalorder %s17, 9
        %s177 = scalar_select %p176, %s17, 9
        %s178 = smul.addr %s177, 6
        %s179 = smul.addr %s178, 4
        %s180 = scalar_lea.vmem %s0, %s179
      $region28: #{mpd_forward.8} parent=23 // pred_fallthru
        _
    $region24: #{mpd_forward.8} parent=5 // pred_fallthru
      _
    %p181 = scmp.le.s32.totalorder 1, %s9
    %p182 = scmp.lt.s32.totalorder %s9, 11
    %p183 = pnand %p181, %p182
    %p184 = pneg %p183
    // Predicated region
    $region29: #{mpd_forward.8} parent=5 // pred_check
      _
    $region30: #{mpd_forward.8} parent=5 // pred_check_branch
      %186 = sbr.rel (%p183) target = $region32
    $region31: #{mpd_forward.8} parent=5 // pred_region
      %s187 = ssub.s32 %s9, 1
      %p188 = scmp.lt.s32.totalorder %s20, 9
      %s189 = scalar_select %p188, %s20, 9
      %s190 = smul.addr %s189, 6
      %s191 = smul.addr %s190, 4
      %s192 = scalar_lea.vmem %s0, %s191
      %p193 = pneg %p54
      %p194 = pneg %p51
      %s195 = smul.u32 2, %s19
      %p196 = scmp.lt.s32.totalorder %s195, 1
      %s197 = scalar_select %p196, %s195, 1
      %s198 = smul.addr %s197, 4
      %s199 = scalar_lea.vmem %s1, %s198
      %p200 = pneg %p80
      %p201 = pneg %p77
      %s202 = smul.u32 2, %s19
      %p203 = scmp.lt.s32.totalorder %s202, 1
      %s204 = scalar_select %p203, %s202, 1
      %s205 = smul.addr %s204, 8
      %s206 = scalar_lea.vmem %s2, %s205
      %p207 = pneg %p106
      %p208 = pneg %p103
      %p209 = pneg %p136
      %p210 = pneg %p133
      %s211 = smul.u32 2, %s19
      %p212 = scmp.lt.s32.totalorder %s20, 9
      %s213 = scalar_select %p212, %s20, 9
      %p214 = scmp.lt.s32.totalorder %s21, 0
      %s215 = scalar_select %p214, %s21, 0
      %p216 = scmp.lt.s32.totalorder %s211, 1
      %s217 = scalar_select %p216, %s211, 1
      %s218 = smul.addr %s215, 2
      %s219 = sadd.s32 %s217, %s218
      %s220 = smul.addr %s213, 2
      %s221 = sadd.s32 %s219, %s220
      %s222 = smul.addr %s221, 4
      %s223 = scalar_lea.vmem %s3, %s222
      %p224 = scmp.lt.s32.totalorder %s20, 9
      %s225 = scalar_select %p224, %s20, 9
      %s226 = smul.addr %s225, 6
      %s227 = smul.addr %s226, 4
      %s228 = scalar_lea.vmem %s0, %s227
      %s229 = smul.u32 2, %s19
      %p230 = scmp.lt.s32.totalorder %s229, 1
      %s231 = scalar_select %p230, %s229, 1
      %s232 = smul.addr %s231, 4
      %s233 = scalar_lea.vmem %s1, %s232
      %s234 = smul.u32 2, %s19
      %s235 = smul.u32 2, %s19
      %p236 = scmp.lt.s32.totalorder %s235, 1
      %s237 = scalar_select %p236, %s235, 1
      %s238 = smul.addr %s237, 8
      %s239 = scalar_lea.vmem %s2, %s238
      %s240 = smul.u32 2, %s19
      %s241 = smul.u32 2, %s19
      %p242 = scmp.lt.s32.totalorder %s20, 9
      %s243 = scalar_select %p242, %s20, 9
      %p244 = scmp.lt.s32.totalorder %s21, 0
      %s245 = scalar_select %p244, %s21, 0
      %p246 = scmp.lt.s32.totalorder %s241, 1
      %s247 = scalar_select %p246, %s241, 1
      %s248 = smul.addr %s245, 2
      %s249 = sadd.s32 %s247, %s248
      %s250 = smul.addr %s243, 2
      %s251 = sadd.s32 %s249, %s250
      %s252 = smul.addr %s251, 4
      %s253 = scalar_lea.vmem %s3, %s252
      %s254 = smul.u32 2, %s19
      %v256 = vld [vmem:[%s228] sm:$0xff]
      %v257 = vld [vmem:[%s228 + $0x8] sm:$0xf]
      %v258 = vld [vmem:[%s233] sm:$0xff]
      %v259 = vld [vmem:[%s233 + $0x8] sm:$0xff]
      %v260 = vld [vmem:[%s233 + $0x10] sm:$0xff]
      %v261 = vld [vmem:[%s233 + $0x18] sm:$0xff]
      %v262 = vld [vmem:[%s233 + $0x20] sm:$0xff]
      %v263 = vld [vmem:[%s233 + $0x28] sm:$0xff]
      %v264 = vld [vmem:[%s233 + $0x30] sm:$0xff]
      %v265 = vld [vmem:[%s233 + $0x38] sm:$0xff]
      %v266 = vld [vmem:[%s233 + $0x40] sm:$0xff]
      %v267 = vld [vmem:[%s233 + $0x48] sm:$0xff]
      %v268 = vld [vmem:[%s233 + $0x50] sm:$0xff]
      %v269 = vld [vmem:[%s233 + $0x58] sm:$0xff]
      %v270 = vld [vmem:[%s233 + $0x60] sm:$0xff]
      %v271 = vld [vmem:[%s233 + $0x68] sm:$0xff]
      %v272 = vld [vmem:[%s233 + $0x70] sm:$0xff]
      %v273 = vld [vmem:[%s233 + $0x78] sm:$0xff]
      %v274 = vld [vmem:[%s233 + $0x80] sm:$0xff]
      %v275 = vld [vmem:[%s233 + $0x88] sm:$0xff]
      %v276 = vld [vmem:[%s233 + $0x90] sm:$0xff]
      %v277 = vld [vmem:[%s233 + $0x98] sm:$0xff]
      %v278 = vld [vmem:[%s233 + $0xa0] sm:$0xff]
      %v279 = vld [vmem:[%s233 + $0xa8] sm:$0xff]
      %v280 = vld [vmem:[%s233 + $0xb0] sm:$0xff]
      %v281 = vld [vmem:[%s233 + $0xb8] sm:$0xff]
      %v282 = vld [vmem:[%s233 + $0xc0] sm:$0xff]
      %v283 = vld [vmem:[%s233 + $0xc8] sm:$0xff]
      %v284 = vld [vmem:[%s233 + $0xd0] sm:$0xff]
      %v285 = vld [vmem:[%s233 + $0xd8] sm:$0xff]
      %v286 = vld [vmem:[%s233 + $0xe0] sm:$0xff]
      %v287 = vld [vmem:[%s233 + $0xe8] sm:$0xff]
      %v288 = vld [vmem:[%s233 + $0xf0] sm:$0xff]
      %v289 = vld [vmem:[%s233 + $0xf8] sm:$0xff]
      %v290 = vld [vmem:[%s233 + $0x100] sm:$0xff]
      %v291 = vld [vmem:[%s233 + $0x108] sm:$0xff]
      %v292 = vld [vmem:[%s233 + $0x110] sm:$0xff]
      %v293 = vld [vmem:[%s233 + $0x118] sm:$0xff]
      %v294 = vld [vmem:[%s233 + $0x120] sm:$0xff]
      %v295 = vld [vmem:[%s233 + $0x128] sm:$0xff]
      %v296 = vld [vmem:[%s233 + $0x130] sm:$0xff]
      %v297 = vld [vmem:[%s233 + $0x138] sm:$0xff]
      %v298 = vld [vmem:[%s233 + $0x140] sm:$0xff]
      %v299 = vld [vmem:[%s233 + $0x148] sm:$0xff]
      %v300 = vld [vmem:[%s233 + $0x150] sm:$0xff]
      %v301 = vld [vmem:[%s233 + $0x158] sm:$0xff]
      %v302 = vld [vmem:[%s233 + $0x160] sm:$0xff]
      %v303 = vld [vmem:[%s233 + $0x168] sm:$0xff]
      %v304 = vld [vmem:[%s233 + $0x170] sm:$0xff]
      %v305 = vld [vmem:[%s233 + $0x178] sm:$0xff]
      %v306 = vld [vmem:[%s228] sm:$0xff]
      %v307 = vld [vmem:[%s228 + $0x8] sm:$0xf]
      %v308 = vld [vmem:[%s228 + $0xc] sm:$0x11]
      %v309 = vld [vmem:[%s228 + $0x14] sm:$0x1]
      %s310 = scalar_lea.vmem %s233, 384
      %v311 = vld [vmem:[%s310] sm:$0xff]
      %v312 = vld [vmem:[%s310 + $0x8] sm:$0xff]
      %v313 = vld [vmem:[%s310 + $0x10] sm:$0xff]
      %v314 = vld [vmem:[%s310 + $0x18] sm:$0xff]
      %v315 = vld [vmem:[%s310 + $0x20] sm:$0xff]
      %v316 = vld [vmem:[%s310 + $0x28] sm:$0xff]
      %v317 = vld [vmem:[%s310 + $0x30] sm:$0xff]
      %v318 = vld [vmem:[%s310 + $0x38] sm:$0xff]
      %v319 = vld [vmem:[%s310 + $0x40] sm:$0xff]
      %v320 = vld [vmem:[%s310 + $0x48] sm:$0xff]
      %v321 = vld [vmem:[%s310 + $0x50] sm:$0xff]
      %v322 = vld [vmem:[%s310 + $0x58] sm:$0xff]
      %v323 = vld [vmem:[%s310 + $0x60] sm:$0xff]
      %v324 = vld [vmem:[%s310 + $0x68] sm:$0xff]
      %v325 = vld [vmem:[%s310 + $0x70] sm:$0xff]
      %v326 = vld [vmem:[%s310 + $0x78] sm:$0xff]
      %v327 = vld [vmem:[%s310 + $0x80] sm:$0xff]
      %v328 = vld [vmem:[%s310 + $0x88] sm:$0xff]
      %v329 = vld [vmem:[%s310 + $0x90] sm:$0xff]
      %v330 = vld [vmem:[%s310 + $0x98] sm:$0xff]
      %v331 = vld [vmem:[%s310 + $0xa0] sm:$0xff]
      %v332 = vld [vmem:[%s310 + $0xa8] sm:$0xff]
      %v333 = vld [vmem:[%s310 + $0xb0] sm:$0xff]
      %v334 = vld [vmem:[%s310 + $0xb8] sm:$0xff]
      %v335 = vld [vmem:[%s310 + $0xc0] sm:$0xff]
      %v336 = vld [vmem:[%s310 + $0xc8] sm:$0xff]
      %v337 = vld [vmem:[%s310 + $0xd0] sm:$0xff]
      %v338 = vld [vmem:[%s310 + $0xd8] sm:$0xff]
      %v339 = vld [vmem:[%s310 + $0xe0] sm:$0xff]
      %v340 = vld [vmem:[%s310 + $0xe8] sm:$0xff]
      %v341 = vld [vmem:[%s310 + $0xf0] sm:$0xff]
      %v342 = vld [vmem:[%s310 + $0xf8] sm:$0xff]
      %v343 = vld [vmem:[%s310 + $0x100] sm:$0xff]
      %v344 = vld [vmem:[%s310 + $0x108] sm:$0xff]
      %v345 = vld [vmem:[%s310 + $0x110] sm:$0xff]
      %v346 = vld [vmem:[%s310 + $0x118] sm:$0xff]
      %v347 = vld [vmem:[%s310 + $0x120] sm:$0xff]
      %v348 = vld [vmem:[%s310 + $0x128] sm:$0xff]
      %v349 = vld [vmem:[%s310 + $0x130] sm:$0xff]
      %v350 = vld [vmem:[%s310 + $0x138] sm:$0xff]
      %v351 = vld [vmem:[%s310 + $0x140] sm:$0xff]
      %v352 = vld [vmem:[%s310 + $0x148] sm:$0xff]
      %v353 = vld [vmem:[%s310 + $0x150] sm:$0xff]
      %v354 = vld [vmem:[%s310 + $0x158] sm:$0xff]
      %v355 = vld [vmem:[%s310 + $0x160] sm:$0xff]
      %v356 = vld [vmem:[%s310 + $0x168] sm:$0xff]
      %v357 = vld [vmem:[%s310 + $0x170] sm:$0xff]
      %v358 = vld [vmem:[%s310 + $0x178] sm:$0xff]
      %v363 = vunpack.c.l.b16 %v306
      %v364 = vunpack.c.h.b16 %v306
      %v365 = vunpack.c.l.b16 %v307
      %v366 = vunpack.c.l.b16 %v308
      %v367 = vunpack.c.h.b16 %v308
      %v368 = vunpack.c.l.b16 %v309
      %v369 = vpack.c.b16 %v366, %v363
      %v370 = vpack.c.b16 %v367, %v364
      %v371 = vpack.c.b16 %v368, %v365
      %v373 = vshrl.u32 %v369, 16
      %v375 = vshll.u32 %v369, 16
      %v377 = vrot.slane %v375, 1
      %v378 = vor.u32 %v373, %v377
      %v380 = vshrl.u32 %v370, 16
      %v382 = vshll.u32 %v370, 16
      %v384 = vrot.slane %v382, 1
      %v385 = vor.u32 %v380, %v384
      %v387 = vshrl.u32 %v371, 16
      %v389 = vshll.u32 %v371, 16
      %v391 = vrot.slane %v389, 1
      %v392 = vor.u32 %v387, %v391
      %v444 = vunpack.c.l.b16 %v311
      %v445 = vunpack.c.h.b16 %v311
      %v446 = vunpack.c.l.b16 %v312
      %v447 = vunpack.c.h.b16 %v312
      %v448 = vunpack.c.l.b16 %v313
      %v449 = vunpack.c.h.b16 %v313
      %v450 = vunpack.c.l.b16 %v314
      %v451 = vunpack.c.h.b16 %v314
      %v452 = vunpack.c.l.b16 %v315
      %v453 = vunpack.c.h.b16 %v315
      %v454 = vunpack.c.l.b16 %v316
      %v455 = vunpack.c.h.b16 %v316
      %v456 = vunpack.c.l.b16 %v317
      %v457 = vunpack.c.h.b16 %v317
      %v458 = vunpack.c.l.b16 %v318
      %v459 = vunpack.c.h.b16 %v318
      %v460 = vunpack.c.l.b16 %v319
      %v461 = vunpack.c.h.b16 %v319
      %v462 = vunpack.c.l.b16 %v320
      %v463 = vunpack.c.h.b16 %v320
      %v464 = vunpack.c.l.b16 %v321
      %v465 = vunpack.c.h.b16 %v321
      %v466 = vunpack.c.l.b16 %v322
      %v467 = vunpack.c.h.b16 %v322
      %v468 = vunpack.c.l.b16 %v323
      %v469 = vunpack.c.h.b16 %v323
      %v470 = vunpack.c.l.b16 %v324
      %v471 = vunpack.c.h.b16 %v324
      %v472 = vunpack.c.l.b16 %v325
      %v473 = vunpack.c.h.b16 %v325
      %v474 = vunpack.c.l.b16 %v326
      %v475 = vunpack.c.h.b16 %v326
      %v476 = vunpack.c.l.b16 %v327
      %v477 = vunpack.c.h.b16 %v327
      %v478 = vunpack.c.l.b16 %v328
      %v479 = vunpack.c.h.b16 %v328
      %v480 = vunpack.c.l.b16 %v329
      %v481 = vunpack.c.h.b16 %v329
      %v482 = vunpack.c.l.b16 %v330
      %v483 = vunpack.c.h.b16 %v330
      %v484 = vunpack.c.l.b16 %v331
      %v485 = vunpack.c.h.b16 %v331
      %v486 = vunpack.c.l.b16 %v332
      %v487 = vunpack.c.h.b16 %v332
      %v488 = vunpack.c.l.b16 %v333
      %v489 = vunpack.c.h.b16 %v333
      %v490 = vunpack.c.l.b16 %v334
      %v491 = vunpack.c.h.b16 %v334
      %v492 = vunpack.c.l.b16 %v335
      %v493 = vunpack.c.h.b16 %v335
      %v494 = vunpack.c.l.b16 %v336
      %v495 = vunpack.c.h.b16 %v336
      %v496 = vunpack.c.l.b16 %v337
      %v497 = vunpack.c.h.b16 %v337
      %v498 = vunpack.c.l.b16 %v338
      %v499 = vunpack.c.h.b16 %v338
      %v500 = vunpack.c.l.b16 %v339
      %v501 = vunpack.c.h.b16 %v339
      %v502 = vunpack.c.l.b16 %v340
      %v503 = vunpack.c.h.b16 %v340
      %v504 = vunpack.c.l.b16 %v341
      %v505 = vunpack.c.h.b16 %v341
      %v506 = vunpack.c.l.b16 %v342
      %v507 = vunpack.c.h.b16 %v342
      %v508 = vunpack.c.l.b16 %v343
      %v509 = vunpack.c.h.b16 %v343
      %v510 = vunpack.c.l.b16 %v344
      %v511 = vunpack.c.h.b16 %v344
      %v512 = vunpack.c.l.b16 %v345
      %v513 = vunpack.c.h.b16 %v345
      %v514 = vunpack.c.l.b16 %v346
      %v515 = vunpack.c.h.b16 %v346
      %v516 = vunpack.c.l.b16 %v347
      %v517 = vunpack.c.h.b16 %v347
      %v518 = vunpack.c.l.b16 %v348
      %v519 = vunpack.c.h.b16 %v348
      %v520 = vunpack.c.l.b16 %v349
      %v521 = vunpack.c.h.b16 %v349
      %v522 = vunpack.c.l.b16 %v350
      %v523 = vunpack.c.h.b16 %v350
      %v524 = vunpack.c.l.b16 %v351
      %v525 = vunpack.c.h.b16 %v351
      %v526 = vunpack.c.l.b16 %v352
      %v527 = vunpack.c.h.b16 %v352
      %v528 = vunpack.c.l.b16 %v353
      %v529 = vunpack.c.h.b16 %v353
      %v530 = vunpack.c.l.b16 %v354
      %v531 = vunpack.c.h.b16 %v354
      %v532 = vunpack.c.l.b16 %v355
      %v533 = vunpack.c.h.b16 %v355
      %v534 = vunpack.c.l.b16 %v356
      %v535 = vunpack.c.h.b16 %v356
      %v536 = vunpack.c.l.b16 %v357
      %v537 = vunpack.c.h.b16 %v357
      %v538 = vunpack.c.l.b16 %v358
      %v539 = vunpack.c.h.b16 %v358
      %v540 = vpack.c.b16 %v446, %v444
      %v541 = vpack.c.b16 %v447, %v445
      %v542 = vpack.c.b16 %v450, %v448
      %v543 = vpack.c.b16 %v451, %v449
      %v544 = vpack.c.b16 %v454, %v452
      %v545 = vpack.c.b16 %v455, %v453
      %v546 = vpack.c.b16 %v458, %v456
      %v547 = vpack.c.b16 %v459, %v457
      %v548 = vpack.c.b16 %v462, %v460
      %v549 = vpack.c.b16 %v463, %v461
      %v550 = vpack.c.b16 %v466, %v464
      %v551 = vpack.c.b16 %v467, %v465
      %v552 = vpack.c.b16 %v470, %v468
      %v553 = vpack.c.b16 %v471, %v469
      %v554 = vpack.c.b16 %v474, %v472
      %v555 = vpack.c.b16 %v475, %v473
      %v556 = vpack.c.b16 %v478, %v476
      %v557 = vpack.c.b16 %v479, %v477
      %v558 = vpack.c.b16 %v482, %v480
      %v559 = vpack.c.b16 %v483, %v481
      %v560 = vpack.c.b16 %v486, %v484
      %v561 = vpack.c.b16 %v487, %v485
      %v562 = vpack.c.b16 %v490, %v488
      %v563 = vpack.c.b16 %v491, %v489
      %v564 = vpack.c.b16 %v494, %v492
      %v565 = vpack.c.b16 %v495, %v493
      %v566 = vpack.c.b16 %v498, %v496
      %v567 = vpack.c.b16 %v499, %v497
      %v568 = vpack.c.b16 %v502, %v500
      %v569 = vpack.c.b16 %v503, %v501
      %v570 = vpack.c.b16 %v506, %v504
      %v571 = vpack.c.b16 %v507, %v505
      %v572 = vpack.c.b16 %v510, %v508
      %v573 = vpack.c.b16 %v511, %v509
      %v574 = vpack.c.b16 %v514, %v512
      %v575 = vpack.c.b16 %v515, %v513
      %v576 = vpack.c.b16 %v518, %v516
      %v577 = vpack.c.b16 %v519, %v517
      %v578 = vpack.c.b16 %v522, %v520
      %v579 = vpack.c.b16 %v523, %v521
      %v580 = vpack.c.b16 %v526, %v524
      %v581 = vpack.c.b16 %v527, %v525
      %v582 = vpack.c.b16 %v530, %v528
      %v583 = vpack.c.b16 %v531, %v529
      %v584 = vpack.c.b16 %v534, %v532
      %v585 = vpack.c.b16 %v535, %v533
      %v586 = vpack.c.b16 %v538, %v536
      %v587 = vpack.c.b16 %v539, %v537
      %636 = vmatprep.subr.bf16.mxu0 %v555
      %637 = vmatpush1.bf16.msra.mxu0 %v554
      %638 = vmatprep.subr.bf16.mxu0 %v553
      %639 = vmatpush1.bf16.msra.mxu0 %v552
      %640 = vmatprep.subr.bf16.mxu0 %v551
      %641 = vmatpush1.bf16.msra.mxu0 %v550
      %642 = vmatprep.subr.bf16.mxu0 %v549
      %643 = vmatpush1.bf16.msra.mxu0 %v548
      %644 = vmatprep.subr.bf16.mxu0 %v547
      %645 = vmatpush1.bf16.msra.mxu0 %v546
      %646 = vmatprep.subr.bf16.mxu0 %v545
      %647 = vmatpush1.bf16.msra.mxu0 %v544
      %648 = vmatprep.subr.bf16.mxu0 %v543
      %649 = vmatpush1.bf16.msra.mxu0 %v542
      %650 = vmatprep.subr.bf16.mxu0 %v541
      %651 = vmatpush1.bf16.msra.mxu0 %v540
      %652 = vmatprep.subr.bf16.mxu0 %v571
      %653 = vmatpush2.bf16.msra.mxu0 %v570
      %654 = vmatprep.subr.bf16.mxu0 %v569
      %655 = vmatpush2.bf16.msra.mxu0 %v568
      %656 = vmatprep.subr.bf16.mxu0 %v567
      %657 = vmatpush2.bf16.msra.mxu0 %v566
      %658 = vmatprep.subr.bf16.mxu0 %v565
      %659 = vmatpush2.bf16.msra.mxu0 %v564
      %660 = vmatprep.subr.bf16.mxu0 %v563
      %661 = vmatpush2.bf16.msra.mxu0 %v562
      %662 = vmatprep.subr.bf16.mxu0 %v561
      %663 = vmatpush2.bf16.msra.mxu0 %v560
      %664 = vmatprep.subr.bf16.mxu0 %v559
      %665 = vmatpush2.bf16.msra.mxu0 %v558
      %666 = vmatprep.subr.bf16.mxu0 %v557
      %667 = vmatpush2.bf16.msra.mxu0 %v556
      %668 = vmatprep.mubr.bf16.mxu0 %v385
      %669 = vmatmul.mubr.bf16.gmra.mxu0 %v378
      %v670 = vpop.f32.mrf.mxu0
      %v671 = vadd.f32 0.0, %v670
      %v672 = vpop.f32.mrf.mxu0
      %v673 = vadd.f32 0.0, %v672
      %v674 = vpop.f32.mrf.mxu0
      %v675 = vpop.f32.mrf.mxu0
      %676 = vdwg.mxu0
      %677 = vmatprep.subr.bf16.mxu0 %v587
      %678 = vmatpush1.bf16.msra.mxu0 %v586
      %679 = vmatprep.subr.bf16.mxu0 %v585
      %680 = vmatpush1.bf16.msra.mxu0 %v584
      %681 = vmatprep.subr.bf16.mxu0 %v583
      %682 = vmatpush1.bf16.msra.mxu0 %v582
      %683 = vmatprep.subr.bf16.mxu0 %v581
      %684 = vmatpush1.bf16.msra.mxu0 %v580
      %685 = vmatprep.subr.bf16.mxu0 %v579
      %686 = vmatpush1.bf16.msra.mxu0 %v578
      %687 = vmatprep.subr.bf16.mxu0 %v577
      %688 = vmatpush1.bf16.msra.mxu0 %v576
      %689 = vmatprep.subr.bf16.mxu0 %v575
      %690 = vmatpush1.bf16.msra.mxu0 %v574
      %691 = vmatprep.subr.bf16.mxu0 %v573
      %692 = vmatpush1.bf16.msra.mxu0 %v572
      %693 = vmatprep.subr.bf16.mxu0 0
      %694 = vmatpush2.bf16.msra.mxu0 0
      %695 = vmatprep.subr.bf16.mxu0 0
      %696 = vmatpush2.bf16.msra.mxu0 0
      %697 = vmatprep.subr.bf16.mxu0 0
      %698 = vmatpush2.bf16.msra.mxu0 0
      %699 = vmatprep.subr.bf16.mxu0 0
      %700 = vmatpush2.bf16.msra.mxu0 0
      %701 = vmatprep.subr.bf16.mxu0 0
      %702 = vmatpush2.bf16.msra.mxu0 0
      %703 = vmatprep.subr.bf16.mxu0 0
      %704 = vmatpush2.bf16.msra.mxu0 0
      %705 = vmatprep.subr.bf16.mxu0 0
      %706 = vmatpush2.bf16.msra.mxu0 0
      %707 = vmatprep.subr.bf16.mxu0 0
      %708 = vmatpush2.bf16.msra.mxu0 0
      %709 = vmatprep.mubr.bf16.mxu0 0
      %710 = vmatmul.mubr.bf16.gmra.mxu0 %v392
      %v711 = vpop.f32.mrf.mxu0
      %v712 = vadd.f32 %v671, %v711
      %v713 = vpop.f32.mrf.mxu0
      %v714 = vadd.f32 %v673, %v713
      %v715 = vpop.f32.mrf.mxu0
      %v716 = vpop.f32.mrf.mxu0
      %717 = vdwg.mxu0
      %v720 = vunpack.c.l.b16 %v256
      %v721 = vunpack.c.h.b16 %v256
      %v722 = vunpack.c.l.b16 %v257
      %v723 = vpack.c.b16 %v720, %v720
      %v724 = vpack.c.b16 %v721, %v721
      %v725 = vpack.c.b16 %v722, %v722
      %v777 = vunpack.c.l.b16 %v258
      %v778 = vunpack.c.h.b16 %v258
      %v779 = vunpack.c.l.b16 %v259
      %v780 = vunpack.c.h.b16 %v259
      %v781 = vunpack.c.l.b16 %v260
      %v782 = vunpack.c.h.b16 %v260
      %v783 = vunpack.c.l.b16 %v261
      %v784 = vunpack.c.h.b16 %v261
      %v785 = vunpack.c.l.b16 %v262
      %v786 = vunpack.c.h.b16 %v262
      %v787 = vunpack.c.l.b16 %v263
      %v788 = vunpack.c.h.b16 %v263
      %v789 = vunpack.c.l.b16 %v264
      %v790 = vunpack.c.h.b16 %v264
      %v791 = vunpack.c.l.b16 %v265
      %v792 = vunpack.c.h.b16 %v265
      %v793 = vunpack.c.l.b16 %v266
      %v794 = vunpack.c.h.b16 %v266
      %v795 = vunpack.c.l.b16 %v267
      %v796 = vunpack.c.h.b16 %v267
      %v797 = vunpack.c.l.b16 %v268
      %v798 = vunpack.c.h.b16 %v268
      %v799 = vunpack.c.l.b16 %v269
      %v800 = vunpack.c.h.b16 %v269
      %v801 = vunpack.c.l.b16 %v270
      %v802 = vunpack.c.h.b16 %v270
      %v803 = vunpack.c.l.b16 %v271
      %v804 = vunpack.c.h.b16 %v271
      %v805 = vunpack.c.l.b16 %v272
      %v806 = vunpack.c.h.b16 %v272
      %v807 = vunpack.c.l.b16 %v273
      %v808 = vunpack.c.h.b16 %v273
      %v809 = vunpack.c.l.b16 %v274
      %v810 = vunpack.c.h.b16 %v274
      %v811 = vunpack.c.l.b16 %v275
      %v812 = vunpack.c.h.b16 %v275
      %v813 = vunpack.c.l.b16 %v276
      %v814 = vunpack.c.h.b16 %v276
      %v815 = vunpack.c.l.b16 %v277
      %v816 = vunpack.c.h.b16 %v277
      %v817 = vunpack.c.l.b16 %v278
      %v818 = vunpack.c.h.b16 %v278
      %v819 = vunpack.c.l.b16 %v279
      %v820 = vunpack.c.h.b16 %v279
      %v821 = vunpack.c.l.b16 %v280
      %v822 = vunpack.c.h.b16 %v280
      %v823 = vunpack.c.l.b16 %v281
      %v824 = vunpack.c.h.b16 %v281
      %v825 = vunpack.c.l.b16 %v282
      %v826 = vunpack.c.h.b16 %v282
      %v827 = vunpack.c.l.b16 %v283
      %v828 = vunpack.c.h.b16 %v283
      %v829 = vunpack.c.l.b16 %v284
      %v830 = vunpack.c.h.b16 %v284
      %v831 = vunpack.c.l.b16 %v285
      %v832 = vunpack.c.h.b16 %v285
      %v833 = vunpack.c.l.b16 %v286
      %v834 = vunpack.c.h.b16 %v286
      %v835 = vunpack.c.l.b16 %v287
      %v836 = vunpack.c.h.b16 %v287
      %v837 = vunpack.c.l.b16 %v288
      %v838 = vunpack.c.h.b16 %v288
      %v839 = vunpack.c.l.b16 %v289
      %v840 = vunpack.c.h.b16 %v289
      %v841 = vunpack.c.l.b16 %v290
      %v842 = vunpack.c.h.b16 %v290
      %v843 = vunpack.c.l.b16 %v291
      %v844 = vunpack.c.h.b16 %v291
      %v845 = vunpack.c.l.b16 %v292
      %v846 = vunpack.c.h.b16 %v292
      %v847 = vunpack.c.l.b16 %v293
      %v848 = vunpack.c.h.b16 %v293
      %v849 = vunpack.c.l.b16 %v294
      %v850 = vunpack.c.h.b16 %v294
      %v851 = vunpack.c.l.b16 %v295
      %v852 = vunpack.c.h.b16 %v295
      %v853 = vunpack.c.l.b16 %v296
      %v854 = vunpack.c.h.b16 %v296
      %v855 = vunpack.c.l.b16 %v297
      %v856 = vunpack.c.h.b16 %v297
      %v857 = vunpack.c.l.b16 %v298
      %v858 = vunpack.c.h.b16 %v298
      %v859 = vunpack.c.l.b16 %v299
      %v860 = vunpack.c.h.b16 %v299
      %v861 = vunpack.c.l.b16 %v300
      %v862 = vunpack.c.h.b16 %v300
      %v863 = vunpack.c.l.b16 %v301
      %v864 = vunpack.c.h.b16 %v301
      %v865 = vunpack.c.l.b16 %v302
      %v866 = vunpack.c.h.b16 %v302
      %v867 = vunpack.c.l.b16 %v303
      %v868 = vunpack.c.h.b16 %v303
      %v869 = vunpack.c.l.b16 %v304
      %v870 = vunpack.c.h.b16 %v304
      %v871 = vunpack.c.l.b16 %v305
      %v872 = vunpack.c.h.b16 %v305
      %v873 = vpack.c.b16 %v779, %v777
      %v874 = vpack.c.b16 %v780, %v778
      %v875 = vpack.c.b16 %v783, %v781
      %v876 = vpack.c.b16 %v784, %v782
      %v877 = vpack.c.b16 %v787, %v785
      %v878 = vpack.c.b16 %v788, %v786
      %v879 = vpack.c.b16 %v791, %v789
      %v880 = vpack.c.b16 %v792, %v790
      %v881 = vpack.c.b16 %v795, %v793
      %v882 = vpack.c.b16 %v796, %v794
      %v883 = vpack.c.b16 %v799, %v797
      %v884 = vpack.c.b16 %v800, %v798
      %v885 = vpack.c.b16 %v803, %v801
      %v886 = vpack.c.b16 %v804, %v802
      %v887 = vpack.c.b16 %v807, %v805
      %v888 = vpack.c.b16 %v808, %v806
      %v889 = vpack.c.b16 %v811, %v809
      %v890 = vpack.c.b16 %v812, %v810
      %v891 = vpack.c.b16 %v815, %v813
      %v892 = vpack.c.b16 %v816, %v814
      %v893 = vpack.c.b16 %v819, %v817
      %v894 = vpack.c.b16 %v820, %v818
      %v895 = vpack.c.b16 %v823, %v821
      %v896 = vpack.c.b16 %v824, %v822
      %v897 = vpack.c.b16 %v827, %v825
      %v898 = vpack.c.b16 %v828, %v826
      %v899 = vpack.c.b16 %v831, %v829
      %v900 = vpack.c.b16 %v832, %v830
      %v901 = vpack.c.b16 %v835, %v833
      %v902 = vpack.c.b16 %v836, %v834
      %v903 = vpack.c.b16 %v839, %v837
      %v904 = vpack.c.b16 %v840, %v838
      %v905 = vpack.c.b16 %v843, %v841
      %v906 = vpack.c.b16 %v844, %v842
      %v907 = vpack.c.b16 %v847, %v845
      %v908 = vpack.c.b16 %v848, %v846
      %v909 = vpack.c.b16 %v851, %v849
      %v910 = vpack.c.b16 %v852, %v850
      %v911 = vpack.c.b16 %v855, %v853
      %v912 = vpack.c.b16 %v856, %v854
      %v913 = vpack.c.b16 %v859, %v857
      %v914 = vpack.c.b16 %v860, %v858
      %v915 = vpack.c.b16 %v863, %v861
      %v916 = vpack.c.b16 %v864, %v862
      %v917 = vpack.c.b16 %v867, %v865
      %v918 = vpack.c.b16 %v868, %v866
      %v919 = vpack.c.b16 %v871, %v869
      %v920 = vpack.c.b16 %v872, %v870
      %969 = vmatprep.subr.bf16.mxu0 %v888
      %970 = vmatpush1.bf16.msra.mxu0 %v887
      %971 = vmatprep.subr.bf16.mxu0 %v886
      %972 = vmatpush1.bf16.msra.mxu0 %v885
      %973 = vmatprep.subr.bf16.mxu0 %v884
      %974 = vmatpush1.bf16.msra.mxu0 %v883
      %975 = vmatprep.subr.bf16.mxu0 %v882
      %976 = vmatpush1.bf16.msra.mxu0 %v881
      %977 = vmatprep.subr.bf16.mxu0 %v880
      %978 = vmatpush1.bf16.msra.mxu0 %v879
      %979 = vmatprep.subr.bf16.mxu0 %v878
      %980 = vmatpush1.bf16.msra.mxu0 %v877
      %981 = vmatprep.subr.bf16.mxu0 %v876
      %982 = vmatpush1.bf16.msra.mxu0 %v875
      %983 = vmatprep.subr.bf16.mxu0 %v874
      %984 = vmatpush1.bf16.msra.mxu0 %v873
      %985 = vmatprep.subr.bf16.mxu0 %v904
      %986 = vmatpush2.bf16.msra.mxu0 %v903
      %987 = vmatprep.subr.bf16.mxu0 %v902
      %988 = vmatpush2.bf16.msra.mxu0 %v901
      %989 = vmatprep.subr.bf16.mxu0 %v900
      %990 = vmatpush2.bf16.msra.mxu0 %v899
      %991 = vmatprep.subr.bf16.mxu0 %v898
      %992 = vmatpush2.bf16.msra.mxu0 %v897
      %993 = vmatprep.subr.bf16.mxu0 %v896
      %994 = vmatpush2.bf16.msra.mxu0 %v895
      %995 = vmatprep.subr.bf16.mxu0 %v894
      %996 = vmatpush2.bf16.msra.mxu0 %v893
      %997 = vmatprep.subr.bf16.mxu0 %v892
      %998 = vmatpush2.bf16.msra.mxu0 %v891
      %999 = vmatprep.subr.bf16.mxu0 %v890
      %1000 = vmatpush2.bf16.msra.mxu0 %v889
      %1001 = vmatprep.mubr.bf16.mxu0 %v724
      %1002 = vmatmul.mubr.bf16.gmra.mxu0 %v723
      %v1003 = vpop.f32.mrf.mxu0
      %v1004 = vadd.f32 %v712, %v1003
      %v1005 = vpop.f32.mrf.mxu0
      %v1006 = vadd.f32 %v714, %v1005
      %v1007 = vpop.f32.mrf.mxu0
      %v1008 = vpop.f32.mrf.mxu0
      %1009 = vdwg.mxu0
      %1010 = vmatprep.subr.bf16.mxu0 %v920
      %1011 = vmatpush1.bf16.msra.mxu0 %v919
      %1012 = vmatprep.subr.bf16.mxu0 %v918
      %1013 = vmatpush1.bf16.msra.mxu0 %v917
      %1014 = vmatprep.subr.bf16.mxu0 %v916
      %1015 = vmatpush1.bf16.msra.mxu0 %v915
      %1016 = vmatprep.subr.bf16.mxu0 %v914
      %1017 = vmatpush1.bf16.msra.mxu0 %v913
      %1018 = vmatprep.subr.bf16.mxu0 %v912
      %1019 = vmatpush1.bf16.msra.mxu0 %v911
      %1020 = vmatprep.subr.bf16.mxu0 %v910
      %1021 = vmatpush1.bf16.msra.mxu0 %v909
      %1022 = vmatprep.subr.bf16.mxu0 %v908
      %1023 = vmatpush1.bf16.msra.mxu0 %v907
      %1024 = vmatprep.subr.bf16.mxu0 %v906
      %1025 = vmatpush1.bf16.msra.mxu0 %v905
      %1026 = vmatprep.subr.bf16.mxu0 0
      %1027 = vmatpush2.bf16.msra.mxu0 0
      %1028 = vmatprep.subr.bf16.mxu0 0
      %1029 = vmatpush2.bf16.msra.mxu0 0
      %1030 = vmatprep.subr.bf16.mxu0 0
      %1031 = vmatpush2.bf16.msra.mxu0 0
      %1032 = vmatprep.subr.bf16.mxu0 0
      %1033 = vmatpush2.bf16.msra.mxu0 0
      %1034 = vmatprep.subr.bf16.mxu0 0
      %1035 = vmatpush2.bf16.msra.mxu0 0
      %1036 = vmatprep.subr.bf16.mxu0 0
      %1037 = vmatpush2.bf16.msra.mxu0 0
      %1038 = vmatprep.subr.bf16.mxu0 0
      %1039 = vmatpush2.bf16.msra.mxu0 0
      %1040 = vmatprep.subr.bf16.mxu0 0
      %1041 = vmatpush2.bf16.msra.mxu0 0
      %1042 = vmatprep.mubr.bf16.mxu0 0
      %1043 = vmatmul.mubr.bf16.gmra.mxu0 %v725
      %v1044 = vpop.f32.mrf.mxu0
      %v1045 = vadd.f32 %v1004, %v1044
      %v1046 = vpop.f32.mrf.mxu0
      %v1047 = vadd.f32 %v1006, %v1046
      %v1048 = vpop.f32.mrf.mxu0
      %v1049 = vpop.f32.mrf.mxu0
      %1050 = vdwg.mxu0
      %v1051 = vld [vmem:[%s239] ss:$8 sm:$0x3]
      %v1053 = vlaneseq
      %v1054 = vshrl.u32 %v1053, 7
      %v1055 = vsub.s32 0, %v1054
      %v1056 = vrot.slane %v1051, %v1055
      %v1057 = vlaneseq
      %v1058 = vshrl.u32 %v1057, 7
      %v1059 = vsub.s32 1, %v1058
      %v1060 = vrot.slane %v1051, %v1059
      %v1063 = vadd.f32 %v1045, %v1056
      %v1064 = vadd.f32 %v1047, %v1060
      %vm1065 = vcmp.ge.f32.partialorder %v1063, 0.0
      %vm1066 = vcmp.ge.f32.partialorder %v1064, 0.0
      %v1067 = vmul.f32 %v1063, 0.1
      %v1068 = vmul.f32 %v1064, 0.1
      %v1069 = vsel %vm1065, %v1063, %v1067
      %v1070 = vsel %vm1066, %v1064, %v1068
      %v1071 = vpack.c.bf16 %v1069, %v1069
      %v1072 = vpack.c.bf16 %v1070, %v1070
      %v1075 = vunpack.c.l.b16 %v1071
      %v1076 = vunpack.c.l.b16 %v1072
      %v1077 = vpack.c.b16 %v1076, %v1075
      %1079 = vst [vmem:[%s253] sm:$0xff] %v1077
      %s1080 = smul.u32 2, %s19
      %p1081 = scmp.lt.s32.totalorder %s20, 9
      %s1082 = scalar_select %p1081, %s20, 9
      %p1083 = scmp.lt.s32.totalorder %s21, 0
      %s1084 = scalar_select %p1083, %s21, 0
      %p1085 = scmp.lt.s32.totalorder %s1080, 1
      %s1086 = scalar_select %p1085, %s1080, 1
      %s1087 = smul.addr %s1084, 2
      %s1088 = sadd.s32 %s1086, %s1087
      %s1089 = smul.addr %s1082, 2
      %s1090 = sadd.s32 %s1088, %s1089
      %s1091 = smul.addr %s1090, 4
      %s1092 = scalar_lea.vmem %s3, %s1091
      // Predicated region
      $region33: #{mpd_forward.8} parent=31 // pred_check
        %p1093 = pneg %p133
      $region34: #{mpd_forward.8} parent=31 // pred_check_branch
        %1095 = sbr.rel (%p1093) target = $region36
      $region35: #{mpd_forward.8} parent=31 // pred_region
        %s1096 = smul.u32 2, %s19
      $region36: #{mpd_forward.8} parent=31 // pred_fallthru
        _
    $region32: #{mpd_forward.8} parent=5 // pred_fallthru
      _
    %p1097 = scmp.le.s32.totalorder 2, %s9
    // Predicated region
    $region37: #{mpd_forward.8} parent=5 // pred_check
      %p1098 = pneg %p1097
    $region38: #{mpd_forward.8} parent=5 // pred_check_branch
      %1100 = sbr.rel (%p1098) target = $region40
    $region39: #{mpd_forward.8} parent=5 // pred_region
      %s1101 = ssub.s32 %s9, 2
      // Predicated region
      $region41: #{mpd_forward.8} parent=39 // pred_check
        %p1102 = pneg %p139
      $region42: #{mpd_forward.8} parent=39 // pred_check_branch
        %1104 = sbr.rel (%p1102) target = $region44
      $region43: #{mpd_forward.8} parent=39 // pred_region
        %s1105 = smul.u32 2, %s22
        %p1106 = scmp.lt.s32.totalorder %s23, 9
        %s1107 = scalar_select %p1106, %s23, 9
        %p1108 = scmp.lt.s32.totalorder %s24, 0
        %s1109 = scalar_select %p1108, %s24, 0
        %p1110 = scmp.lt.s32.totalorder %s1105, 1
        %s1111 = scalar_select %p1110, %s1105, 1
        %s1112 = smul.addr %s1109, 2
        %s1113 = sadd.s32 %s1111, %s1112
        %s1114 = smul.addr %s1107, 2
        %s1115 = sadd.s32 %s1113, %s1114
        %s1116 = smul.addr %s1115, 4
        %s1117 = scalar_lea.vmem %s3, %s1116
      $region44: #{mpd_forward.8} parent=39 // pred_fallthru
        _
    $region40: #{mpd_forward.8} parent=5 // pred_fallthru
      _
  $region6: #{mpd_forward.8} parent=0 // loop_footer
    %s13 = sadd.s32 1, %s9
  $region7: #{mpd_forward.8} parent=0 // loop_footer_branch
    %8 = sbr.rel target = $region3
  $region8: #{mpd_forward.8} parent=0 // loop_exit
    _

// kernel: mpd_forward.9
$region0: #{mpd_forward.9}
  #allocation0 [shape = 'u32[]', space=smem, size = 0x4, offset = 0x4, fixed_abs, tag = 'smem constant byte address 0x4 - core index']
  #allocation1 [shape = 'u32[144,128]{1,0:T(1,128)}', space=vmem, size = 0x12000, scoped, tag = 'internal scratch']
  %s0 = inlined_call_operand.vmem [shape: bf16[10,16,256], index: 0, kind: input, shape index: {}]
  %s1 = inlined_call_operand.vmem [shape: bf16[5,256,256], index: 1, kind: input, shape index: {}]
  %s2 = inlined_call_operand.vmem [shape: f32[8,256], index: 2, kind: input, shape index: {}]
  %s3 = inlined_call_operand.vmem [shape: bf16[10,8,256], index: 3, kind: output, shape index: {}]
  %s4 = sld [smem:[#allocation0]]
  $region45: #{mpd_forward.9} parent=0
    _
  %s6 = ssub.s32 1, %s4
  %s7 = scalar_select 0, %s6, %s4
  loop: start=0, step=1, limit=12
  $region2: #{mpd_forward.9} parent=0 // loop_pre_header
    _
  $region3: #{mpd_forward.9} parent=0 // loop_header
    %s9 = sphi 0, %s13
    %p10 = scmp.ge.s32.totalorder %s9, 12
    %s16 = sphi 0, %s35
    %s17 = sphi 0, %s31
    %s18 = sphi 0, %s27
    %s19 = sphi 0, %s16
    %s20 = sphi 0, %s17
    %s21 = sphi 0, %s18
    %s22 = sphi 0, %s19
    %s23 = sphi 0, %s20
    %s24 = sphi 0, %s21
    %s38 = sphi 0, %s40
    %s41 = sphi 0, %s38
    %s42 = sphi 0, %s41
    %s58 = sphi 0, %s42
    %s64 = sphi 0, %s66
    %s67 = sphi 0, %s64
    %s68 = sphi 0, %s67
    %s84 = sphi 0, %s68
    %s90 = sphi 0, %s92
    %s93 = sphi 0, %s90
    %s94 = sphi 0, %s93
    %s110 = sphi 0, %s94
    %s120 = sphi 0, %s122
    %s123 = sphi 0, %s120
    %s124 = sphi 0, %s123
    %s140 = sphi 0, %s124
  $region4: #{mpd_forward.9} parent=0 // loop_header_branch
    %12 = sbr.rel (%p10) target = $region8
  $region5: #{mpd_forward.9} parent=0 // loop_body
    %s14 = ssub.s32 %s9, 1
    %s15 = ssub.s32 %s9, 2
    %s25 = sadd.s32 1, %s18
    %p26 = scmp.ge.s32.totalorder %s25, 1
    %s27 = scalar_select %p26, 0, %s25
    %s28 = sadd.s32 1, %s17
    %s29 = scalar_select %p26, %s28, %s17
    %p30 = scmp.ge.s32.totalorder %s29, 10
    %s31 = scalar_select %p30, 0, %s29
    %s32 = sadd.s32 1, %s16
    %s33 = scalar_select %p30, %s32, %s16
    %p34 = scmp.ge.s32.totalorder %s33, 1
    %s35 = scalar_select %p34, 0, %s33
    %s36 = ssub.s32 %s17, %s31
    %p37 = scmp.eq.s32.totalorder %s36, 0
    %s39 = sadd.s32 %s38, 1
    %s40 = scalar_select %p37, %s38, %s39
    %p43 = pneg %p37
    %p44 = scmp.eq.s32.totalorder %s9, 9
    %p45 = por %p43, %p44
    %p46 = scmp.ne.s32.totalorder %s38, %s41
    %p47 = scmp.eq.s32.totalorder %s9, 0
    %p48 = por %p46, %p47
    %p49 = scmp.ne.s32.totalorder %s38, %s41
    %p50 = scmp.eq.s32.totalorder %s14, 9
    %p51 = por %p49, %p50
    %p52 = scmp.ne.s32.totalorder %s41, %s42
    %p53 = scmp.eq.s32.totalorder %s14, 0
    %p54 = por %p52, %p53
    %p55 = scmp.ne.s32.totalorder %s41, %s42
    %p56 = scmp.eq.s32.totalorder %s15, 9
    %p57 = por %p55, %p56
    %p59 = scmp.ne.s32.totalorder %s42, %s58
    %p60 = scmp.eq.s32.totalorder %s15, 0
    %p61 = por %p59, %p60
    %s62 = ssub.s32 %s16, %s35
    %p63 = scmp.eq.s32.totalorder %s62, 0
    %s65 = sadd.s32 %s64, 1
    %s66 = scalar_select %p63, %s64, %s65
    %p69 = pneg %p63
    %p70 = scmp.eq.s32.totalorder %s9, 9
    %p71 = por %p69, %p70
    %p72 = scmp.ne.s32.totalorder %s64, %s67
    %p73 = scmp.eq.s32.totalorder %s9, 0
    %p74 = por %p72, %p73
    %p75 = scmp.ne.s32.totalorder %s64, %s67
    %p76 = scmp.eq.s32.totalorder %s14, 9
    %p77 = por %p75, %p76
    %p78 = scmp.ne.s32.totalorder %s67, %s68
    %p79 = scmp.eq.s32.totalorder %s14, 0
    %p80 = por %p78, %p79
    %p81 = scmp.ne.s32.totalorder %s67, %s68
    %p82 = scmp.eq.s32.totalorder %s15, 9
    %p83 = por %p81, %p82
    %p85 = scmp.ne.s32.totalorder %s68, %s84
    %p86 = scmp.eq.s32.totalorder %s15, 0
    %p87 = por %p85, %p86
    %s88 = ssub.s32 %s16, %s35
    %p89 = scmp.eq.s32.totalorder %s88, 0
    %s91 = sadd.s32 %s90, 1
    %s92 = scalar_select %p89, %s90, %s91
    %p95 = pneg %p89
    %p96 = scmp.eq.s32.totalorder %s9, 9
    %p97 = por %p95, %p96
    %p98 = scmp.ne.s32.totalorder %s90, %s93
    %p99 = scmp.eq.s32.totalorder %s9, 0
    %p100 = por %p98, %p99
    %p101 = scmp.ne.s32.totalorder %s90, %s93
    %p102 = scmp.eq.s32.totalorder %s14, 9
    %p103 = por %p101, %p102
    %p104 = scmp.ne.s32.totalorder %s93, %s94
    %p105 = scmp.eq.s32.totalorder %s14, 0
    %p106 = por %p104, %p105
    %p107 = scmp.ne.s32.totalorder %s93, %s94
    %p108 = scmp.eq.s32.totalorder %s15, 9
    %p109 = por %p107, %p108
    %p111 = scmp.ne.s32.totalorder %s94, %s110
    %p112 = scmp.eq.s32.totalorder %s15, 0
    %p113 = por %p111, %p112
    %s114 = ssub.s32 %s17, %s31
    %s115 = ssub.s32 %s18, %s27
    %s116 = sor.u32 %s114, %s115
    %s117 = ssub.s32 %s16, %s35
    %s118 = sor.u32 %s116, %s117
    %p119 = scmp.eq.s32.totalorder %s118, 0
    %s121 = sadd.s32 %s120, 1
    %s122 = scalar_select %p119, %s120, %s121
    %p125 = pneg %p119
    %p126 = scmp.eq.s32.totalorder %s9, 9
    %p127 = por %p125, %p126
    %p128 = scmp.ne.s32.totalorder %s120, %s123
    %p129 = scmp.eq.s32.totalorder %s9, 0
    %p130 = por %p128, %p129
    %p131 = scmp.ne.s32.totalorder %s120, %s123
    %p132 = scmp.eq.s32.totalorder %s14, 9
    %p133 = por %p131, %p132
    %p134 = scmp.ne.s32.totalorder %s123, %s124
    %p135 = scmp.eq.s32.totalorder %s14, 0
    %p136 = por %p134, %p135
    %p137 = scmp.ne.s32.totalorder %s123, %s124
    %p138 = scmp.eq.s32.totalorder %s15, 9
    %p139 = por %p137, %p138
    %p141 = scmp.ne.s32.totalorder %s124, %s140
    %p142 = scmp.eq.s32.totalorder %s15, 0
    %p143 = por %p141, %p142
    %p144 = scmp.le.s32.totalorder 1, %s9
    %p145 = scmp.lt.s32.totalorder %s9, 11
    %p146 = pnand %p144, %p145
    %p147 = pneg %p146
    // Predicated region
    $region9: #{mpd_forward.9} parent=5 // pred_check
      _
    $region10: #{mpd_forward.9} parent=5 // pred_check_branch
      %149 = sbr.rel (%p146) target = $region12
    $region11: #{mpd_forward.9} parent=5 // pred_region
      %s150 = ssub.s32 %s9, 1
      // Predicated region
      $region13: #{mpd_forward.9} parent=11 // pred_check
        %p151 = pneg %p80
      $region14: #{mpd_forward.9} parent=11 // pred_check_branch
        %153 = sbr.rel (%p151) target = $region16
      $region15: #{mpd_forward.9} parent=11 // pred_region
        %s154 = smul.u32 2, %s19
        %p155 = scmp.lt.s32.totalorder %s154, 1
        %s156 = scalar_select %p155, %s154, 1
        %s157 = smul.addr %s156, 4
        %s158 = scalar_lea.vmem %s1, %s157
        %s159 = smul.u32 2, %s19
      $region16: #{mpd_forward.9} parent=11 // pred_fallthru
        _
      // Predicated region
      $region17: #{mpd_forward.9} parent=11 // pred_check
        %p160 = pneg %p106
      $region18: #{mpd_forward.9} parent=11 // pred_check_branch
        %162 = sbr.rel (%p160) target = $region20
      $region19: #{mpd_forward.9} parent=11 // pred_region
        %s163 = smul.u32 2, %s19
        %p164 = scmp.lt.s32.totalorder %s163, 1
        %s165 = scalar_select %p164, %s163, 1
        %s166 = smul.addr %s165, 8
        %s167 = scalar_lea.vmem %s2, %s166
        %s168 = smul.u32 2, %s19
      $region20: #{mpd_forward.9} parent=11 // pred_fallthru
        _
    $region12: #{mpd_forward.9} parent=5 // pred_fallthru
      _
    %p169 = scmp.lt.s32.totalorder %s9, 10
    // Predicated region
    $region21: #{mpd_forward.9} parent=5 // pred_check
      %p170 = pneg %p169
    $region22: #{mpd_forward.9} parent=5 // pred_check_branch
      %172 = sbr.rel (%p170) target = $region24
    $region23: #{mpd_forward.9} parent=5 // pred_region
      // Predicated region
      $region25: #{mpd_forward.9} parent=23 // pred_check
        %p173 = pneg %p48
      $region26: #{mpd_forward.9} parent=23 // pred_check_branch
        %175 = sbr.rel (%p173) target = $region28
      $region27: #{mpd_forward.9} parent=23 // pred_region
        %p176 = scmp.lt.s32.totalorder %s17, 9
        %s177 = scalar_select %p176, %s17, 9
        %s178 = smul.addr %s177, 4
        %s179 = smul.addr %s178, 4
        %s180 = scalar_lea.vmem %s0, %s179
      $region28: #{mpd_forward.9} parent=23 // pred_fallthru
        _
    $region24: #{mpd_forward.9} parent=5 // pred_fallthru
      _
    %p181 = scmp.le.s32.totalorder 1, %s9
    %p182 = scmp.lt.s32.totalorder %s9, 11
    %p183 = pnand %p181, %p182
    %p184 = pneg %p183
    // Predicated region
    $region29: #{mpd_forward.9} parent=5 // pred_check
      _
    $region30: #{mpd_forward.9} parent=5 // pred_check_branch
      %186 = sbr.rel (%p183) target = $region32
    $region31: #{mpd_forward.9} parent=5 // pred_region
      %s187 = ssub.s32 %s9, 1
      %p188 = scmp.lt.s32.totalorder %s20, 9
      %s189 = scalar_select %p188, %s20, 9
      %s190 = smul.addr %s189, 4
      %s191 = smul.addr %s190, 4
      %s192 = scalar_lea.vmem %s0, %s191
      %p193 = pneg %p54
      %p194 = pneg %p51
      %s195 = smul.u32 2, %s19
      %p196 = scmp.lt.s32.totalorder %s195, 1
      %s197 = scalar_select %p196, %s195, 1
      %s198 = smul.addr %s197, 4
      %s199 = scalar_lea.vmem %s1, %s198
      %p200 = pneg %p80
      %p201 = pneg %p77
      %s202 = smul.u32 2, %s19
      %p203 = scmp.lt.s32.totalorder %s202, 1
      %s204 = scalar_select %p203, %s202, 1
      %s205 = smul.addr %s204, 8
      %s206 = scalar_lea.vmem %s2, %s205
      %p207 = pneg %p106
      %p208 = pneg %p103
      %p209 = pneg %p136
      %p210 = pneg %p133
      %s211 = smul.u32 2, %s19
      %p212 = scmp.lt.s32.totalorder %s20, 9
      %s213 = scalar_select %p212, %s20, 9
      %p214 = scmp.lt.s32.totalorder %s21, 0
      %s215 = scalar_select %p214, %s21, 0
      %p216 = scmp.lt.s32.totalorder %s211, 1
      %s217 = scalar_select %p216, %s211, 1
      %s218 = smul.addr %s215, 2
      %s219 = sadd.s32 %s217, %s218
      %s220 = smul.addr %s213, 2
      %s221 = sadd.s32 %s219, %s220
      %s222 = smul.addr %s221, 4
      %s223 = scalar_lea.vmem %s3, %s222
      %p224 = scmp.lt.s32.totalorder %s20, 9
      %s225 = scalar_select %p224, %s20, 9
      %s226 = smul.addr %s225, 4
      %s227 = smul.addr %s226, 4
      %s228 = scalar_lea.vmem %s0, %s227
      %s229 = smul.u32 2, %s19
      %p230 = scmp.lt.s32.totalorder %s229, 1
      %s231 = scalar_select %p230, %s229, 1
      %s232 = smul.addr %s231, 4
      %s233 = scalar_lea.vmem %s1, %s232
      %s234 = smul.u32 2, %s19
      %s235 = smul.u32 2, %s19
      %p236 = scmp.lt.s32.totalorder %s235, 1
      %s237 = scalar_select %p236, %s235, 1
      %s238 = smul.addr %s237, 8
      %s239 = scalar_lea.vmem %s2, %s238
      %s240 = smul.u32 2, %s19
      %s241 = smul.u32 2, %s19
      %p242 = scmp.lt.s32.totalorder %s20, 9
      %s243 = scalar_select %p242, %s20, 9
      %p244 = scmp.lt.s32.totalorder %s21, 0
      %s245 = scalar_select %p244, %s21, 0
      %p246 = scmp.lt.s32.totalorder %s241, 1
      %s247 = scalar_select %p246, %s241, 1
      %s248 = smul.addr %s245, 2
      %s249 = sadd.s32 %s247, %s248
      %s250 = smul.addr %s243, 2
      %s251 = sadd.s32 %s249, %s250
      %s252 = smul.addr %s251, 4
      %s253 = scalar_lea.vmem %s3, %s252
      %s254 = smul.u32 2, %s19
      %v255 = vld [vmem:[%s228] sm:$0xff]
      %v256 = vld [vmem:[%s233] sm:$0xff]
      %v257 = vld [vmem:[%s233 + $0x8] sm:$0xff]
      %v258 = vld [vmem:[%s233 + $0x10] sm:$0xff]
      %v259 = vld [vmem:[%s233 + $0x18] sm:$0xff]
      %v260 = vld [vmem:[%s233 + $0x20] sm:$0xff]
      %v261 = vld [vmem:[%s233 + $0x28] sm:$0xff]
      %v262 = vld [vmem:[%s233 + $0x30] sm:$0xff]
      %v263 = vld [vmem:[%s233 + $0x38] sm:$0xff]
      %v264 = vld [vmem:[%s233 + $0x40] sm:$0xff]
      %v265 = vld [vmem:[%s233 + $0x48] sm:$0xff]
      %v266 = vld [vmem:[%s233 + $0x50] sm:$0xff]
      %v267 = vld [vmem:[%s233 + $0x58] sm:$0xff]
      %v268 = vld [vmem:[%s233 + $0x60] sm:$0xff]
      %v269 = vld [vmem:[%s233 + $0x68] sm:$0xff]
      %v270 = vld [vmem:[%s233 + $0x70] sm:$0xff]
      %v271 = vld [vmem:[%s233 + $0x78] sm:$0xff]
      %v272 = vld [vmem:[%s233 + $0x80] sm:$0xff]
      %v273 = vld [vmem:[%s233 + $0x88] sm:$0xff]
      %v274 = vld [vmem:[%s233 + $0x90] sm:$0xff]
      %v275 = vld [vmem:[%s233 + $0x98] sm:$0xff]
      %v276 = vld [vmem:[%s233 + $0xa0] sm:$0xff]
      %v277 = vld [vmem:[%s233 + $0xa8] sm:$0xff]
      %v278 = vld [vmem:[%s233 + $0xb0] sm:$0xff]
      %v279 = vld [vmem:[%s233 + $0xb8] sm:$0xff]
      %v280 = vld [vmem:[%s233 + $0xc0] sm:$0xff]
      %v281 = vld [vmem:[%s233 + $0xc8] sm:$0xff]
      %v282 = vld [vmem:[%s233 + $0xd0] sm:$0xff]
      %v283 = vld [vmem:[%s233 + $0xd8] sm:$0xff]
      %v284 = vld [vmem:[%s233 + $0xe0] sm:$0xff]
      %v285 = vld [vmem:[%s233 + $0xe8] sm:$0xff]
      %v286 = vld [vmem:[%s233 + $0xf0] sm:$0xff]
      %v287 = vld [vmem:[%s233 + $0xf8] sm:$0xff]
      %v288 = vld [vmem:[%s228] sm:$0xff]
      %v289 = vld [vmem:[%s228 + $0x8] sm:$0x11]
      %s290 = scalar_lea.vmem %s233, 256
      %v291 = vld [vmem:[%s290] sm:$0xff]
      %v292 = vld [vmem:[%s290 + $0x8] sm:$0xff]
      %v293 = vld [vmem:[%s290 + $0x10] sm:$0xff]
      %v294 = vld [vmem:[%s290 + $0x18] sm:$0xff]
      %v295 = vld [vmem:[%s290 + $0x20] sm:$0xff]
      %v296 = vld [vmem:[%s290 + $0x28] sm:$0xff]
      %v297 = vld [vmem:[%s290 + $0x30] sm:$0xff]
      %v298 = vld [vmem:[%s290 + $0x38] sm:$0xff]
      %v299 = vld [vmem:[%s290 + $0x40] sm:$0xff]
      %v300 = vld [vmem:[%s290 + $0x48] sm:$0xff]
      %v301 = vld [vmem:[%s290 + $0x50] sm:$0xff]
      %v302 = vld [vmem:[%s290 + $0x58] sm:$0xff]
      %v303 = vld [vmem:[%s290 + $0x60] sm:$0xff]
      %v304 = vld [vmem:[%s290 + $0x68] sm:$0xff]
      %v305 = vld [vmem:[%s290 + $0x70] sm:$0xff]
      %v306 = vld [vmem:[%s290 + $0x78] sm:$0xff]
      %v307 = vld [vmem:[%s290 + $0x80] sm:$0xff]
      %v308 = vld [vmem:[%s290 + $0x88] sm:$0xff]
      %v309 = vld [vmem:[%s290 + $0x90] sm:$0xff]
      %v310 = vld [vmem:[%s290 + $0x98] sm:$0xff]
      %v311 = vld [vmem:[%s290 + $0xa0] sm:$0xff]
      %v312 = vld [vmem:[%s290 + $0xa8] sm:$0xff]
      %v313 = vld [vmem:[%s290 + $0xb0] sm:$0xff]
      %v314 = vld [vmem:[%s290 + $0xb8] sm:$0xff]
      %v315 = vld [vmem:[%s290 + $0xc0] sm:$0xff]
      %v316 = vld [vmem:[%s290 + $0xc8] sm:$0xff]
      %v317 = vld [vmem:[%s290 + $0xd0] sm:$0xff]
      %v318 = vld [vmem:[%s290 + $0xd8] sm:$0xff]
      %v319 = vld [vmem:[%s290 + $0xe0] sm:$0xff]
      %v320 = vld [vmem:[%s290 + $0xe8] sm:$0xff]
      %v321 = vld [vmem:[%s290 + $0xf0] sm:$0xff]
      %v322 = vld [vmem:[%s290 + $0xf8] sm:$0xff]
      %v325 = vunpack.c.l.b16 %v288
      %v326 = vunpack.c.h.b16 %v288
      %v327 = vunpack.c.l.b16 %v289
      %v328 = vunpack.c.h.b16 %v289
      %v329 = vpack.c.b16 %v327, %v325
      %v330 = vpack.c.b16 %v328, %v326
      %v332 = vshrl.u32 %v329, 16
      %v334 = vshll.u32 %v329, 16
      %v336 = vrot.slane %v334, 1
      %v337 = vor.u32 %v332, %v336
      %v339 = vshrl.u32 %v330, 16
      %v341 = vshll.u32 %v330, 16
      %v343 = vrot.slane %v341, 1
      %v344 = vor.u32 %v339, %v343
      %v379 = vunpack.c.l.b16 %v291
      %v380 = vunpack.c.h.b16 %v291
      %v381 = vunpack.c.l.b16 %v292
      %v382 = vunpack.c.h.b16 %v292
      %v383 = vunpack.c.l.b16 %v293
      %v384 = vunpack.c.h.b16 %v293
      %v385 = vunpack.c.l.b16 %v294
      %v386 = vunpack.c.h.b16 %v294
      %v387 = vunpack.c.l.b16 %v295
      %v388 = vunpack.c.h.b16 %v295
      %v389 = vunpack.c.l.b16 %v296
      %v390 = vunpack.c.h.b16 %v296
      %v391 = vunpack.c.l.b16 %v297
      %v392 = vunpack.c.h.b16 %v297
      %v393 = vunpack.c.l.b16 %v298
      %v394 = vunpack.c.h.b16 %v298
      %v395 = vunpack.c.l.b16 %v299
      %v396 = vunpack.c.h.b16 %v299
      %v397 = vunpack.c.l.b16 %v300
      %v398 = vunpack.c.h.b16 %v300
      %v399 = vunpack.c.l.b16 %v301
      %v400 = vunpack.c.h.b16 %v301
      %v401 = vunpack.c.l.b16 %v302
      %v402 = vunpack.c.h.b16 %v302
      %v403 = vunpack.c.l.b16 %v303
      %v404 = vunpack.c.h.b16 %v303
      %v405 = vunpack.c.l.b16 %v304
      %v406 = vunpack.c.h.b16 %v304
      %v407 = vunpack.c.l.b16 %v305
      %v408 = vunpack.c.h.b16 %v305
      %v409 = vunpack.c.l.b16 %v306
      %v410 = vunpack.c.h.b16 %v306
      %v411 = vunpack.c.l.b16 %v307
      %v412 = vunpack.c.h.b16 %v307
      %v413 = vunpack.c.l.b16 %v308
      %v414 = vunpack.c.h.b16 %v308
      %v415 = vunpack.c.l.b16 %v309
      %v416 = vunpack.c.h.b16 %v309
      %v417 = vunpack.c.l.b16 %v310
      %v418 = vunpack.c.h.b16 %v310
      %v419 = vunpack.c.l.b16 %v311
      %v420 = vunpack.c.h.b16 %v311
      %v421 = vunpack.c.l.b16 %v312
      %v422 = vunpack.c.h.b16 %v312
      %v423 = vunpack.c.l.b16 %v313
      %v424 = vunpack.c.h.b16 %v313
      %v425 = vunpack.c.l.b16 %v314
      %v426 = vunpack.c.h.b16 %v314
      %v427 = vunpack.c.l.b16 %v315
      %v428 = vunpack.c.h.b16 %v315
      %v429 = vunpack.c.l.b16 %v316
      %v430 = vunpack.c.h.b16 %v316
      %v431 = vunpack.c.l.b16 %v317
      %v432 = vunpack.c.h.b16 %v317
      %v433 = vunpack.c.l.b16 %v318
      %v434 = vunpack.c.h.b16 %v318
      %v435 = vunpack.c.l.b16 %v319
      %v436 = vunpack.c.h.b16 %v319
      %v437 = vunpack.c.l.b16 %v320
      %v438 = vunpack.c.h.b16 %v320
      %v439 = vunpack.c.l.b16 %v321
      %v440 = vunpack.c.h.b16 %v321
      %v441 = vunpack.c.l.b16 %v322
      %v442 = vunpack.c.h.b16 %v322
      %v443 = vpack.c.b16 %v381, %v379
      %v444 = vpack.c.b16 %v382, %v380
      %v445 = vpack.c.b16 %v385, %v383
      %v446 = vpack.c.b16 %v386, %v384
      %v447 = vpack.c.b16 %v389, %v387
      %v448 = vpack.c.b16 %v390, %v388
      %v449 = vpack.c.b16 %v393, %v391
      %v450 = vpack.c.b16 %v394, %v392
      %v451 = vpack.c.b16 %v397, %v395
      %v452 = vpack.c.b16 %v398, %v396
      %v453 = vpack.c.b16 %v401, %v399
      %v454 = vpack.c.b16 %v402, %v400
      %v455 = vpack.c.b16 %v405, %v403
      %v456 = vpack.c.b16 %v406, %v404
      %v457 = vpack.c.b16 %v409, %v407
      %v458 = vpack.c.b16 %v410, %v408
      %v459 = vpack.c.b16 %v413, %v411
      %v460 = vpack.c.b16 %v414, %v412
      %v461 = vpack.c.b16 %v417, %v415
      %v462 = vpack.c.b16 %v418, %v416
      %v463 = vpack.c.b16 %v421, %v419
      %v464 = vpack.c.b16 %v422, %v420
      %v465 = vpack.c.b16 %v425, %v423
      %v466 = vpack.c.b16 %v426, %v424
      %v467 = vpack.c.b16 %v429, %v427
      %v468 = vpack.c.b16 %v430, %v428
      %v469 = vpack.c.b16 %v433, %v431
      %v470 = vpack.c.b16 %v434, %v432
      %v471 = vpack.c.b16 %v437, %v435
      %v472 = vpack.c.b16 %v438, %v436
      %v473 = vpack.c.b16 %v441, %v439
      %v474 = vpack.c.b16 %v442, %v440
      %507 = vmatprep.subr.bf16.mxu0 %v458
      %508 = vmatpush1.bf16.msra.mxu0 %v457
      %509 = vmatprep.subr.bf16.mxu0 %v456
      %510 = vmatpush1.bf16.msra.mxu0 %v455
      %511 = vmatprep.subr.bf16.mxu0 %v454
      %512 = vmatpush1.bf16.msra.mxu0 %v453
      %513 = vmatprep.subr.bf16.mxu0 %v452
      %514 = vmatpush1.bf16.msra.mxu0 %v451
      %515 = vmatprep.subr.bf16.mxu0 %v450
      %516 = vmatpush1.bf16.msra.mxu0 %v449
      %517 = vmatprep.subr.bf16.mxu0 %v448
      %518 = vmatpush1.bf16.msra.mxu0 %v447
      %519 = vmatprep.subr.bf16.mxu0 %v446
      %520 = vmatpush1.bf16.msra.mxu0 %v445
      %521 = vmatprep.subr.bf16.mxu0 %v444
      %522 = vmatpush1.bf16.msra.mxu0 %v443
      %523 = vmatprep.subr.bf16.mxu0 %v474
      %524 = vmatpush2.bf16.msra.mxu0 %v473
      %525 = vmatprep.subr.bf16.mxu0 %v472
      %526 = vmatpush2.bf16.msra.mxu0 %v471
      %527 = vmatprep.subr.bf16.mxu0 %v470
      %528 = vmatpush2.bf16.msra.mxu0 %v469
      %529 = vmatprep.subr.bf16.mxu0 %v468
      %530 = vmatpush2.bf16.msra.mxu0 %v467
      %531 = vmatprep.subr.bf16.mxu0 %v466
      %532 = vmatpush2.bf16.msra.mxu0 %v465
      %533 = vmatprep.subr.bf16.mxu0 %v464
      %534 = vmatpush2.bf16.msra.mxu0 %v463
      %535 = vmatprep.subr.bf16.mxu0 %v462
      %536 = vmatpush2.bf16.msra.mxu0 %v461
      %537 = vmatprep.subr.bf16.mxu0 %v460
      %538 = vmatpush2.bf16.msra.mxu0 %v459
      %539 = vmatprep.mubr.bf16.mxu0 %v344
      %540 = vmatmul.mubr.bf16.gmra.mxu0 %v337
      %v541 = vpop.f32.mrf.mxu0
      %v542 = vadd.f32 0.0, %v541
      %v543 = vpop.f32.mrf.mxu0
      %v544 = vadd.f32 0.0, %v543
      %v545 = vpop.f32.mrf.mxu0
      %v546 = vpop.f32.mrf.mxu0
      %547 = vdwg.mxu0
      %v549 = vunpack.c.l.b16 %v255
      %v550 = vunpack.c.h.b16 %v255
      %v551 = vpack.c.b16 %v549, %v549
      %v552 = vpack.c.b16 %v550, %v550
      %v587 = vunpack.c.l.b16 %v256
      %v588 = vunpack.c.h.b16 %v256
      %v589 = vunpack.c.l.b16 %v257
      %v590 = vunpack.c.h.b16 %v257
      %v591 = vunpack.c.l.b16 %v258
      %v592 = vunpack.c.h.b16 %v258
      %v593 = vunpack.c.l.b16 %v259
      %v594 = vunpack.c.h.b16 %v259
      %v595 = vunpack.c.l.b16 %v260
      %v596 = vunpack.c.h.b16 %v260
      %v597 = vunpack.c.l.b16 %v261
      %v598 = vunpack.c.h.b16 %v261
      %v599 = vunpack.c.l.b16 %v262
      %v600 = vunpack.c.h.b16 %v262
      %v601 = vunpack.c.l.b16 %v263
      %v602 = vunpack.c.h.b16 %v263
      %v603 = vunpack.c.l.b16 %v264
      %v604 = vunpack.c.h.b16 %v264
      %v605 = vunpack.c.l.b16 %v265
      %v606 = vunpack.c.h.b16 %v265
      %v607 = vunpack.c.l.b16 %v266
      %v608 = vunpack.c.h.b16 %v266
      %v609 = vunpack.c.l.b16 %v267
      %v610 = vunpack.c.h.b16 %v267
      %v611 = vunpack.c.l.b16 %v268
      %v612 = vunpack.c.h.b16 %v268
      %v613 = vunpack.c.l.b16 %v269
      %v614 = vunpack.c.h.b16 %v269
      %v615 = vunpack.c.l.b16 %v270
      %v616 = vunpack.c.h.b16 %v270
      %v617 = vunpack.c.l.b16 %v271
      %v618 = vunpack.c.h.b16 %v271
      %v619 = vunpack.c.l.b16 %v272
      %v620 = vunpack.c.h.b16 %v272
      %v621 = vunpack.c.l.b16 %v273
      %v622 = vunpack.c.h.b16 %v273
      %v623 = vunpack.c.l.b16 %v274
      %v624 = vunpack.c.h.b16 %v274
      %v625 = vunpack.c.l.b16 %v275
      %v626 = vunpack.c.h.b16 %v275
      %v627 = vunpack.c.l.b16 %v276
      %v628 = vunpack.c.h.b16 %v276
      %v629 = vunpack.c.l.b16 %v277
      %v630 = vunpack.c.h.b16 %v277
      %v631 = vunpack.c.l.b16 %v278
      %v632 = vunpack.c.h.b16 %v278
      %v633 = vunpack.c.l.b16 %v279
      %v634 = vunpack.c.h.b16 %v279
      %v635 = vunpack.c.l.b16 %v280
      %v636 = vunpack.c.h.b16 %v280
      %v637 = vunpack.c.l.b16 %v281
      %v638 = vunpack.c.h.b16 %v281
      %v639 = vunpack.c.l.b16 %v282
      %v640 = vunpack.c.h.b16 %v282
      %v641 = vunpack.c.l.b16 %v283
      %v642 = vunpack.c.h.b16 %v283
      %v643 = vunpack.c.l.b16 %v284
      %v644 = vunpack.c.h.b16 %v284
      %v645 = vunpack.c.l.b16 %v285
      %v646 = vunpack.c.h.b16 %v285
      %v647 = vunpack.c.l.b16 %v286
      %v648 = vunpack.c.h.b16 %v286
      %v649 = vunpack.c.l.b16 %v287
      %v650 = vunpack.c.h.b16 %v287
      %v651 = vpack.c.b16 %v589, %v587
      %v652 = vpack.c.b16 %v590, %v588
      %v653 = vpack.c.b16 %v593, %v591
      %v654 = vpack.c.b16 %v594, %v592
      %v655 = vpack.c.b16 %v597, %v595
      %v656 = vpack.c.b16 %v598, %v596
      %v657 = vpack.c.b16 %v601, %v599
      %v658 = vpack.c.b16 %v602, %v600
      %v659 = vpack.c.b16 %v605, %v603
      %v660 = vpack.c.b16 %v606, %v604
      %v661 = vpack.c.b16 %v609, %v607
      %v662 = vpack.c.b16 %v610, %v608
      %v663 = vpack.c.b16 %v613, %v611
      %v664 = vpack.c.b16 %v614, %v612
      %v665 = vpack.c.b16 %v617, %v615
      %v666 = vpack.c.b16 %v618, %v616
      %v667 = vpack.c.b16 %v621, %v619
      %v668 = vpack.c.b16 %v622, %v620
      %v669 = vpack.c.b16 %v625, %v623
      %v670 = vpack.c.b16 %v626, %v624
      %v671 = vpack.c.b16 %v629, %v627
      %v672 = vpack.c.b16 %v630, %v628
      %v673 = vpack.c.b16 %v633, %v631
      %v674 = vpack.c.b16 %v634, %v632
      %v675 = vpack.c.b16 %v637, %v635
      %v676 = vpack.c.b16 %v638, %v636
      %v677 = vpack.c.b16 %v641, %v639
      %v678 = vpack.c.b16 %v642, %v640
      %v679 = vpack.c.b16 %v645, %v643
      %v680 = vpack.c.b16 %v646, %v644
      %v681 = vpack.c.b16 %v649, %v647
      %v682 = vpack.c.b16 %v650, %v648
      %715 = vmatprep.subr.bf16.mxu0 %v666
      %716 = vmatpush1.bf16.msra.mxu0 %v665
      %717 = vmatprep.subr.bf16.mxu0 %v664
      %718 = vmatpush1.bf16.msra.mxu0 %v663
      %719 = vmatprep.subr.bf16.mxu0 %v662
      %720 = vmatpush1.bf16.msra.mxu0 %v661
      %721 = vmatprep.subr.bf16.mxu0 %v660
      %722 = vmatpush1.bf16.msra.mxu0 %v659
      %723 = vmatprep.subr.bf16.mxu0 %v658
      %724 = vmatpush1.bf16.msra.mxu0 %v657
      %725 = vmatprep.subr.bf16.mxu0 %v656
      %726 = vmatpush1.bf16.msra.mxu0 %v655
      %727 = vmatprep.subr.bf16.mxu0 %v654
      %728 = vmatpush1.bf16.msra.mxu0 %v653
      %729 = vmatprep.subr.bf16.mxu0 %v652
      %730 = vmatpush1.bf16.msra.mxu0 %v651
      %731 = vmatprep.subr.bf16.mxu0 %v682
      %732 = vmatpush2.bf16.msra.mxu0 %v681
      %733 = vmatprep.subr.bf16.mxu0 %v680
      %734 = vmatpush2.bf16.msra.mxu0 %v679
      %735 = vmatprep.subr.bf16.mxu0 %v678
      %736 = vmatpush2.bf16.msra.mxu0 %v677
      %737 = vmatprep.subr.bf16.mxu0 %v676
      %738 = vmatpush2.bf16.msra.mxu0 %v675
      %739 = vmatprep.subr.bf16.mxu0 %v674
      %740 = vmatpush2.bf16.msra.mxu0 %v673
      %741 = vmatprep.subr.bf16.mxu0 %v672
      %742 = vmatpush2.bf16.msra.mxu0 %v671
      %743 = vmatprep.subr.bf16.mxu0 %v670
      %744 = vmatpush2.bf16.msra.mxu0 %v669
      %745 = vmatprep.subr.bf16.mxu0 %v668
      %746 = vmatpush2.bf16.msra.mxu0 %v667
      %747 = vmatprep.mubr.bf16.mxu0 %v552
      %748 = vmatmul.mubr.bf16.gmra.mxu0 %v551
      %v749 = vpop.f32.mrf.mxu0
      %v750 = vadd.f32 %v542, %v749
      %v751 = vpop.f32.mrf.mxu0
      %v752 = vadd.f32 %v544, %v751
      %v753 = vpop.f32.mrf.mxu0
      %v754 = vpop.f32.mrf.mxu0
      %755 = vdwg.mxu0
      %v756 = vld [vmem:[%s228] sm:$0xee]
      %s757 = scalar_lea.vmem %s233, 512
      %v758 = vld [vmem:[%s757] sm:$0xff]
      %v759 = vld [vmem:[%s757 + $0x8] sm:$0xff]
      %v760 = vld [vmem:[%s757 + $0x10] sm:$0xff]
      %v761 = vld [vmem:[%s757 + $0x18] sm:$0xff]
      %v762 = vld [vmem:[%s757 + $0x20] sm:$0xff]
      %v763 = vld [vmem:[%s757 + $0x28] sm:$0xff]
      %v764 = vld [vmem:[%s757 + $0x30] sm:$0xff]
      %v765 = vld [vmem:[%s757 + $0x38] sm:$0xff]
      %v766 = vld [vmem:[%s757 + $0x40] sm:$0xff]
      %v767 = vld [vmem:[%s757 + $0x48] sm:$0xff]
      %v768 = vld [vmem:[%s757 + $0x50] sm:$0xff]
      %v769 = vld [vmem:[%s757 + $0x58] sm:$0xff]
      %v770 = vld [vmem:[%s757 + $0x60] sm:$0xff]
      %v771 = vld [vmem:[%s757 + $0x68] sm:$0xff]
      %v772 = vld [vmem:[%s757 + $0x70] sm:$0xff]
      %v773 = vld [vmem:[%s757 + $0x78] sm:$0xff]
      %v774 = vld [vmem:[%s757 + $0x80] sm:$0xff]
      %v775 = vld [vmem:[%s757 + $0x88] sm:$0xff]
      %v776 = vld [vmem:[%s757 + $0x90] sm:$0xff]
      %v777 = vld [vmem:[%s757 + $0x98] sm:$0xff]
      %v778 = vld [vmem:[%s757 + $0xa0] sm:$0xff]
      %v779 = vld [vmem:[%s757 + $0xa8] sm:$0xff]
      %v780 = vld [vmem:[%s757 + $0xb0] sm:$0xff]
      %v781 = vld [vmem:[%s757 + $0xb8] sm:$0xff]
      %v782 = vld [vmem:[%s757 + $0xc0] sm:$0xff]
      %v783 = vld [vmem:[%s757 + $0xc8] sm:$0xff]
      %v784 = vld [vmem:[%s757 + $0xd0] sm:$0xff]
      %v785 = vld [vmem:[%s757 + $0xd8] sm:$0xff]
      %v786 = vld [vmem:[%s757 + $0xe0] sm:$0xff]
      %v787 = vld [vmem:[%s757 + $0xe8] sm:$0xff]
      %v788 = vld [vmem:[%s757 + $0xf0] sm:$0xff]
      %v789 = vld [vmem:[%s757 + $0xf8] sm:$0xff]
      %v791 = vunpack.c.l.b16 %v756
      %v792 = vunpack.c.h.b16 %v756
      %v793 = vpack.c.b16 %v327, %v791
      %v794 = vpack.c.b16 %v328, %v792
      %v795 = vrot.slane %v793, 1
      %v796 = vrot.slane %v794, 1
      %v831 = vunpack.c.l.b16 %v758
      %v832 = vunpack.c.h.b16 %v758
      %v833 = vunpack.c.l.b16 %v759
      %v834 = vunpack.c.h.b16 %v759
      %v835 = vunpack.c.l.b16 %v760
      %v836 = vunpack.c.h.b16 %v760
      %v837 = vunpack.c.l.b16 %v761
      %v838 = vunpack.c.h.b16 %v761
      %v839 = vunpack.c.l.b16 %v762
      %v840 = vunpack.c.h.b16 %v762
      %v841 = vunpack.c.l.b16 %v763
      %v842 = vunpack.c.h.b16 %v763
      %v843 = vunpack.c.l.b16 %v764
      %v844 = vunpack.c.h.b16 %v764
      %v845 = vunpack.c.l.b16 %v765
      %v846 = vunpack.c.h.b16 %v765
      %v847 = vunpack.c.l.b16 %v766
      %v848 = vunpack.c.h.b16 %v766
      %v849 = vunpack.c.l.b16 %v767
      %v850 = vunpack.c.h.b16 %v767
      %v851 = vunpack.c.l.b16 %v768
      %v852 = vunpack.c.h.b16 %v768
      %v853 = vunpack.c.l.b16 %v769
      %v854 = vunpack.c.h.b16 %v769
      %v855 = vunpack.c.l.b16 %v770
      %v856 = vunpack.c.h.b16 %v770
      %v857 = vunpack.c.l.b16 %v771
      %v858 = vunpack.c.h.b16 %v771
      %v859 = vunpack.c.l.b16 %v772
      %v860 = vunpack.c.h.b16 %v772
      %v861 = vunpack.c.l.b16 %v773
      %v862 = vunpack.c.h.b16 %v773
      %v863 = vunpack.c.l.b16 %v774
      %v864 = vunpack.c.h.b16 %v774
      %v865 = vunpack.c.l.b16 %v775
      %v866 = vunpack.c.h.b16 %v775
      %v867 = vunpack.c.l.b16 %v776
      %v868 = vunpack.c.h.b16 %v776
      %v869 = vunpack.c.l.b16 %v777
      %v870 = vunpack.c.h.b16 %v777
      %v871 = vunpack.c.l.b16 %v778
      %v872 = vunpack.c.h.b16 %v778
      %v873 = vunpack.c.l.b16 %v779
      %v874 = vunpack.c.h.b16 %v779
      %v875 = vunpack.c.l.b16 %v780
      %v876 = vunpack.c.h.b16 %v780
      %v877 = vunpack.c.l.b16 %v781
      %v878 = vunpack.c.h.b16 %v781
      %v879 = vunpack.c.l.b16 %v782
      %v880 = vunpack.c.h.b16 %v782
      %v881 = vunpack.c.l.b16 %v783
      %v882 = vunpack.c.h.b16 %v783
      %v883 = vunpack.c.l.b16 %v784
      %v884 = vunpack.c.h.b16 %v784
      %v885 = vunpack.c.l.b16 %v785
      %v886 = vunpack.c.h.b16 %v785
      %v887 = vunpack.c.l.b16 %v786
      %v888 = vunpack.c.h.b16 %v786
      %v889 = vunpack.c.l.b16 %v787
      %v890 = vunpack.c.h.b16 %v787
      %v891 = vunpack.c.l.b16 %v788
      %v892 = vunpack.c.h.b16 %v788
      %v893 = vunpack.c.l.b16 %v789
      %v894 = vunpack.c.h.b16 %v789
      %v895 = vpack.c.b16 %v833, %v831
      %v896 = vpack.c.b16 %v834, %v832
      %v897 = vpack.c.b16 %v837, %v835
      %v898 = vpack.c.b16 %v838, %v836
      %v899 = vpack.c.b16 %v841, %v839
      %v900 = vpack.c.b16 %v842, %v840
      %v901 = vpack.c.b16 %v845, %v843
      %v902 = vpack.c.b16 %v846, %v844
      %v903 = vpack.c.b16 %v849, %v847
      %v904 = vpack.c.b16 %v850, %v848
      %v905 = vpack.c.b16 %v853, %v851
      %v906 = vpack.c.b16 %v854, %v852
      %v907 = vpack.c.b16 %v857, %v855
      %v908 = vpack.c.b16 %v858, %v856
      %v909 = vpack.c.b16 %v861, %v859
      %v910 = vpack.c.b16 %v862, %v860
      %v911 = vpack.c.b16 %v865, %v863
      %v912 = vpack.c.b16 %v866, %v864
      %v913 = vpack.c.b16 %v869, %v867
      %v914 = vpack.c.b16 %v870, %v868
      %v915 = vpack.c.b16 %v873, %v871
      %v916 = vpack.c.b16 %v874, %v872
      %v917 = vpack.c.b16 %v877, %v875
      %v918 = vpack.c.b16 %v878, %v876
      %v919 = vpack.c.b16 %v881, %v879
      %v920 = vpack.c.b16 %v882, %v880
      %v921 = vpack.c.b16 %v885, %v883
      %v922 = vpack.c.b16 %v886, %v884
      %v923 = vpack.c.b16 %v889, %v887
      %v924 = vpack.c.b16 %v890, %v888
      %v925 = vpack.c.b16 %v893, %v891
      %v926 = vpack.c.b16 %v894, %v892
      %959 = vmatprep.subr.bf16.mxu0 %v910
      %960 = vmatpush1.bf16.msra.mxu0 %v909
      %961 = vmatprep.subr.bf16.mxu0 %v908
      %962 = vmatpush1.bf16.msra.mxu0 %v907
      %963 = vmatprep.subr.bf16.mxu0 %v906
      %964 = vmatpush1.bf16.msra.mxu0 %v905
      %965 = vmatprep.subr.bf16.mxu0 %v904
      %966 = vmatpush1.bf16.msra.mxu0 %v903
      %967 = vmatprep.subr.bf16.mxu0 %v902
      %968 = vmatpush1.bf16.msra.mxu0 %v901
      %969 = vmatprep.subr.bf16.mxu0 %v900
      %970 = vmatpush1.bf16.msra.mxu0 %v899
      %971 = vmatprep.subr.bf16.mxu0 %v898
      %972 = vmatpush1.bf16.msra.mxu0 %v897
      %973 = vmatprep.subr.bf16.mxu0 %v896
      %974 = vmatpush1.bf16.msra.mxu0 %v895
      %975 = vmatprep.subr.bf16.mxu0 %v926
      %976 = vmatpush2.bf16.msra.mxu0 %v925
      %977 = vmatprep.subr.bf16.mxu0 %v924
      %978 = vmatpush2.bf16.msra.mxu0 %v923
      %979 = vmatprep.subr.bf16.mxu0 %v922
      %980 = vmatpush2.bf16.msra.mxu0 %v921
      %981 = vmatprep.subr.bf16.mxu0 %v920
      %982 = vmatpush2.bf16.msra.mxu0 %v919
      %983 = vmatprep.subr.bf16.mxu0 %v918
      %984 = vmatpush2.bf16.msra.mxu0 %v917
      %985 = vmatprep.subr.bf16.mxu0 %v916
      %986 = vmatpush2.bf16.msra.mxu0 %v915
      %987 = vmatprep.subr.bf16.mxu0 %v914
      %988 = vmatpush2.bf16.msra.mxu0 %v913
      %989 = vmatprep.subr.bf16.mxu0 %v912
      %990 = vmatpush2.bf16.msra.mxu0 %v911
      %991 = vmatprep.mubr.bf16.mxu0 %v796
      %992 = vmatmul.mubr.bf16.gmra.mxu0 %v795
      %v993 = vpop.f32.mrf.mxu0
      %v994 = vadd.f32 0.0, %v993
      %v995 = vpop.f32.mrf.mxu0
      %v996 = vadd.f32 0.0, %v995
      %v997 = vpop.f32.mrf.mxu0
      %v998 = vpop.f32.mrf.mxu0
      %999 = vdwg.mxu0
      %v1000 = vadd.f32 %v750, %v994
      %v1001 = vadd.f32 %v752, %v996
      %v1002 = vld [vmem:[%s228 + $0x8] sm:$0x33]
      %s1003 = scalar_lea.vmem %s233, 768
      %v1004 = vld [vmem:[%s1003] sm:$0xff]
      %v1005 = vld [vmem:[%s1003 + $0x8] sm:$0xff]
      %v1006 = vld [vmem:[%s1003 + $0x10] sm:$0xff]
      %v1007 = vld [vmem:[%s1003 + $0x18] sm:$0xff]
      %v1008 = vld [vmem:[%s1003 + $0x20] sm:$0xff]
      %v1009 = vld [vmem:[%s1003 + $0x28] sm:$0xff]
      %v1010 = vld [vmem:[%s1003 + $0x30] sm:$0xff]
      %v1011 = vld [vmem:[%s1003 + $0x38] sm:$0xff]
      %v1012 = vld [vmem:[%s1003 + $0x40] sm:$0xff]
      %v1013 = vld [vmem:[%s1003 + $0x48] sm:$0xff]
      %v1014 = vld [vmem:[%s1003 + $0x50] sm:$0xff]
      %v1015 = vld [vmem:[%s1003 + $0x58] sm:$0xff]
      %v1016 = vld [vmem:[%s1003 + $0x60] sm:$0xff]
      %v1017 = vld [vmem:[%s1003 + $0x68] sm:$0xff]
      %v1018 = vld [vmem:[%s1003 + $0x70] sm:$0xff]
      %v1019 = vld [vmem:[%s1003 + $0x78] sm:$0xff]
      %v1020 = vld [vmem:[%s1003 + $0x80] sm:$0xff]
      %v1021 = vld [vmem:[%s1003 + $0x88] sm:$0xff]
      %v1022 = vld [vmem:[%s1003 + $0x90] sm:$0xff]
      %v1023 = vld [vmem:[%s1003 + $0x98] sm:$0xff]
      %v1024 = vld [vmem:[%s1003 + $0xa0] sm:$0xff]
      %v1025 = vld [vmem:[%s1003 + $0xa8] sm:$0xff]
      %v1026 = vld [vmem:[%s1003 + $0xb0] sm:$0xff]
      %v1027 = vld [vmem:[%s1003 + $0xb8] sm:$0xff]
      %v1028 = vld [vmem:[%s1003 + $0xc0] sm:$0xff]
      %v1029 = vld [vmem:[%s1003 + $0xc8] sm:$0xff]
      %v1030 = vld [vmem:[%s1003 + $0xd0] sm:$0xff]
      %v1031 = vld [vmem:[%s1003 + $0xd8] sm:$0xff]
      %v1032 = vld [vmem:[%s1003 + $0xe0] sm:$0xff]
      %v1033 = vld [vmem:[%s1003 + $0xe8] sm:$0xff]
      %v1034 = vld [vmem:[%s1003 + $0xf0] sm:$0xff]
      %v1035 = vld [vmem:[%s1003 + $0xf8] sm:$0xff]
      %v1037 = vunpack.c.l.b16 %v1002
      %v1038 = vunpack.c.h.b16 %v1002
      %v1039 = vpack.c.b16 %v1037, %v791
      %v1040 = vpack.c.b16 %v1038, %v792
      %v1042 = vshrl.u32 %v1039, 16
      %v1044 = vrot.slane %v1042, 1
      %v1045 = vshll.u32 %v1039, 16
      %v1047 = vrot.slane %v1045, 2
      %v1048 = vor.u32 %v1044, %v1047
      %v1050 = vshrl.u32 %v1040, 16
      %v1052 = vrot.slane %v1050, 1
      %v1053 = vshll.u32 %v1040, 16
      %v1055 = vrot.slane %v1053, 2
      %v1056 = vor.u32 %v1052, %v1055
      %v1091 = vunpack.c.l.b16 %v1004
      %v1092 = vunpack.c.h.b16 %v1004
      %v1093 = vunpack.c.l.b16 %v1005
      %v1094 = vunpack.c.h.b16 %v1005
      %v1095 = vunpack.c.l.b16 %v1006
      %v1096 = vunpack.c.h.b16 %v1006
      %v1097 = vunpack.c.l.b16 %v1007
      %v1098 = vunpack.c.h.b16 %v1007
      %v1099 = vunpack.c.l.b16 %v1008
      %v1100 = vunpack.c.h.b16 %v1008
      %v1101 = vunpack.c.l.b16 %v1009
      %v1102 = vunpack.c.h.b16 %v1009
      %v1103 = vunpack.c.l.b16 %v1010
      %v1104 = vunpack.c.h.b16 %v1010
      %v1105 = vunpack.c.l.b16 %v1011
      %v1106 = vunpack.c.h.b16 %v1011
      %v1107 = vunpack.c.l.b16 %v1012
      %v1108 = vunpack.c.h.b16 %v1012
      %v1109 = vunpack.c.l.b16 %v1013
      %v1110 = vunpack.c.h.b16 %v1013
      %v1111 = vunpack.c.l.b16 %v1014
      %v1112 = vunpack.c.h.b16 %v1014
      %v1113 = vunpack.c.l.b16 %v1015
      %v1114 = vunpack.c.h.b16 %v1015
      %v1115 = vunpack.c.l.b16 %v1016
      %v1116 = vunpack.c.h.b16 %v1016
      %v1117 = vunpack.c.l.b16 %v1017
      %v1118 = vunpack.c.h.b16 %v1017
      %v1119 = vunpack.c.l.b16 %v1018
      %v1120 = vunpack.c.h.b16 %v1018
      %v1121 = vunpack.c.l.b16 %v1019
      %v1122 = vunpack.c.h.b16 %v1019
      %v1123 = vunpack.c.l.b16 %v1020
      %v1124 = vunpack.c.h.b16 %v1020
      %v1125 = vunpack.c.l.b16 %v1021
      %v1126 = vunpack.c.h.b16 %v1021
      %v1127 = vunpack.c.l.b16 %v1022
      %v1128 = vunpack.c.h.b16 %v1022
      %v1129 = vunpack.c.l.b16 %v1023
      %v1130 = vunpack.c.h.b16 %v1023
      %v1131 = vunpack.c.l.b16 %v1024
      %v1132 = vunpack.c.h.b16 %v1024
      %v1133 = vunpack.c.l.b16 %v1025
      %v1134 = vunpack.c.h.b16 %v1025
      %v1135 = vunpack.c.l.b16 %v1026
      %v1136 = vunpack.c.h.b16 %v1026
      %v1137 = vunpack.c.l.b16 %v1027
      %v1138 = vunpack.c.h.b16 %v1027
      %v1139 = vunpack.c.l.b16 %v1028
      %v1140 = vunpack.c.h.b16 %v1028
      %v1141 = vunpack.c.l.b16 %v1029
      %v1142 = vunpack.c.h.b16 %v1029
      %v1143 = vunpack.c.l.b16 %v1030
      %v1144 = vunpack.c.h.b16 %v1030
      %v1145 = vunpack.c.l.b16 %v1031
      %v1146 = vunpack.c.h.b16 %v1031
      %v1147 = vunpack.c.l.b16 %v1032
      %v1148 = vunpack.c.h.b16 %v1032
      %v1149 = vunpack.c.l.b16 %v1033
      %v1150 = vunpack.c.h.b16 %v1033
      %v1151 = vunpack.c.l.b16 %v1034
      %v1152 = vunpack.c.h.b16 %v1034
      %v1153 = vunpack.c.l.b16 %v1035
      %v1154 = vunpack.c.h.b16 %v1035
      %v1155 = vpack.c.b16 %v1093, %v1091
      %v1156 = vpack.c.b16 %v1094, %v1092
      %v1157 = vpack.c.b16 %v1097, %v1095
      %v1158 = vpack.c.b16 %v1098, %v1096
      %v1159 = vpack.c.b16 %v1101, %v1099
      %v1160 = vpack.c.b16 %v1102, %v1100
      %v1161 = vpack.c.b16 %v1105, %v1103
      %v1162 = vpack.c.b16 %v1106, %v1104
      %v1163 = vpack.c.b16 %v1109, %v1107
      %v1164 = vpack.c.b16 %v1110, %v1108
      %v1165 = vpack.c.b16 %v1113, %v1111
      %v1166 = vpack.c.b16 %v1114, %v1112
      %v1167 = vpack.c.b16 %v1117, %v1115
      %v1168 = vpack.c.b16 %v1118, %v1116
      %v1169 = vpack.c.b16 %v1121, %v1119
      %v1170 = vpack.c.b16 %v1122, %v1120
      %v1171 = vpack.c.b16 %v1125, %v1123
      %v1172 = vpack.c.b16 %v1126, %v1124
      %v1173 = vpack.c.b16 %v1129, %v1127
      %v1174 = vpack.c.b16 %v1130, %v1128
      %v1175 = vpack.c.b16 %v1133, %v1131
      %v1176 = vpack.c.b16 %v1134, %v1132
      %v1177 = vpack.c.b16 %v1137, %v1135
      %v1178 = vpack.c.b16 %v1138, %v1136
      %v1179 = vpack.c.b16 %v1141, %v1139
      %v1180 = vpack.c.b16 %v1142, %v1140
      %v1181 = vpack.c.b16 %v1145, %v1143
      %v1182 = vpack.c.b16 %v1146, %v1144
      %v1183 = vpack.c.b16 %v1149, %v1147
      %v1184 = vpack.c.b16 %v1150, %v1148
      %v1185 = vpack.c.b16 %v1153, %v1151
      %v1186 = vpack.c.b16 %v1154, %v1152
      %1219 = vmatprep.subr.bf16.mxu0 %v1170
      %1220 = vmatpush1.bf16.msra.mxu0 %v1169
      %1221 = vmatprep.subr.bf16.mxu0 %v1168
      %1222 = vmatpush1.bf16.msra.mxu0 %v1167
      %1223 = vmatprep.subr.bf16.mxu0 %v1166
      %1224 = vmatpush1.bf16.msra.mxu0 %v1165
      %1225 = vmatprep.subr.bf16.mxu0 %v1164
      %1226 = vmatpush1.bf16.msra.mxu0 %v1163
      %1227 = vmatprep.subr.bf16.mxu0 %v1162
      %1228 = vmatpush1.bf16.msra.mxu0 %v1161
      %1229 = vmatprep.subr.bf16.mxu0 %v1160
      %1230 = vmatpush1.bf16.msra.mxu0 %v1159
      %1231 = vmatprep.subr.bf16.mxu0 %v1158
      %1232 = vmatpush1.bf16.msra.mxu0 %v1157
      %1233 = vmatprep.subr.bf16.mxu0 %v1156
      %1234 = vmatpush1.bf16.msra.mxu0 %v1155
      %1235 = vmatprep.subr.bf16.mxu0 %v1186
      %1236 = vmatpush2.bf16.msra.mxu0 %v1185
      %1237 = vmatprep.subr.bf16.mxu0 %v1184
      %1238 = vmatpush2.bf16.msra.mxu0 %v1183
      %1239 = vmatprep.subr.bf16.mxu0 %v1182
      %1240 = vmatpush2.bf16.msra.mxu0 %v1181
      %1241 = vmatprep.subr.bf16.mxu0 %v1180
      %1242 = vmatpush2.bf16.msra.mxu0 %v1179
      %1243 = vmatprep.subr.bf16.mxu0 %v1178
      %1244 = vmatpush2.bf16.msra.mxu0 %v1177
      %1245 = vmatprep.subr.bf16.mxu0 %v1176
      %1246 = vmatpush2.bf16.msra.mxu0 %v1175
      %1247 = vmatprep.subr.bf16.mxu0 %v1174
      %1248 = vmatpush2.bf16.msra.mxu0 %v1173
      %1249 = vmatprep.subr.bf16.mxu0 %v1172
      %1250 = vmatpush2.bf16.msra.mxu0 %v1171
      %1251 = vmatprep.mubr.bf16.mxu0 %v1056
      %1252 = vmatmul.mubr.bf16.gmra.mxu0 %v1048
      %v1253 = vpop.f32.mrf.mxu0
      %v1254 = vadd.f32 0.0, %v1253
      %v1255 = vpop.f32.mrf.mxu0
      %v1256 = vadd.f32 0.0, %v1255
      %v1257 = vpop.f32.mrf.mxu0
      %v1258 = vpop.f32.mrf.mxu0
      %1259 = vdwg.mxu0
      %v1260 = vadd.f32 %v1000, %v1254
      %v1261 = vadd.f32 %v1001, %v1256
      %v1262 = vld [vmem:[%s228] sm:$0xcc]
      %s1263 = scalar_lea.vmem %s233, 1024
      %v1264 = vld [vmem:[%s1263] sm:$0xff]
      %v1265 = vld [vmem:[%s1263 + $0x8] sm:$0xff]
      %v1266 = vld [vmem:[%s1263 + $0x10] sm:$0xff]
      %v1267 = vld [vmem:[%s1263 + $0x18] sm:$0xff]
      %v1268 = vld [vmem:[%s1263 + $0x20] sm:$0xff]
      %v1269 = vld [vmem:[%s1263 + $0x28] sm:$0xff]
      %v1270 = vld [vmem:[%s1263 + $0x30] sm:$0xff]
      %v1271 = vld [vmem:[%s1263 + $0x38] sm:$0xff]
      %v1272 = vld [vmem:[%s1263 + $0x40] sm:$0xff]
      %v1273 = vld [vmem:[%s1263 + $0x48] sm:$0xff]
      %v1274 = vld [vmem:[%s1263 + $0x50] sm:$0xff]
      %v1275 = vld [vmem:[%s1263 + $0x58] sm:$0xff]
      %v1276 = vld [vmem:[%s1263 + $0x60] sm:$0xff]
      %v1277 = vld [vmem:[%s1263 + $0x68] sm:$0xff]
      %v1278 = vld [vmem:[%s1263 + $0x70] sm:$0xff]
      %v1279 = vld [vmem:[%s1263 + $0x78] sm:$0xff]
      %v1280 = vld [vmem:[%s1263 + $0x80] sm:$0xff]
      %v1281 = vld [vmem:[%s1263 + $0x88] sm:$0xff]
      %v1282 = vld [vmem:[%s1263 + $0x90] sm:$0xff]
      %v1283 = vld [vmem:[%s1263 + $0x98] sm:$0xff]
      %v1284 = vld [vmem:[%s1263 + $0xa0] sm:$0xff]
      %v1285 = vld [vmem:[%s1263 + $0xa8] sm:$0xff]
      %v1286 = vld [vmem:[%s1263 + $0xb0] sm:$0xff]
      %v1287 = vld [vmem:[%s1263 + $0xb8] sm:$0xff]
      %v1288 = vld [vmem:[%s1263 + $0xc0] sm:$0xff]
      %v1289 = vld [vmem:[%s1263 + $0xc8] sm:$0xff]
      %v1290 = vld [vmem:[%s1263 + $0xd0] sm:$0xff]
      %v1291 = vld [vmem:[%s1263 + $0xd8] sm:$0xff]
      %v1292 = vld [vmem:[%s1263 + $0xe0] sm:$0xff]
      %v1293 = vld [vmem:[%s1263 + $0xe8] sm:$0xff]
      %v1294 = vld [vmem:[%s1263 + $0xf0] sm:$0xff]
      %v1295 = vld [vmem:[%s1263 + $0xf8] sm:$0xff]
      %v1297 = vunpack.c.l.b16 %v1262
      %v1298 = vunpack.c.h.b16 %v1262
      %v1299 = vpack.c.b16 %v1037, %v1297
      %v1300 = vpack.c.b16 %v1038, %v1298
      %v1301 = vrot.slane %v1299, 2
      %v1302 = vrot.slane %v1300, 2
      %v1337 = vunpack.c.l.b16 %v1264
      %v1338 = vunpack.c.h.b16 %v1264
      %v1339 = vunpack.c.l.b16 %v1265
      %v1340 = vunpack.c.h.b16 %v1265
      %v1341 = vunpack.c.l.b16 %v1266
      %v1342 = vunpack.c.h.b16 %v1266
      %v1343 = vunpack.c.l.b16 %v1267
      %v1344 = vunpack.c.h.b16 %v1267
      %v1345 = vunpack.c.l.b16 %v1268
      %v1346 = vunpack.c.h.b16 %v1268
      %v1347 = vunpack.c.l.b16 %v1269
      %v1348 = vunpack.c.h.b16 %v1269
      %v1349 = vunpack.c.l.b16 %v1270
      %v1350 = vunpack.c.h.b16 %v1270
      %v1351 = vunpack.c.l.b16 %v1271
      %v1352 = vunpack.c.h.b16 %v1271
      %v1353 = vunpack.c.l.b16 %v1272
      %v1354 = vunpack.c.h.b16 %v1272
      %v1355 = vunpack.c.l.b16 %v1273
      %v1356 = vunpack.c.h.b16 %v1273
      %v1357 = vunpack.c.l.b16 %v1274
      %v1358 = vunpack.c.h.b16 %v1274
      %v1359 = vunpack.c.l.b16 %v1275
      %v1360 = vunpack.c.h.b16 %v1275
      %v1361 = vunpack.c.l.b16 %v1276
      %v1362 = vunpack.c.h.b16 %v1276
      %v1363 = vunpack.c.l.b16 %v1277
      %v1364 = vunpack.c.h.b16 %v1277
      %v1365 = vunpack.c.l.b16 %v1278
      %v1366 = vunpack.c.h.b16 %v1278
      %v1367 = vunpack.c.l.b16 %v1279
      %v1368 = vunpack.c.h.b16 %v1279
      %v1369 = vunpack.c.l.b16 %v1280
      %v1370 = vunpack.c.h.b16 %v1280
      %v1371 = vunpack.c.l.b16 %v1281
      %v1372 = vunpack.c.h.b16 %v1281
      %v1373 = vunpack.c.l.b16 %v1282
      %v1374 = vunpack.c.h.b16 %v1282
      %v1375 = vunpack.c.l.b16 %v1283
      %v1376 = vunpack.c.h.b16 %v1283
      %v1377 = vunpack.c.l.b16 %v1284
      %v1378 = vunpack.c.h.b16 %v1284
      %v1379 = vunpack.c.l.b16 %v1285
      %v1380 = vunpack.c.h.b16 %v1285
      %v1381 = vunpack.c.l.b16 %v1286
      %v1382 = vunpack.c.h.b16 %v1286
      %v1383 = vunpack.c.l.b16 %v1287
      %v1384 = vunpack.c.h.b16 %v1287
      %v1385 = vunpack.c.l.b16 %v1288
      %v1386 = vunpack.c.h.b16 %v1288
      %v1387 = vunpack.c.l.b16 %v1289
      %v1388 = vunpack.c.h.b16 %v1289
      %v1389 = vunpack.c.l.b16 %v1290
      %v1390 = vunpack.c.h.b16 %v1290
      %v1391 = vunpack.c.l.b16 %v1291
      %v1392 = vunpack.c.h.b16 %v1291
      %v1393 = vunpack.c.l.b16 %v1292
      %v1394 = vunpack.c.h.b16 %v1292
      %v1395 = vunpack.c.l.b16 %v1293
      %v1396 = vunpack.c.h.b16 %v1293
      %v1397 = vunpack.c.l.b16 %v1294
      %v1398 = vunpack.c.h.b16 %v1294
      %v1399 = vunpack.c.l.b16 %v1295
      %v1400 = vunpack.c.h.b16 %v1295
      %v1401 = vpack.c.b16 %v1339, %v1337
      %v1402 = vpack.c.b16 %v1340, %v1338
      %v1403 = vpack.c.b16 %v1343, %v1341
      %v1404 = vpack.c.b16 %v1344, %v1342
      %v1405 = vpack.c.b16 %v1347, %v1345
      %v1406 = vpack.c.b16 %v1348, %v1346
      %v1407 = vpack.c.b16 %v1351, %v1349
      %v1408 = vpack.c.b16 %v1352, %v1350
      %v1409 = vpack.c.b16 %v1355, %v1353
      %v1410 = vpack.c.b16 %v1356, %v1354
      %v1411 = vpack.c.b16 %v1359, %v1357
      %v1412 = vpack.c.b16 %v1360, %v1358
      %v1413 = vpack.c.b16 %v1363, %v1361
      %v1414 = vpack.c.b16 %v1364, %v1362
      %v1415 = vpack.c.b16 %v1367, %v1365
      %v1416 = vpack.c.b16 %v1368, %v1366
      %v1417 = vpack.c.b16 %v1371, %v1369
      %v1418 = vpack.c.b16 %v1372, %v1370
      %v1419 = vpack.c.b16 %v1375, %v1373
      %v1420 = vpack.c.b16 %v1376, %v1374
      %v1421 = vpack.c.b16 %v1379, %v1377
      %v1422 = vpack.c.b16 %v1380, %v1378
      %v1423 = vpack.c.b16 %v1383, %v1381
      %v1424 = vpack.c.b16 %v1384, %v1382
      %v1425 = vpack.c.b16 %v1387, %v1385
      %v1426 = vpack.c.b16 %v1388, %v1386
      %v1427 = vpack.c.b16 %v1391, %v1389
      %v1428 = vpack.c.b16 %v1392, %v1390
      %v1429 = vpack.c.b16 %v1395, %v1393
      %v1430 = vpack.c.b16 %v1396, %v1394
      %v1431 = vpack.c.b16 %v1399, %v1397
      %v1432 = vpack.c.b16 %v1400, %v1398
      %1465 = vmatprep.subr.bf16.mxu0 %v1416
      %1466 = vmatpush1.bf16.msra.mxu0 %v1415
      %1467 = vmatprep.subr.bf16.mxu0 %v1414
      %1468 = vmatpush1.bf16.msra.mxu0 %v1413
      %1469 = vmatprep.subr.bf16.mxu0 %v1412
      %1470 = vmatpush1.bf16.msra.mxu0 %v1411
      %1471 = vmatprep.subr.bf16.mxu0 %v1410
      %1472 = vmatpush1.bf16.msra.mxu0 %v1409
      %1473 = vmatprep.subr.bf16.mxu0 %v1408
      %1474 = vmatpush1.bf16.msra.mxu0 %v1407
      %1475 = vmatprep.subr.bf16.mxu0 %v1406
      %1476 = vmatpush1.bf16.msra.mxu0 %v1405
      %1477 = vmatprep.subr.bf16.mxu0 %v1404
      %1478 = vmatpush1.bf16.msra.mxu0 %v1403
      %1479 = vmatprep.subr.bf16.mxu0 %v1402
      %1480 = vmatpush1.bf16.msra.mxu0 %v1401
      %1481 = vmatprep.subr.bf16.mxu0 %v1432
      %1482 = vmatpush2.bf16.msra.mxu0 %v1431
      %1483 = vmatprep.subr.bf16.mxu0 %v1430
      %1484 = vmatpush2.bf16.msra.mxu0 %v1429
      %1485 = vmatprep.subr.bf16.mxu0 %v1428
      %1486 = vmatpush2.bf16.msra.mxu0 %v1427
      %1487 = vmatprep.subr.bf16.mxu0 %v1426
      %1488 = vmatpush2.bf16.msra.mxu0 %v1425
      %1489 = vmatprep.subr.bf16.mxu0 %v1424
      %1490 = vmatpush2.bf16.msra.mxu0 %v1423
      %1491 = vmatprep.subr.bf16.mxu0 %v1422
      %1492 = vmatpush2.bf16.msra.mxu0 %v1421
      %1493 = vmatprep.subr.bf16.mxu0 %v1420
      %1494 = vmatpush2.bf16.msra.mxu0 %v1419
      %1495 = vmatprep.subr.bf16.mxu0 %v1418
      %1496 = vmatpush2.bf16.msra.mxu0 %v1417
      %1497 = vmatprep.mubr.bf16.mxu0 %v1302
      %1498 = vmatmul.mubr.bf16.gmra.mxu0 %v1301
      %v1499 = vpop.f32.mrf.mxu0
      %v1500 = vadd.f32 0.0, %v1499
      %v1501 = vpop.f32.mrf.mxu0
      %v1502 = vadd.f32 0.0, %v1501
      %v1503 = vpop.f32.mrf.mxu0
      %v1504 = vpop.f32.mrf.mxu0
      %1505 = vdwg.mxu0
      %v1506 = vadd.f32 %v1260, %v1500
      %v1507 = vadd.f32 %v1261, %v1502
      %v1508 = vld [vmem:[%s239] ss:$8 sm:$0x3]
      %v1510 = vlaneseq
      %v1511 = vshrl.u32 %v1510, 7
      %v1512 = vsub.s32 0, %v1511
      %v1513 = vrot.slane %v1508, %v1512
      %v1514 = vlaneseq
      %v1515 = vshrl.u32 %v1514, 7
      %v1516 = vsub.s32 1, %v1515
      %v1517 = vrot.slane %v1508, %v1516
      %v1520 = vadd.f32 %v1506, %v1513
      %v1521 = vadd.f32 %v1507, %v1517
      %vm1522 = vcmp.ge.f32.partialorder %v1520, 0.0
      %vm1523 = vcmp.ge.f32.partialorder %v1521, 0.0
      %v1524 = vmul.f32 %v1520, 0.1
      %v1525 = vmul.f32 %v1521, 0.1
      %v1526 = vsel %vm1522, %v1520, %v1524
      %v1527 = vsel %vm1523, %v1521, %v1525
      %v1528 = vpack.c.bf16 %v1526, %v1526
      %v1529 = vpack.c.bf16 %v1527, %v1527
      %v1532 = vunpack.c.l.b16 %v1528
      %v1533 = vunpack.c.l.b16 %v1529
      %v1534 = vpack.c.b16 %v1533, %v1532
      %1536 = vst [vmem:[%s253] sm:$0xff] %v1534
      %s1537 = smul.u32 2, %s19
      %p1538 = scmp.lt.s32.totalorder %s20, 9
      %s1539 = scalar_select %p1538, %s20, 9
      %p1540 = scmp.lt.s32.totalorder %s21, 0
      %s1541 = scalar_select %p1540, %s21, 0
      %p1542 = scmp.lt.s32.totalorder %s1537, 1
      %s1543 = scalar_select %p1542, %s1537, 1
      %s1544 = smul.addr %s1541, 2
      %s1545 = sadd.s32 %s1543, %s1544
      %s1546 = smul.addr %s1539, 2
      %s1547 = sadd.s32 %s1545, %s1546
      %s1548 = smul.addr %s1547, 4
      %s1549 = scalar_lea.vmem %s3, %s1548
      // Predicated region
      $region33: #{mpd_forward.9} parent=31 // pred_check
        %p1550 = pneg %p133
      $region34: #{mpd_forward.9} parent=31 // pred_check_branch
        %1552 = sbr.rel (%p1550) target = $region36
      $region35: #{mpd_forward.9} parent=31 // pred_region
        %s1553 = smul.u32 2, %s19
      $region36: #{mpd_forward.9} parent=31 // pred_fallthru
        _
    $region32: #{mpd_forward.9} parent=5 // pred_fallthru
      _
    %p1554 = scmp.le.s32.totalorder 2, %s9
    // Predicated region
    $region37: #{mpd_forward.9} parent=5 // pred_check
      %p1555 = pneg %p1554
    $region38: #{mpd_forward.9} parent=5 // pred_check_branch
      %1557 = sbr.rel (%p1555) target = $region40
    $region39: #{mpd_forward.9} parent=5 // pred_region
      %s1558 = ssub.s32 %s9, 2
      // Predicated region
      $region41: #{mpd_forward.9} parent=39 // pred_check
        %p1559 = pneg %p139
      $region42: #{mpd_forward.9} parent=39 // pred_check_branch
        %1561 = sbr.rel (%p1559) target = $region44
      $region43: #{mpd_forward.9} parent=39 // pred_region
        %s1562 = smul.u32 2, %s22
        %p1563 = scmp.lt.s32.totalorder %s23, 9
        %s1564 = scalar_select %p1563, %s23, 9
        %p1565 = scmp.lt.s32.totalorder %s24, 0
        %s1566 = scalar_select %p1565, %s24, 0
        %p1567 = scmp.lt.s32.totalorder %s1562, 1
        %s1568 = scalar_select %p1567, %s1562, 1
        %s1569 = smul.addr %s1566, 2
        %s1570 = sadd.s32 %s1568, %s1569
        %s1571 = smul.addr %s1564, 2
        %s1572 = sadd.s32 %s1570, %s1571
        %s1573 = smul.addr %s1572, 4
        %s1574 = scalar_lea.vmem %s3, %s1573
      $region44: #{mpd_forward.9} parent=39 // pred_fallthru
        _
    $region40: #{mpd_forward.9} parent=5 // pred_fallthru
      _
  $region6: #{mpd_forward.9} parent=0 // loop_footer
    %s13 = sadd.s32 1, %s9
  $region7: #{mpd_forward.9} parent=0 // loop_footer_branch
    %8 = sbr.rel target = $region3
  $region8: #{mpd_forward.9} parent=0 // loop_exit
    _

</llo_original>
